<compile_context>
chip_gen: v7x
topology: tpu7x:2x2x1
jax: 0.10.0
libtpu: 0.0.40
codegen_flags: <defaults>
</compile_context>

<pallas_src>
import functools

import jax
import jax.numpy as jnp
from jax import lax
from jax.experimental import pallas as pl
from jax.experimental.pallas import tpu as pltpu

_LANE = 128
_BN_EPS = 1e-5


def _round_up(v, m):
    return ((v + m - 1) // m) * m


# ---------------------------------------------------------------------------
# Kernel 1: fused [optional BN-affine+ReLU on input] -> 3x3 "same" conv
#           (im2col + single bf16 MXU matmul, f32 accum) -> conv output tile
#           + per-(batch, row-tile) BN sum / sum-of-squares partials.
# ---------------------------------------------------------------------------
def _fused_conv_kernel(x_ref, w_ref, scale_ref, shift_ref,      # inputs
                       y_ref, stats_ref,                        # outputs
                       xpad_ref, patch_ref,                     # VMEM scratch
                       *, apply_pre):
    # x_ref:     (1, H, W, Cin)    full image of this batch element (resident)
    # w_ref:     (9*Cin, Cout)     repacked 3x3 weights, bf16
    # scale_ref: (1, Cin) f32      previous-stage BN scale (used if apply_pre)
    # shift_ref: (1, Cin) f32      previous-stage BN shift (used if apply_pre)
    # y_ref:     (1, TH, W, Cout)  f32 conv output rows for this row tile
    # stats_ref: (1, 8, Cout) f32  row 0 = sum, row 1 = sum of squares
    # xpad_ref:  (TH+2, W+2, Cin)  f32 zero-padded local tile (1-px halo)
    # patch_ref: (TH*W, 9*Cin)     bf16 im2col slab
    th = y_ref.shape[1]
    W = x_ref.shape[2]
    cin = x_ref.shape[3]
    cout = y_ref.shape[3]

    r = pl.program_id(1)
    rt = pl.num_programs(1)
    row0 = pl.multiple_of(r * th, th)

    if apply_pre:
        scale = scale_ref[...].reshape(1, 1, cin)
        shift = shift_ref[...].reshape(1, 1, cin)

    def prep(v):  # v: (rows, W, cin) f32
        if apply_pre:  # fuse previous stage's BN affine + ReLU into the load
            v = jnp.maximum(v * scale + shift, 0.0)
        return v

    # Zero-filled padded tile provides the 1-pixel halo ring (no HBM jnp.pad).
    xpad_ref[...] = jnp.zeros_like(xpad_ref)
    xpad_ref[1:th + 1, 1:W + 1, :] = prep(x_ref[0, pl.ds(row0, th), :, :])

    @pl.when(r > 0)
    def _():  # top halo row comes from the neighbouring row tile
        xpad_ref[0:1, 1:W + 1, :] = prep(x_ref[0, pl.ds(row0 - 1, 1), :, :])

    @pl.when(r < rt - 1)
    def _():  # bottom halo row
        xpad_ref[th + 1:th + 2, 1:W + 1, :] = prep(
            x_ref[0, pl.ds(row0 + th, 1), :, :])

    # im2col: build one (TH*W, 9*Cin) slab -> a single MXU matmul (K = 9*Cin)
    # instead of 9 small K=Cin matmuls.
    for dy in range(3):
        for dx in range(3):
            tap = xpad_ref[dy:dy + th, dx:dx + W, :]           # (th, W, cin)
            patch_ref[:, (dy * 3 + dx) * cin:(dy * 3 + dx + 1) * cin] = (
                tap.reshape(th * W, cin).astype(jnp.bfloat16))

    acc = jnp.dot(patch_ref[...], w_ref[...],
                  preferred_element_type=jnp.float32)          # (th*W, cout)

    # BN batch-stat partials from the f32 accumulator (before any cast/store),
    # written to a lane-dense (8, Cout) block.
    s1 = jnp.sum(acc, axis=0, keepdims=True)                   # (1, cout)
    s2 = jnp.sum(acc * acc, axis=0, keepdims=True)             # (1, cout)
    stats_ref[...] = jnp.concatenate(
        [s1, s2, jnp.zeros((6, cout), jnp.float32)], axis=0).reshape(1, 8, cout)

    y_ref[...] = acc.reshape(1, th, W, cout)


def _fused_conv_stage(x_p, w2d, pre_scale, pre_shift, *, apply_pre, th):
    N, H, W, cin_p = x_p.shape
    cout_p = w2d.shape[1]
    rt = H // th

    # TODO(synk): for very large H*W, replace the resident full-image input
    # block with manual halo-row DMA (memory_space=pl.ANY + make_async_copy)
    # so the per-step VMEM stays bounded on v7x (64 MiB).
    kernel = functools.partial(_fused_conv_kernel, apply_pre=apply_pre)
    y, stats = pl.pallas_call(
        kernel,
        out_shape=(jax.ShapeDtypeStruct((N, H, W, cout_p), jnp.float32),
                   jax.ShapeDtypeStruct((N * rt, 8, cout_p), jnp.float32)),
        grid_spec=pltpu.PrefetchScalarGridSpec(
            num_scalar_prefetch=0,
            grid=(N, rt),
            in_specs=[
                pl.BlockSpec((1, H, W, cin_p), lambda n, r: (n, 0, 0, 0)),
                pl.BlockSpec((9 * cin_p, cout_p), lambda n, r: (0, 0)),
                pl.BlockSpec((1, cin_p), lambda n, r: (0, 0)),
                pl.BlockSpec((1, cin_p), lambda n, r: (0, 0)),
            ],
            out_specs=(
                pl.BlockSpec((1, th, W, cout_p), lambda n, r: (n, r, 0, 0)),
                pl.BlockSpec((1, 8, cout_p), lambda n, r: (n * rt + r, 0, 0)),
            ),
            scratch_shapes=[
                pltpu.VMEM((th + 2, W + 2, cin_p), jnp.float32),
                pltpu.VMEM((th * W, 9 * cin_p), jnp.bfloat16),
            ],
        ),
        compiler_params=pltpu.CompilerParams(
            dimension_semantics=("parallel", "parallel")),
    )(x_p, w2d, pre_scale, pre_shift)
    return y, stats


# ---------------------------------------------------------------------------
# Kernel 2: final BN affine + ReLU (lane-dense elementwise pass).
# ---------------------------------------------------------------------------
def _bn_relu_kernel(y_ref, scale_ref, shift_ref, o_ref):
    c = y_ref.shape[3]
    scale = scale_ref[...].reshape(1, 1, 1, c)
    shift = shift_ref[...].reshape(1, 1, 1, c)
    o_ref[...] = jnp.maximum(y_ref[...] * scale + shift, 0.0).astype(o_ref.dtype)


def _bn_relu(y_p, scale, shift, *, th):
    N, H, W, c_p = y_p.shape
    rt = H // th
    return pl.pallas_call(
        _bn_relu_kernel,
        out_shape=jax.ShapeDtypeStruct((N, H, W, c_p), jnp.float32),
        grid_spec=pltpu.PrefetchScalarGridSpec(
            num_scalar_prefetch=0,
            grid=(N, rt),
            in_specs=[
                pl.BlockSpec((1, th, W, c_p), lambda n, r: (n, r, 0, 0)),
                pl.BlockSpec((1, c_p), lambda n, r: (0, 0)),
                pl.BlockSpec((1, c_p), lambda n, r: (0, 0)),
            ],
            out_specs=pl.BlockSpec((1, th, W, c_p), lambda n, r: (n, r, 0, 0)),
        ),
        compiler_params=pltpu.CompilerParams(
            dimension_semantics=("parallel", "parallel")),
    )(y_p, scale, shift)


# ---------------------------------------------------------------------------
# Tiny per-channel glue: batch-stat partials -> BN scale/shift.
# ---------------------------------------------------------------------------
def _bn_scale_shift(stats, gamma_p, beta_p, count):
    sums = jnp.sum(stats[:, 0, :], axis=0)
    sumsq = jnp.sum(stats[:, 1, :], axis=0)
    mean = sums / count
    var = jnp.maximum(sumsq / count - mean * mean, 0.0)   # biased (train-mode)
    inv_std = lax.rsqrt(var + _BN_EPS)
    scale = gamma_p * inv_std
    shift = beta_p - mean * scale
    return scale.reshape(1, -1), shift.reshape(1, -1)


def _repack_conv_weight(w_oihw, cin_p, cout_p):
    # (Cout, Cin, 3, 3) -> (9*Cin_p, Cout_p) bf16, row = (ky*3+kx)*Cin_p + cin
    cout, cin = w_oihw.shape[0], w_oihw.shape[1]
    w = jnp.transpose(w_oihw, (2, 3, 1, 0))                      # (3,3,Cin,Cout)
    w = jnp.pad(w, ((0, 0), (0, 0), (0, cin_p - cin), (0, cout_p - cout)))
    return w.reshape(9 * cin_p, cout_p).astype(jnp.bfloat16)


# ---------------------------------------------------------------------------
# DoubleConv forward: (conv3x3 -> BN(batch stats) -> ReLU) * 2
# ---------------------------------------------------------------------------
@jax.jit
def double_conv_forward(x_nchw, w1, g1, b1, w2, g2, b2):
    N, cin, H, W = x_nchw.shape
    cmid, cout = w1.shape[0], w2.shape[0]
    cin_p = _round_up(cin, _LANE)
    cmid_p = _round_up(cmid, _LANE)
    cout_p = _round_up(cout, _LANE)
    th = 8 if H % 8 == 0 else H
    assert H % th == 0

    # NCHW -> NHWC, channels zero-padded to a lane-dense multiple of 128.
    x = jnp.transpose(x_nchw, (0, 2, 3, 1)).astype(jnp.float32)
    x = jnp.pad(x, ((0, 0), (0, 0), (0, 0), (0, cin_p - cin)))

    w1_2d = _repack_conv_weight(w1, cin_p, cmid_p)
    w2_2d = _repack_conv_weight(w2, cmid_p, cout_p)
    g1p = jnp.pad(g1, (0, cmid_p - cmid))
    b1p = jnp.pad(b1, (0, cmid_p - cmid))
    g2p = jnp.pad(g2, (0, cout_p - cout))
    b2p = jnp.pad(b2, (0, cout_p - cout))

    one = jnp.ones((1, cin_p), jnp.float32)
    zero = jnp.zeros((1, cin_p), jnp.float32)
    count = float(N * H * W)

    # Stage 1: conv1 + BN1 batch-stat partials (fused).
    y1, st1 = _fused_conv_stage(x, w1_2d, one, zero, apply_pre=False, th=th)
    scale1, shift1 = _bn_scale_shift(st1, g1p, b1p, count)

    # Stage 2: BN1 affine + ReLU fused into the conv2 load, + BN2 partials.
    y2, st2 = _fused_conv_stage(y1, w2_2d, scale1, shift1, apply_pre=True, th=th)
    scale2, shift2 = _bn_scale_shift(st2, g2p, b2p, count)

    # Final BN2 affine + ReLU.
    out_p = _bn_relu(y2, scale2, shift2, th=th)
    return jnp.transpose(out_p[..., :cout], (0, 3, 1, 2))


# ---------------------------------------------------------------------------
# Pure-JAX reference (mirrors PyTorch train-mode forward) for a sanity check.
# ---------------------------------------------------------------------------
def _ref_conv_bn_relu(x_nchw, w_oihw, gamma, beta):
    y = lax.conv_general_dilated(
        x_nchw, w_oihw, window_strides=(1, 1), padding=((1, 1), (1, 1)),
        dimension_numbers=("NCHW", "OIHW", "NCHW"))
    mean = jnp.mean(y, axis=(0, 2, 3))
    var = jnp.mean((y - mean[None, :, None, None]) ** 2, axis=(0, 2, 3))
    yhat = (y - mean[None, :, None, None]) * lax.rsqrt(
        var + _BN_EPS)[None, :, None, None]
    return jnp.maximum(yhat * gamma[None, :, None, None]
                       + beta[None, :, None, None], 0.0)


def ref_double_conv(x, w1, g1, b1, w2, g2, b2):
    h = _ref_conv_bn_relu(x, w1, g1, b1)
    return _ref_conv_bn_relu(h, w2, g2, b2)


# ---------------------------------------------------------------------------
if __name__ == "__main__":
    key = jax.random.PRNGKey(0)
    N, Cin, H, W = 2, 4, 16, 16
    Cmid, Cout = 8, 8          # mid_channels defaults to out_channels

    k = jax.random.split(key, 7)
    x = jax.random.normal(k[0], (N, Cin, H, W), jnp.float32)

    # Deterministic synthetic parameters (PyTorch shapes: OIHW, per-channel BN).
    w1 = 0.1 * jax.random.normal(k[1], (Cmid, Cin, 3, 3), jnp.float32)
    w2 = 0.1 * jax.random.normal(k[2], (Cout, Cmid, 3, 3), jnp.float32)
    g1 = 1.0 + 0.1 * jax.random.normal(k[3], (Cmid,), jnp.float32)
    b1 = 0.1 * jax.random.normal(k[4], (Cmid,), jnp.float32)
    g2 = 1.0 + 0.1 * jax.random.normal(k[5], (Cout,), jnp.float32)
    b2 = 0.1 * jax.random.normal(k[6], (Cout,), jnp.float32)

    out = jax.block_until_ready(double_conv_forward(x, w1, g1, b1, w2, g2, b2))
    ref = jax.block_until_ready(ref_double_conv(x, w1, g1, b1, w2, g2, b2))

    assert out.shape == (N, Cout, H, W), out.shape
    err = float(jnp.max(jnp.abs(out - ref)))
    # bf16 MXU matmuls (f32 accumulation) -> bf16-level tolerance vs f32 ref.
    assert jnp.allclose(out, ref, atol=3e-2, rtol=3e-2), err

    print("KERNEL_OK")
</pallas_src>

<mosaic_0001>
module attributes {stable_mosaic.version = 11 : i64} {
  func.func @_fused_conv_kernel(%arg0: i32, %arg1: i32, %arg2: memref<1x16x16x128xf32, #tpu.memory_space<vmem>>, %arg3: memref<1152x128xbf16, #tpu.memory_space<vmem>>, %arg4: memref<1x128xf32, #tpu.memory_space<vmem>>, %arg5: memref<1x128xf32, #tpu.memory_space<vmem>>, %arg6: memref<1x8x16x128xf32, #tpu.memory_space<vmem>>, %arg7: memref<1x8x128xf32, #tpu.memory_space<vmem>>, %arg8: memref<10x18x128xf32, #tpu.memory_space<vmem>>, %arg9: memref<128x1152xbf16, #tpu.memory_space<vmem>>) attributes {dimension_semantics = [#tpu.dimension_semantics<parallel>, #tpu.dimension_semantics<parallel>], iteration_bounds = array<i64: 2, 2>, scalar_prefetch = 0 : i64, scratch_operands = 2 : i64, tpu.core_type = #tpu.core_type<tc>, window_params = [{transform_indices = @transform_0, window_bounds = array<i64: 1, 16, 16, 128>}, {pipeline_mode = #tpu.pipeline_mode<synchronous>, transform_indices = @transform_1, window_bounds = array<i64: 1152, 128>}, {pipeline_mode = #tpu.pipeline_mode<synchronous>, transform_indices = @transform_2, window_bounds = array<i64: 1, 128>}, {pipeline_mode = #tpu.pipeline_mode<synchronous>, transform_indices = @transform_3, window_bounds = array<i64: 1, 128>}, {transform_indices = @transform_4, window_bounds = array<i64: 1, 8, 16, 128>}, {transform_indices = @transform_5, window_bounds = array<i64: 1, 8, 128>}]} {
    %c8_i32 = arith.constant 8 : i32
    %0 = arith.muli %arg1, %c8_i32 : i32
    %1 = tpu.assume_multiple %0, 8 : i32
    %cst = arith.constant 0.000000e+00 : f32
    %2 = vector.broadcast %cst : f32 to vector<10x18x128xf32>
    %c0 = arith.constant 0 : index
    %c0_0 = arith.constant 0 : index
    %c0_1 = arith.constant 0 : index
    %3 = vector.load %arg8[%c0, %c0_0, %c0_1] : memref<10x18x128xf32, #tpu.memory_space<vmem>>, vector<10x18x128xf32>
    tpu.vector_store %arg8[%c0, %c0_0, %c0_1], %2 {strides = array<i32>} : memref<10x18x128xf32, #tpu.memory_space<vmem>>, vector<10x18x128xf32>,
    %c0_2 = arith.constant 0 : index
    %4 = arith.index_cast %1 : i32 to index
    %c0_3 = arith.constant 0 : index
    %c0_4 = arith.constant 0 : index
    %5 = vector.load %arg2[%c0_2, %4, %c0_3, %c0_4] : memref<1x16x16x128xf32, #tpu.memory_space<vmem>>, vector<1x8x16x128xf32>
    %6 = vector.shape_cast %5 : vector<1x8x16x128xf32> to vector<8x16x128xf32>
    %c1 = arith.constant 1 : index
    %c1_5 = arith.constant 1 : index
    %c0_6 = arith.constant 0 : index
    %7 = vector.load %arg8[%c1, %c1_5, %c0_6] : memref<10x18x128xf32, #tpu.memory_space<vmem>>, vector<8x16x128xf32>
    tpu.vector_store %arg8[%c1, %c1_5, %c0_6], %6 {strides = array<i32>} : memref<10x18x128xf32, #tpu.memory_space<vmem>>, vector<8x16x128xf32>,
    %c0_i32 = arith.constant 0 : i32
    %8 = arith.cmpi sgt, %arg1, %c0_i32 : i32
    %9 = arith.extui %8 : i1 to i32
    %c0_i32_7 = arith.constant 0 : i32
    %10 = arith.cmpi ne, %9, %c0_i32_7 : i32
    scf.if %10 {
      %c1_i32_60 = arith.constant 1 : i32
      %64 = arith.subi %1, %c1_i32_60 : i32
      %c0_61 = arith.constant 0 : index
      %65 = arith.index_cast %64 : i32 to index
      %c0_62 = arith.constant 0 : index
      %c0_63 = arith.constant 0 : index
      %66 = vector.load %arg2[%c0_61, %65, %c0_62, %c0_63] : memref<1x16x16x128xf32, #tpu.memory_space<vmem>>, vector<1x1x16x128xf32>
      %67 = vector.shape_cast %66 : vector<1x1x16x128xf32> to vector<1x16x128xf32>
      %c0_64 = arith.constant 0 : index
      %c1_65 = arith.constant 1 : index
      %c0_66 = arith.constant 0 : index
      %68 = vector.load %arg8[%c0_64, %c1_65, %c0_66] : memref<10x18x128xf32, #tpu.memory_space<vmem>>, vector<1x16x128xf32>
      tpu.vector_store %arg8[%c0_64, %c1_65, %c0_66], %67 {strides = array<i32>} : memref<10x18x128xf32, #tpu.memory_space<vmem>>, vector<1x16x128xf32>,
    } else {
    }
    %c1_i32 = arith.constant 1 : i32
    %11 = arith.cmpi slt, %arg1, %c1_i32 : i32
    %12 = arith.extui %11 : i1 to i32
    %c0_i32_8 = arith.constant 0 : i32
    %13 = arith.cmpi ne, %12, %c0_i32_8 : i32
    scf.if %13 {
      %c8_i32_60 = arith.constant 8 : i32
      %64 = arith.addi %1, %c8_i32_60 : i32
      %c0_61 = arith.constant 0 : index
      %65 = arith.index_cast %64 : i32 to index
      %c0_62 = arith.constant 0 : index
      %c0_63 = arith.constant 0 : index
      %66 = vector.load %arg2[%c0_61, %65, %c0_62, %c0_63] : memref<1x16x16x128xf32, #tpu.memory_space<vmem>>, vector<1x1x16x128xf32>
      %67 = vector.shape_cast %66 : vector<1x1x16x128xf32> to vector<1x16x128xf32>
      %c9 = arith.constant 9 : index
      %c1_64 = arith.constant 1 : index
      %c0_65 = arith.constant 0 : index
      %68 = vector.load %arg8[%c9, %c1_64, %c0_65] : memref<10x18x128xf32, #tpu.memory_space<vmem>>, vector<1x16x128xf32>
      tpu.vector_store %arg8[%c9, %c1_64, %c0_65], %67 {strides = array<i32>} : memref<10x18x128xf32, #tpu.memory_space<vmem>>, vector<1x16x128xf32>,
    } else {
    }
    %c0_9 = arith.constant 0 : index
    %c0_10 = arith.constant 0 : index
    %c0_11 = arith.constant 0 : index
    %14 = vector.load %arg8[%c0_9, %c0_10, %c0_11] : memref<10x18x128xf32, #tpu.memory_space<vmem>>, vector<8x16x128xf32>
    %15 = vector.shape_cast %14 : vector<8x16x128xf32> to vector<128x128xf32>
    %16 = arith.truncf %15 : vector<128x128xf32> to vector<128x128xbf16>
    %c0_12 = arith.constant 0 : index
    %c0_13 = arith.constant 0 : index
    %17 = vector.load %arg9[%c0_12, %c0_13] : memref<128x1152xbf16, #tpu.memory_space<vmem>>, vector<128x128xbf16>
    tpu.vector_store %arg9[%c0_12, %c0_13], %16 {strides = array<i32>} : memref<128x1152xbf16, #tpu.memory_space<vmem>>, vector<128x128xbf16>,
    %c0_14 = arith.constant 0 : index
    %c1_15 = arith.constant 1 : index
    %c0_16 = arith.constant 0 : index
    %18 = vector.load %arg8[%c0_14, %c1_15, %c0_16] : memref<10x18x128xf32, #tpu.memory_space<vmem>>, vector<8x16x128xf32>
    %19 = vector.shape_cast %18 : vector<8x16x128xf32> to vector<128x128xf32>
    %20 = arith.truncf %19 : vector<128x128xf32> to vector<128x128xbf16>
    %c0_17 = arith.constant 0 : index
    %c128 = arith.constant 128 : index
    %21 = vector.load %arg9[%c0_17, %c128] : memref<128x1152xbf16, #tpu.memory_space<vmem>>, vector<128x128xbf16>
    tpu.vector_store %arg9[%c0_17, %c128], %20 {strides = array<i32>} : memref<128x1152xbf16, #tpu.memory_space<vmem>>, vector<128x128xbf16>,
    %c0_18 = arith.constant 0 : index
    %c2 = arith.constant 2 : index
    %c0_19 = arith.constant 0 : index
    %22 = vector.load %arg8[%c0_18, %c2, %c0_19] : memref<10x18x128xf32, #tpu.memory_space<vmem>>, vector<8x16x128xf32>
    %23 = vector.shape_cast %22 : vector<8x16x128xf32> to vector<128x128xf32>
    %24 = arith.truncf %23 : vector<128x128xf32> to vector<128x128xbf16>
    %c0_20 = arith.constant 0 : index
    %c256 = arith.constant 256 : index
    %25 = vector.load %arg9[%c0_20, %c256] : memref<128x1152xbf16, #tpu.memory_space<vmem>>, vector<128x128xbf16>
    tpu.vector_store %arg9[%c0_20, %c256], %24 {strides = array<i32>} : memref<128x1152xbf16, #tpu.memory_space<vmem>>, vector<128x128xbf16>,
    %c1_21 = arith.constant 1 : index
    %c0_22 = arith.constant 0 : index
    %c0_23 = arith.constant 0 : index
    %26 = vector.load %arg8[%c1_21, %c0_22, %c0_23] : memref<10x18x128xf32, #tpu.memory_space<vmem>>, vector<8x16x128xf32>
    %27 = vector.shape_cast %26 : vector<8x16x128xf32> to vector<128x128xf32>
    %28 = arith.truncf %27 : vector<128x128xf32> to vector<128x128xbf16>
    %c0_24 = arith.constant 0 : index
    %c384 = arith.constant 384 : index
    %29 = vector.load %arg9[%c0_24, %c384] : memref<128x1152xbf16, #tpu.memory_space<vmem>>, vector<128x128xbf16>
    tpu.vector_store %arg9[%c0_24, %c384], %28 {strides = array<i32>} : memref<128x1152xbf16, #tpu.memory_space<vmem>>, vector<128x128xbf16>,
    %c1_25 = arith.constant 1 : index
    %c1_26 = arith.constant 1 : index
    %c0_27 = arith.constant 0 : index
    %30 = vector.load %arg8[%c1_25, %c1_26, %c0_27] : memref<10x18x128xf32, #tpu.memory_space<vmem>>, vector<8x16x128xf32>
    %31 = vector.shape_cast %30 : vector<8x16x128xf32> to vector<128x128xf32>
    %32 = arith.truncf %31 : vector<128x128xf32> to vector<128x128xbf16>
    %c0_28 = arith.constant 0 : index
    %c512 = arith.constant 512 : index
    %33 = vector.load %arg9[%c0_28, %c512] : memref<128x1152xbf16, #tpu.memory_space<vmem>>, vector<128x128xbf16>
    tpu.vector_store %arg9[%c0_28, %c512], %32 {strides = array<i32>} : memref<128x1152xbf16, #tpu.memory_space<vmem>>, vector<128x128xbf16>,
    %c1_29 = arith.constant 1 : index
    %c2_30 = arith.constant 2 : index
    %c0_31 = arith.constant 0 : index
    %34 = vector.load %arg8[%c1_29, %c2_30, %c0_31] : memref<10x18x128xf32, #tpu.memory_space<vmem>>, vector<8x16x128xf32>
    %35 = vector.shape_cast %34 : vector<8x16x128xf32> to vector<128x128xf32>
    %36 = arith.truncf %35 : vector<128x128xf32> to vector<128x128xbf16>
    %c0_32 = arith.constant 0 : index
    %c640 = arith.constant 640 : index
    %37 = vector.load %arg9[%c0_32, %c640] : memref<128x1152xbf16, #tpu.memory_space<vmem>>, vector<128x128xbf16>
    tpu.vector_store %arg9[%c0_32, %c640], %36 {strides = array<i32>} : memref<128x1152xbf16, #tpu.memory_space<vmem>>, vector<128x128xbf16>,
    %c2_33 = arith.constant 2 : index
    %c0_34 = arith.constant 0 : index
    %c0_35 = arith.constant 0 : index
    %38 = vector.load %arg8[%c2_33, %c0_34, %c0_35] : memref<10x18x128xf32, #tpu.memory_space<vmem>>, vector<8x16x128xf32>
    %39 = vector.shape_cast %38 : vector<8x16x128xf32> to vector<128x128xf32>
    %40 = arith.truncf %39 : vector<128x128xf32> to vector<128x128xbf16>
    %c0_36 = arith.constant 0 : index
    %c768 = arith.constant 768 : index
    %41 = vector.load %arg9[%c0_36, %c768] : memref<128x1152xbf16, #tpu.memory_space<vmem>>, vector<128x128xbf16>
    tpu.vector_store %arg9[%c0_36, %c768], %40 {strides = array<i32>} : memref<128x1152xbf16, #tpu.memory_space<vmem>>, vector<128x128xbf16>,
    %c2_37 = arith.constant 2 : index
    %c1_38 = arith.constant 1 : index
    %c0_39 = arith.constant 0 : index
    %42 = vector.load %arg8[%c2_37, %c1_38, %c0_39] : memref<10x18x128xf32, #tpu.memory_space<vmem>>, vector<8x16x128xf32>
    %43 = vector.shape_cast %42 : vector<8x16x128xf32> to vector<128x128xf32>
    %44 = arith.truncf %43 : vector<128x128xf32> to vector<128x128xbf16>
    %c0_40 = arith.constant 0 : index
    %c896 = arith.constant 896 : index
    %45 = vector.load %arg9[%c0_40, %c896] : memref<128x1152xbf16, #tpu.memory_space<vmem>>, vector<128x128xbf16>
    tpu.vector_store %arg9[%c0_40, %c896], %44 {strides = array<i32>} : memref<128x1152xbf16, #tpu.memory_space<vmem>>, vector<128x128xbf16>,
    %c2_41 = arith.constant 2 : index
    %c2_42 = arith.constant 2 : index
    %c0_43 = arith.constant 0 : index
    %46 = vector.load %arg8[%c2_41, %c2_42, %c0_43] : memref<10x18x128xf32, #tpu.memory_space<vmem>>, vector<8x16x128xf32>
    %47 = vector.shape_cast %46 : vector<8x16x128xf32> to vector<128x128xf32>
    %48 = arith.truncf %47 : vector<128x128xf32> to vector<128x128xbf16>
    %c0_44 = arith.constant 0 : index
    %c1024 = arith.constant 1024 : index
    %49 = vector.load %arg9[%c0_44, %c1024] : memref<128x1152xbf16, #tpu.memory_space<vmem>>, vector<128x128xbf16>
    tpu.vector_store %arg9[%c0_44, %c1024], %48 {strides = array<i32>} : memref<128x1152xbf16, #tpu.memory_space<vmem>>, vector<128x128xbf16>,
    %c0_45 = arith.constant 0 : index
    %c0_46 = arith.constant 0 : index
    %50 = vector.load %arg9[%c0_45, %c0_46] : memref<128x1152xbf16, #tpu.memory_space<vmem>>, vector<128x1152xbf16>
    %c0_47 = arith.constant 0 : index
    %c0_48 = arith.constant 0 : index
    %51 = vector.load %arg3[%c0_47, %c0_48] : memref<1152x128xbf16, #tpu.memory_space<vmem>>, vector<1152x128xbf16>
    %cst_49 = arith.constant dense<0.000000e+00> : vector<128x128xf32>
    %52 = tpu.matmul %50, %51, %cst_49 {dimension_numbers = #tpu.dot_dimension_numbers<[1], [0], [0], [1], [0, 0, 1, 1], [], []>} : vector<128x1152xbf16>, vector<1152x128xbf16>, vector<128x128xf32> -> vector<128x128xf32>
    %cst_50 = arith.constant dense<0.000000e+00> : vector<128xf32>
    %53 = vector.multi_reduction <add>, %52, %cst_50 [0] : vector<128x128xf32> to vector<128xf32>
    %54 = vector.shape_cast %53 : vector<128xf32> to vector<1x128xf32>
    %55 = arith.mulf %52, %52 : vector<128x128xf32>
    %cst_51 = arith.constant dense<0.000000e+00> : vector<128xf32>
    %56 = vector.multi_reduction <add>, %55, %cst_51 [0] : vector<128x128xf32> to vector<128xf32>
    %57 = vector.shape_cast %56 : vector<128xf32> to vector<1x128xf32>
    %cst_52 = arith.constant 0.000000e+00 : f32
    %58 = vector.broadcast %cst_52 : f32 to vector<6x128xf32>
    %59 = tpu.concatenate %54, %57, %58 in 0 : vector<1x128xf32>, vector<1x128xf32>, vector<6x128xf32> -> vector<8x128xf32>
    %60 = vector.shape_cast %59 : vector<8x128xf32> to vector<1x8x128xf32>
    %c0_53 = arith.constant 0 : index
    %c0_54 = arith.constant 0 : index
    %c0_55 = arith.constant 0 : index
    %61 = vector.load %arg7[%c0_53, %c0_54, %c0_55] : memref<1x8x128xf32, #tpu.memory_space<vmem>>, vector<1x8x128xf32>
    tpu.vector_store %arg7[%c0_53, %c0_54, %c0_55], %60 {strides = array<i32>} : memref<1x8x128xf32, #tpu.memory_space<vmem>>, vector<1x8x128xf32>,
    %62 = vector.shape_cast %52 : vector<128x128xf32> to vector<1x8x16x128xf32>
    %c0_56 = arith.constant 0 : index
    %c0_57 = arith.constant 0 : index
    %c0_58 = arith.constant 0 : index
    %c0_59 = arith.constant 0 : index
    %63 = vector.load %arg6[%c0_56, %c0_57, %c0_58, %c0_59] : memref<1x8x16x128xf32, #tpu.memory_space<vmem>>, vector<1x8x16x128xf32>
    tpu.vector_store %arg6[%c0_56, %c0_57, %c0_58, %c0_59], %62 {strides = array<i32>} : memref<1x8x16x128xf32, #tpu.memory_space<vmem>>, vector<1x8x16x128xf32>,
    return
  }
  func.func @transform_0(%arg0: i32, %arg1: i32) -> (i32, i32, i32, i32) {
    %c0_i32 = arith.constant 0 : i32
    %c0_i32_0 = arith.constant 0 : i32
    %c0_i32_1 = arith.constant 0 : i32
    %c0_i32_2 = arith.constant 0 : i32
    return %arg0, %c0_i32, %c0_i32_0, %c0_i32_1 : i32, i32, i32, i32
  }
  func.func @transform_1(%arg0: i32, %arg1: i32) -> (i32, i32) {
    %c0_i32 = arith.constant 0 : i32
    %c0_i32_0 = arith.constant 0 : i32
    %c0_i32_1 = arith.constant 0 : i32
    return %c0_i32, %c0_i32_0 : i32, i32
  }
  func.func @transform_2(%arg0: i32, %arg1: i32) -> (i32, i32) {
    %c0_i32 = arith.constant 0 : i32
    %c0_i32_0 = arith.constant 0 : i32
    %c0_i32_1 = arith.constant 0 : i32
    return %c0_i32, %c0_i32_0 : i32, i32
  }
  func.func @transform_3(%arg0: i32, %arg1: i32) -> (i32, i32) {
    %c0_i32 = arith.constant 0 : i32
    %c0_i32_0 = arith.constant 0 : i32
    %c0_i32_1 = arith.constant 0 : i32
    return %c0_i32, %c0_i32_0 : i32, i32
  }
  func.func @transform_4(%arg0: i32, %arg1: i32) -> (i32, i32, i32, i32) {
    %c0_i32 = arith.constant 0 : i32
    %c0_i32_0 = arith.constant 0 : i32
    %c0_i32_1 = arith.constant 0 : i32
    return %arg0, %arg1, %c0_i32, %c0_i32_0 : i32, i32, i32, i32
  }
  func.func @transform_5(%arg0: i32, %arg1: i32) -> (i32, i32, i32) {
    %c2_i32 = arith.constant 2 : i32
    %0 = arith.muli %arg0, %c2_i32 : i32
    %1 = arith.addi %0, %arg1 : i32
    %c0_i32 = arith.constant 0 : i32
    %c0_i32_0 = arith.constant 0 : i32
    %c0_i32_1 = arith.constant 0 : i32
    return %1, %c0_i32, %c0_i32_0 : i32, i32, i32
  }
}

module attributes {stable_mosaic.version = 11 : i64} {
  func.func @_bn_relu_kernel(%arg0: i32, %arg1: i32, %arg2: memref<1x8x16x128xf32, #tpu.memory_space<vmem>>, %arg3: memref<1x128xf32, #tpu.memory_space<vmem>>, %arg4: memref<1x128xf32, #tpu.memory_space<vmem>>, %arg5: memref<1x8x16x128xf32, #tpu.memory_space<vmem>>) attributes {dimension_semantics = [#tpu.dimension_semantics<parallel>, #tpu.dimension_semantics<parallel>], iteration_bounds = array<i64: 2, 2>, scalar_prefetch = 0 : i64, scratch_operands = 0 : i64, tpu.core_type = #tpu.core_type<tc>, window_params = [{transform_indices = @transform_0, window_bounds = array<i64: 1, 8, 16, 128>}, {pipeline_mode = #tpu.pipeline_mode<synchronous>, transform_indices = @transform_1, window_bounds = array<i64: 1, 128>}, {pipeline_mode = #tpu.pipeline_mode<synchronous>, transform_indices = @transform_2, window_bounds = array<i64: 1, 128>}, {transform_indices = @transform_3, window_bounds = array<i64: 1, 8, 16, 128>}]} {
    %c0 = arith.constant 0 : index
    %c0_0 = arith.constant 0 : index
    %0 = vector.load %arg3[%c0, %c0_0] : memref<1x128xf32, #tpu.memory_space<vmem>>, vector<1x128xf32>
    %1 = vector.shape_cast %0 : vector<1x128xf32> to vector<1x1x1x128xf32>
    %c0_1 = arith.constant 0 : index
    %c0_2 = arith.constant 0 : index
    %2 = vector.load %arg4[%c0_1, %c0_2] : memref<1x128xf32, #tpu.memory_space<vmem>>, vector<1x128xf32>
    %3 = vector.shape_cast %2 : vector<1x128xf32> to vector<1x1x1x128xf32>
    %c0_3 = arith.constant 0 : index
    %c0_4 = arith.constant 0 : index
    %c0_5 = arith.constant 0 : index
    %c0_6 = arith.constant 0 : index
    %4 = vector.load %arg2[%c0_3, %c0_4, %c0_5, %c0_6] : memref<1x8x16x128xf32, #tpu.memory_space<vmem>>, vector<1x8x16x128xf32>
    %5 = vector.broadcast %1 : vector<1x1x1x128xf32> to vector<1x8x16x128xf32>
    %6 = arith.mulf %4, %5 : vector<1x8x16x128xf32>
    %7 = vector.broadcast %3 : vector<1x1x1x128xf32> to vector<1x8x16x128xf32>
    %8 = arith.addf %6, %7 : vector<1x8x16x128xf32>
    %cst = arith.constant 0.000000e+00 : f32
    %9 = vector.broadcast %cst : f32 to vector<1x8x16x128xf32>
    %10 = arith.maximumf %8, %9 : vector<1x8x16x128xf32>
    %c0_7 = arith.constant 0 : index
    %c0_8 = arith.constant 0 : index
    %c0_9 = arith.constant 0 : index
    %c0_10 = arith.constant 0 : index
    %11 = vector.load %arg5[%c0_7, %c0_8, %c0_9, %c0_10] : memref<1x8x16x128xf32, #tpu.memory_space<vmem>>, vector<1x8x16x128xf32>
    tpu.vector_store %arg5[%c0_7, %c0_8, %c0_9, %c0_10], %10 {strides = array<i32>} : memref<1x8x16x128xf32, #tpu.memory_space<vmem>>, vector<1x8x16x128xf32>,
    return
  }
  func.func @transform_0(%arg0: i32, %arg1: i32) -> (i32, i32, i32, i32) {
    %c0_i32 = arith.constant 0 : i32
    %c0_i32_0 = arith.constant 0 : i32
    %c0_i32_1 = arith.constant 0 : i32
    return %arg0, %arg1, %c0_i32, %c0_i32_0 : i32, i32, i32, i32
  }
  func.func @transform_1(%arg0: i32, %arg1: i32) -> (i32, i32) {
    %c0_i32 = arith.constant 0 : i32
    %c0_i32_0 = arith.constant 0 : i32
    %c0_i32_1 = arith.constant 0 : i32
    return %c0_i32, %c0_i32_0 : i32, i32
  }
  func.func @transform_2(%arg0: i32, %arg1: i32) -> (i32, i32) {
    %c0_i32 = arith.constant 0 : i32
    %c0_i32_0 = arith.constant 0 : i32
    %c0_i32_1 = arith.constant 0 : i32
    return %c0_i32, %c0_i32_0 : i32, i32
  }
  func.func @transform_3(%arg0: i32, %arg1: i32) -> (i32, i32, i32, i32) {
    %c0_i32 = arith.constant 0 : i32
    %c0_i32_0 = arith.constant 0 : i32
    %c0_i32_1 = arith.constant 0 : i32
    return %arg0, %arg1, %c0_i32, %c0_i32_0 : i32, i32, i32, i32
  }
}

module attributes {stable_mosaic.version = 11 : i64} {
  func.func @_fused_conv_kernel(%arg0: i32, %arg1: i32, %arg2: memref<1x16x16x128xf32, #tpu.memory_space<vmem>>, %arg3: memref<1152x128xbf16, #tpu.memory_space<vmem>>, %arg4: memref<1x128xf32, #tpu.memory_space<vmem>>, %arg5: memref<1x128xf32, #tpu.memory_space<vmem>>, %arg6: memref<1x8x16x128xf32, #tpu.memory_space<vmem>>, %arg7: memref<1x8x128xf32, #tpu.memory_space<vmem>>, %arg8: memref<10x18x128xf32, #tpu.memory_space<vmem>>, %arg9: memref<128x1152xbf16, #tpu.memory_space<vmem>>) attributes {dimension_semantics = [#tpu.dimension_semantics<parallel>, #tpu.dimension_semantics<parallel>], iteration_bounds = array<i64: 2, 2>, scalar_prefetch = 0 : i64, scratch_operands = 2 : i64, tpu.core_type = #tpu.core_type<tc>, window_params = [{transform_indices = @transform_0, window_bounds = array<i64: 1, 16, 16, 128>}, {pipeline_mode = #tpu.pipeline_mode<synchronous>, transform_indices = @transform_1, window_bounds = array<i64: 1152, 128>}, {pipeline_mode = #tpu.pipeline_mode<synchronous>, transform_indices = @transform_2, window_bounds = array<i64: 1, 128>}, {pipeline_mode = #tpu.pipeline_mode<synchronous>, transform_indices = @transform_3, window_bounds = array<i64: 1, 128>}, {transform_indices = @transform_4, window_bounds = array<i64: 1, 8, 16, 128>}, {transform_indices = @transform_5, window_bounds = array<i64: 1, 8, 128>}]} {
    %c8_i32 = arith.constant 8 : i32
    %0 = arith.muli %arg1, %c8_i32 : i32
    %1 = tpu.assume_multiple %0, 8 : i32
    %c0 = arith.constant 0 : index
    %c0_0 = arith.constant 0 : index
    %2 = vector.load %arg4[%c0, %c0_0] : memref<1x128xf32, #tpu.memory_space<vmem>>, vector<1x128xf32>
    %3 = vector.shape_cast %2 : vector<1x128xf32> to vector<1x1x128xf32>
    %c0_1 = arith.constant 0 : index
    %c0_2 = arith.constant 0 : index
    %4 = vector.load %arg5[%c0_1, %c0_2] : memref<1x128xf32, #tpu.memory_space<vmem>>, vector<1x128xf32>
    %5 = vector.shape_cast %4 : vector<1x128xf32> to vector<1x1x128xf32>
    %cst = arith.constant 0.000000e+00 : f32
    %6 = vector.broadcast %cst : f32 to vector<10x18x128xf32>
    %c0_3 = arith.constant 0 : index
    %c0_4 = arith.constant 0 : index
    %c0_5 = arith.constant 0 : index
    %7 = vector.load %arg8[%c0_3, %c0_4, %c0_5] : memref<10x18x128xf32, #tpu.memory_space<vmem>>, vector<10x18x128xf32>
    tpu.vector_store %arg8[%c0_3, %c0_4, %c0_5], %6 {strides = array<i32>} : memref<10x18x128xf32, #tpu.memory_space<vmem>>, vector<10x18x128xf32>,
    %c0_6 = arith.constant 0 : index
    %8 = arith.index_cast %1 : i32 to index
    %c0_7 = arith.constant 0 : index
    %c0_8 = arith.constant 0 : index
    %9 = vector.load %arg2[%c0_6, %8, %c0_7, %c0_8] : memref<1x16x16x128xf32, #tpu.memory_space<vmem>>, vector<1x8x16x128xf32>
    %10 = vector.shape_cast %9 : vector<1x8x16x128xf32> to vector<8x16x128xf32>
    %11 = vector.broadcast %3 : vector<1x1x128xf32> to vector<8x16x128xf32>
    %12 = arith.mulf %10, %11 : vector<8x16x128xf32>
    %13 = vector.broadcast %5 : vector<1x1x128xf32> to vector<8x16x128xf32>
    %14 = arith.addf %12, %13 : vector<8x16x128xf32>
    %cst_9 = arith.constant 0.000000e+00 : f32
    %15 = vector.broadcast %cst_9 : f32 to vector<8x16x128xf32>
    %16 = arith.maximumf %14, %15 : vector<8x16x128xf32>
    %c1 = arith.constant 1 : index
    %c1_10 = arith.constant 1 : index
    %c0_11 = arith.constant 0 : index
    %17 = vector.load %arg8[%c1, %c1_10, %c0_11] : memref<10x18x128xf32, #tpu.memory_space<vmem>>, vector<8x16x128xf32>
    tpu.vector_store %arg8[%c1, %c1_10, %c0_11], %16 {strides = array<i32>} : memref<10x18x128xf32, #tpu.memory_space<vmem>>, vector<8x16x128xf32>,
    %c0_i32 = arith.constant 0 : i32
    %18 = arith.cmpi sgt, %arg1, %c0_i32 : i32
    %19 = arith.extui %18 : i1 to i32
    %c0_i32_12 = arith.constant 0 : i32
    %20 = arith.cmpi ne, %19, %c0_i32_12 : i32
    scf.if %20 {
      %c1_i32_65 = arith.constant 1 : i32
      %74 = arith.subi %1, %c1_i32_65 : i32
      %c0_66 = arith.constant 0 : index
      %75 = arith.index_cast %74 : i32 to index
      %c0_67 = arith.constant 0 : index
      %c0_68 = arith.constant 0 : index
      %76 = vector.load %arg2[%c0_66, %75, %c0_67, %c0_68] : memref<1x16x16x128xf32, #tpu.memory_space<vmem>>, vector<1x1x16x128xf32>
      %77 = vector.shape_cast %76 : vector<1x1x16x128xf32> to vector<1x16x128xf32>
      %78 = vector.broadcast %3 : vector<1x1x128xf32> to vector<1x16x128xf32>
      %79 = arith.mulf %77, %78 : vector<1x16x128xf32>
      %80 = vector.broadcast %5 : vector<1x1x128xf32> to vector<1x16x128xf32>
      %81 = arith.addf %79, %80 : vector<1x16x128xf32>
      %cst_69 = arith.constant 0.000000e+00 : f32
      %82 = vector.broadcast %cst_69 : f32 to vector<1x16x128xf32>
      %83 = arith.maximumf %81, %82 : vector<1x16x128xf32>
      %c0_70 = arith.constant 0 : index
      %c1_71 = arith.constant 1 : index
      %c0_72 = arith.constant 0 : index
      %84 = vector.load %arg8[%c0_70, %c1_71, %c0_72] : memref<10x18x128xf32, #tpu.memory_space<vmem>>, vector<1x16x128xf32>
      tpu.vector_store %arg8[%c0_70, %c1_71, %c0_72], %83 {strides = array<i32>} : memref<10x18x128xf32, #tpu.memory_space<vmem>>, vector<1x16x128xf32>,
    } else {
    }
    %c1_i32 = arith.constant 1 : i32
    %21 = arith.cmpi slt, %arg1, %c1_i32 : i32
    %22 = arith.extui %21 : i1 to i32
    %c0_i32_13 = arith.constant 0 : i32
    %23 = arith.cmpi ne, %22, %c0_i32_13 : i32
    scf.if %23 {
      %c8_i32_65 = arith.constant 8 : i32
      %74 = arith.addi %1, %c8_i32_65 : i32
      %c0_66 = arith.constant 0 : index
      %75 = arith.index_cast %74 : i32 to index
      %c0_67 = arith.constant 0 : index
      %c0_68 = arith.constant 0 : index
      %76 = vector.load %arg2[%c0_66, %75, %c0_67, %c0_68] : memref<1x16x16x128xf32, #tpu.memory_space<vmem>>, vector<1x1x16x128xf32>
      %77 = vector.shape_cast %76 : vector<1x1x16x128xf32> to vector<1x16x128xf32>
      %78 = vector.broadcast %3 : vector<1x1x128xf32> to vector<1x16x128xf32>
      %79 = arith.mulf %77, %78 : vector<1x16x128xf32>
      %80 = vector.broadcast %5 : vector<1x1x128xf32> to vector<1x16x128xf32>
      %81 = arith.addf %79, %80 : vector<1x16x128xf32>
      %cst_69 = arith.constant 0.000000e+00 : f32
      %82 = vector.broadcast %cst_69 : f32 to vector<1x16x128xf32>
      %83 = arith.maximumf %81, %82 : vector<1x16x128xf32>
      %c9 = arith.constant 9 : index
      %c1_70 = arith.constant 1 : index
      %c0_71 = arith.constant 0 : index
      %84 = vector.load %arg8[%c9, %c1_70, %c0_71] : memref<10x18x128xf32, #tpu.memory_space<vmem>>, vector<1x16x128xf32>
      tpu.vector_store %arg8[%c9, %c1_70, %c0_71], %83 {strides = array<i32>} : memref<10x18x128xf32, #tpu.memory_space<vmem>>, vector<1x16x128xf32>,
    } else {
    }
    %c0_14 = arith.constant 0 : index
    %c0_15 = arith.constant 0 : index
    %c0_16 = arith.constant 0 : index
    %24 = vector.load %arg8[%c0_14, %c0_15, %c0_16] : memref<10x18x128xf32, #tpu.memory_space<vmem>>, vector<8x16x128xf32>
    %25 = vector.shape_cast %24 : vector<8x16x128xf32> to vector<128x128xf32>
    %26 = arith.truncf %25 : vector<128x128xf32> to vector<128x128xbf16>
    %c0_17 = arith.constant 0 : index
    %c0_18 = arith.constant 0 : index
    %27 = vector.load %arg9[%c0_17, %c0_18] : memref<128x1152xbf16, #tpu.memory_space<vmem>>, vector<128x128xbf16>
    tpu.vector_store %arg9[%c0_17, %c0_18], %26 {strides = array<i32>} : memref<128x1152xbf16, #tpu.memory_space<vmem>>, vector<128x128xbf16>,
    %c0_19 = arith.constant 0 : index
    %c1_20 = arith.constant 1 : index
    %c0_21 = arith.constant 0 : index
    %28 = vector.load %arg8[%c0_19, %c1_20, %c0_21] : memref<10x18x128xf32, #tpu.memory_space<vmem>>, vector<8x16x128xf32>
    %29 = vector.shape_cast %28 : vector<8x16x128xf32> to vector<128x128xf32>
    %30 = arith.truncf %29 : vector<128x128xf32> to vector<128x128xbf16>
    %c0_22 = arith.constant 0 : index
    %c128 = arith.constant 128 : index
    %31 = vector.load %arg9[%c0_22, %c128] : memref<128x1152xbf16, #tpu.memory_space<vmem>>, vector<128x128xbf16>
    tpu.vector_store %arg9[%c0_22, %c128], %30 {strides = array<i32>} : memref<128x1152xbf16, #tpu.memory_space<vmem>>, vector<128x128xbf16>,
    %c0_23 = arith.constant 0 : index
    %c2 = arith.constant 2 : index
    %c0_24 = arith.constant 0 : index
    %32 = vector.load %arg8[%c0_23, %c2, %c0_24] : memref<10x18x128xf32, #tpu.memory_space<vmem>>, vector<8x16x128xf32>
    %33 = vector.shape_cast %32 : vector<8x16x128xf32> to vector<128x128xf32>
    %34 = arith.truncf %33 : vector<128x128xf32> to vector<128x128xbf16>
    %c0_25 = arith.constant 0 : index
    %c256 = arith.constant 256 : index
    %35 = vector.load %arg9[%c0_25, %c256] : memref<128x1152xbf16, #tpu.memory_space<vmem>>, vector<128x128xbf16>
    tpu.vector_store %arg9[%c0_25, %c256], %34 {strides = array<i32>} : memref<128x1152xbf16, #tpu.memory_space<vmem>>, vector<128x128xbf16>,
    %c1_26 = arith.constant 1 : index
    %c0_27 = arith.constant 0 : index
    %c0_28 = arith.constant 0 : index
    %36 = vector.load %arg8[%c1_26, %c0_27, %c0_28] : memref<10x18x128xf32, #tpu.memory_space<vmem>>, vector<8x16x128xf32>
    %37 = vector.shape_cast %36 : vector<8x16x128xf32> to vector<128x128xf32>
    %38 = arith.truncf %37 : vector<128x128xf32> to vector<128x128xbf16>
    %c0_29 = arith.constant 0 : index
    %c384 = arith.constant 384 : index
    %39 = vector.load %arg9[%c0_29, %c384] : memref<128x1152xbf16, #tpu.memory_space<vmem>>, vector<128x128xbf16>
    tpu.vector_store %arg9[%c0_29, %c384], %38 {strides = array<i32>} : memref<128x1152xbf16, #tpu.memory_space<vmem>>, vector<128x128xbf16>,
    %c1_30 = arith.constant 1 : index
    %c1_31 = arith.constant 1 : index
    %c0_32 = arith.constant 0 : index
    %40 = vector.load %arg8[%c1_30, %c1_31, %c0_32] : memref<10x18x128xf32, #tpu.memory_space<vmem>>, vector<8x16x128xf32>
    %41 = vector.shape_cast %40 : vector<8x16x128xf32> to vector<128x128xf32>
    %42 = arith.truncf %41 : vector<128x128xf32> to vector<128x128xbf16>
    %c0_33 = arith.constant 0 : index
    %c512 = arith.constant 512 : index
    %43 = vector.load %arg9[%c0_33, %c512] : memref<128x1152xbf16, #tpu.memory_space<vmem>>, vector<128x128xbf16>
    tpu.vector_store %arg9[%c0_33, %c512], %42 {strides = array<i32>} : memref<128x1152xbf16, #tpu.memory_space<vmem>>, vector<128x128xbf16>,
    %c1_34 = arith.constant 1 : index
    %c2_35 = arith.constant 2 : index
    %c0_36 = arith.constant 0 : index
    %44 = vector.load %arg8[%c1_34, %c2_35, %c0_36] : memref<10x18x128xf32, #tpu.memory_space<vmem>>, vector<8x16x128xf32>
    %45 = vector.shape_cast %44 : vector<8x16x128xf32> to vector<128x128xf32>
    %46 = arith.truncf %45 : vector<128x128xf32> to vector<128x128xbf16>
    %c0_37 = arith.constant 0 : index
    %c640 = arith.constant 640 : index
    %47 = vector.load %arg9[%c0_37, %c640] : memref<128x1152xbf16, #tpu.memory_space<vmem>>, vector<128x128xbf16>
    tpu.vector_store %arg9[%c0_37, %c640], %46 {strides = array<i32>} : memref<128x1152xbf16, #tpu.memory_space<vmem>>, vector<128x128xbf16>,
    %c2_38 = arith.constant 2 : index
    %c0_39 = arith.constant 0 : index
    %c0_40 = arith.constant 0 : index
    %48 = vector.load %arg8[%c2_38, %c0_39, %c0_40] : memref<10x18x128xf32, #tpu.memory_space<vmem>>, vector<8x16x128xf32>
    %49 = vector.shape_cast %48 : vector<8x16x128xf32> to vector<128x128xf32>
    %50 = arith.truncf %49 : vector<128x128xf32> to vector<128x128xbf16>
    %c0_41 = arith.constant 0 : index
    %c768 = arith.constant 768 : index
    %51 = vector.load %arg9[%c0_41, %c768] : memref<128x1152xbf16, #tpu.memory_space<vmem>>, vector<128x128xbf16>
    tpu.vector_store %arg9[%c0_41, %c768], %50 {strides = array<i32>} : memref<128x1152xbf16, #tpu.memory_space<vmem>>, vector<128x128xbf16>,
    %c2_42 = arith.constant 2 : index
    %c1_43 = arith.constant 1 : index
    %c0_44 = arith.constant 0 : index
    %52 = vector.load %arg8[%c2_42, %c1_43, %c0_44] : memref<10x18x128xf32, #tpu.memory_space<vmem>>, vector<8x16x128xf32>
    %53 = vector.shape_cast %52 : vector<8x16x128xf32> to vector<128x128xf32>
    %54 = arith.truncf %53 : vector<128x128xf32> to vector<128x128xbf16>
    %c0_45 = arith.constant 0 : index
    %c896 = arith.constant 896 : index
    %55 = vector.load %arg9[%c0_45, %c896] : memref<128x1152xbf16, #tpu.memory_space<vmem>>, vector<128x128xbf16>
    tpu.vector_store %arg9[%c0_45, %c896], %54 {strides = array<i32>} : memref<128x1152xbf16, #tpu.memory_space<vmem>>, vector<128x128xbf16>,
    %c2_46 = arith.constant 2 : index
    %c2_47 = arith.constant 2 : index
    %c0_48 = arith.constant 0 : index
    %56 = vector.load %arg8[%c2_46, %c2_47, %c0_48] : memref<10x18x128xf32, #tpu.memory_space<vmem>>, vector<8x16x128xf32>
    %57 = vector.shape_cast %56 : vector<8x16x128xf32> to vector<128x128xf32>
    %58 = arith.truncf %57 : vector<128x128xf32> to vector<128x128xbf16>
    %c0_49 = arith.constant 0 : index
    %c1024 = arith.constant 1024 : index
    %59 = vector.load %arg9[%c0_49, %c1024] : memref<128x1152xbf16, #tpu.memory_space<vmem>>, vector<128x128xbf16>
    tpu.vector_store %arg9[%c0_49, %c1024], %58 {strides = array<i32>} : memref<128x1152xbf16, #tpu.memory_space<vmem>>, vector<128x128xbf16>,
    %c0_50 = arith.constant 0 : index
    %c0_51 = arith.constant 0 : index
    %60 = vector.load %arg9[%c0_50, %c0_51] : memref<128x1152xbf16, #tpu.memory_space<vmem>>, vector<128x1152xbf16>
    %c0_52 = arith.constant 0 : index
    %c0_53 = arith.constant 0 : index
    %61 = vector.load %arg3[%c0_52, %c0_53] : memref<1152x128xbf16, #tpu.memory_space<vmem>>, vector<1152x128xbf16>
    %cst_54 = arith.constant dense<0.000000e+00> : vector<128x128xf32>
    %62 = tpu.matmul %60, %61, %cst_54 {dimension_numbers = #tpu.dot_dimension_numbers<[1], [0], [0], [1], [0, 0, 1, 1], [], []>} : vector<128x1152xbf16>, vector<1152x128xbf16>, vector<128x128xf32> -> vector<128x128xf32>
    %cst_55 = arith.constant dense<0.000000e+00> : vector<128xf32>
    %63 = vector.multi_reduction <add>, %62, %cst_55 [0] : vector<128x128xf32> to vector<128xf32>
    %64 = vector.shape_cast %63 : vector<128xf32> to vector<1x128xf32>
    %65 = arith.mulf %62, %62 : vector<128x128xf32>
    %cst_56 = arith.constant dense<0.000000e+00> : vector<128xf32>
    %66 = vector.multi_reduction <add>, %65, %cst_56 [0] : vector<128x128xf32> to vector<128xf32>
    %67 = vector.shape_cast %66 : vector<128xf32> to vector<1x128xf32>
    %cst_57 = arith.constant 0.000000e+00 : f32
    %68 = vector.broadcast %cst_57 : f32 to vector<6x128xf32>
    %69 = tpu.concatenate %64, %67, %68 in 0 : vector<1x128xf32>, vector<1x128xf32>, vector<6x128xf32> -> vector<8x128xf32>
    %70 = vector.shape_cast %69 : vector<8x128xf32> to vector<1x8x128xf32>
    %c0_58 = arith.constant 0 : index
    %c0_59 = arith.constant 0 : index
    %c0_60 = arith.constant 0 : index
    %71 = vector.load %arg7[%c0_58, %c0_59, %c0_60] : memref<1x8x128xf32, #tpu.memory_space<vmem>>, vector<1x8x128xf32>
    tpu.vector_store %arg7[%c0_58, %c0_59, %c0_60], %70 {strides = array<i32>} : memref<1x8x128xf32, #tpu.memory_space<vmem>>, vector<1x8x128xf32>,
    %72 = vector.shape_cast %62 : vector<128x128xf32> to vector<1x8x16x128xf32>
    %c0_61 = arith.constant 0 : index
    %c0_62 = arith.constant 0 : index
    %c0_63 = arith.constant 0 : index
    %c0_64 = arith.constant 0 : index
    %73 = vector.load %arg6[%c0_61, %c0_62, %c0_63, %c0_64] : memref<1x8x16x128xf32, #tpu.memory_space<vmem>>, vector<1x8x16x128xf32>
    tpu.vector_store %arg6[%c0_61, %c0_62, %c0_63, %c0_64], %72 {strides = array<i32>} : memref<1x8x16x128xf32, #tpu.memory_space<vmem>>, vector<1x8x16x128xf32>,
    return
  }
  func.func @transform_0(%arg0: i32, %arg1: i32) -> (i32, i32, i32, i32) {
    %c0_i32 = arith.constant 0 : i32
    %c0_i32_0 = arith.constant 0 : i32
    %c0_i32_1 = arith.constant 0 : i32
    %c0_i32_2 = arith.constant 0 : i32
    return %arg0, %c0_i32, %c0_i32_0, %c0_i32_1 : i32, i32, i32, i32
  }
  func.func @transform_1(%arg0: i32, %arg1: i32) -> (i32, i32) {
    %c0_i32 = arith.constant 0 : i32
    %c0_i32_0 = arith.constant 0 : i32
    %c0_i32_1 = arith.constant 0 : i32
    return %c0_i32, %c0_i32_0 : i32, i32
  }
  func.func @transform_2(%arg0: i32, %arg1: i32) -> (i32, i32) {
    %c0_i32 = arith.constant 0 : i32
    %c0_i32_0 = arith.constant 0 : i32
    %c0_i32_1 = arith.constant 0 : i32
    return %c0_i32, %c0_i32_0 : i32, i32
  }
  func.func @transform_3(%arg0: i32, %arg1: i32) -> (i32, i32) {
    %c0_i32 = arith.constant 0 : i32
    %c0_i32_0 = arith.constant 0 : i32
    %c0_i32_1 = arith.constant 0 : i32
    return %c0_i32, %c0_i32_0 : i32, i32
  }
  func.func @transform_4(%arg0: i32, %arg1: i32) -> (i32, i32, i32, i32) {
    %c0_i32 = arith.constant 0 : i32
    %c0_i32_0 = arith.constant 0 : i32
    %c0_i32_1 = arith.constant 0 : i32
    return %arg0, %arg1, %c0_i32, %c0_i32_0 : i32, i32, i32, i32
  }
  func.func @transform_5(%arg0: i32, %arg1: i32) -> (i32, i32, i32) {
    %c2_i32 = arith.constant 2 : i32
    %0 = arith.muli %arg0, %c2_i32 : i32
    %1 = arith.addi %0, %arg1 : i32
    %c0_i32 = arith.constant 0 : i32
    %c0_i32_0 = arith.constant 0 : i32
    %c0_i32_1 = arith.constant 0 : i32
    return %1, %c0_i32, %c0_i32_0 : i32, i32, i32
  }
}

</mosaic_0001>

<llo_original>
// kernel: double_conv_forward.5
$region0: #{double_conv_forward.5}
  #allocation0 [shape = 'u32[]', space=smem, size = 0x4, offset = 0x4, fixed_abs, tag = 'smem constant byte address 0x4 - core index']
  #allocation1 [shape = 'u32[144,128]{1,0:T(1,128)}', space=vmem, size = 0x12000, scoped, tag = 'internal scratch']
  %s0 = inlined_call_operand.vmem [shape: f32[2,16,16,128], index: 0, kind: input, shape index: {}]
  %s1 = inlined_call_operand.vmem [shape: f32[1,128], index: 1, kind: input, shape index: {}]
  %s2 = inlined_call_operand.vmem [shape: f32[1,128], index: 2, kind: input, shape index: {}]
  %s3 = inlined_call_operand.vmem [shape: f32[2,16,16,128], index: 3, kind: output, shape index: {}]
  %s4 = sld [smem:[#allocation0]]
  $region45: #{double_conv_forward.5} parent=0
    _
  %s6 = ssub.s32 1, %s4
  %s7 = scalar_select 0, %s6, %s4
  loop: start=0, step=1, limit=6
  $region2: #{double_conv_forward.5} parent=0 // loop_pre_header
    _
  $region3: #{double_conv_forward.5} parent=0 // loop_header
    %s9 = sphi 0, %s13
    %p10 = scmp.ge.s32.totalorder %s9, 6
    %s16 = sphi 0, %s28
    %s17 = sphi 0, %s24
    %s18 = sphi 0, %s16
    %s19 = sphi 0, %s17
    %s20 = sphi 0, %s18
    %s21 = sphi 0, %s19
    %s33 = sphi 0, %s35
    %s36 = sphi 0, %s33
    %s37 = sphi 0, %s36
    %s53 = sphi 0, %s37
    %s57 = sphi 0, %s57
    %s59 = sphi 0, %s57
    %s60 = sphi 0, %s59
    %s74 = sphi 0, %s60
    %s78 = sphi 0, %s78
    %s80 = sphi 0, %s78
    %s81 = sphi 0, %s80
    %s95 = sphi 0, %s81
    %s103 = sphi 0, %s105
    %s106 = sphi 0, %s103
    %s107 = sphi 0, %s106
    %s123 = sphi 0, %s107
  $region4: #{double_conv_forward.5} parent=0 // loop_header_branch
    %12 = sbr.rel (%p10) target = $region8
  $region5: #{double_conv_forward.5} parent=0 // loop_body
    %s14 = ssub.s32 %s9, 1
    %s15 = ssub.s32 %s9, 2
    %s22 = sadd.s32 1, %s17
    %p23 = scmp.ge.s32.totalorder %s22, 2
    %s24 = scalar_select %p23, 0, %s22
    %s25 = sadd.s32 1, %s16
    %s26 = scalar_select %p23, %s25, %s16
    %p27 = scmp.ge.s32.totalorder %s26, 2
    %s28 = scalar_select %p27, 0, %s26
    %s29 = ssub.s32 %s16, %s28
    %s30 = ssub.s32 %s17, %s24
    %s31 = sor.u32 %s29, %s30
    %p32 = scmp.eq.s32.totalorder %s31, 0
    %s34 = sadd.s32 %s33, 1
    %s35 = scalar_select %p32, %s33, %s34
    %p38 = pneg %p32
    %p39 = scmp.eq.s32.totalorder %s9, 3
    %p40 = por %p38, %p39
    %p41 = scmp.ne.s32.totalorder %s33, %s36
    %p42 = scmp.eq.s32.totalorder %s9, 0
    %p43 = por %p41, %p42
    %p44 = scmp.ne.s32.totalorder %s33, %s36
    %p45 = scmp.eq.s32.totalorder %s14, 3
    %p46 = por %p44, %p45
    %p47 = scmp.ne.s32.totalorder %s36, %s37
    %p48 = scmp.eq.s32.totalorder %s14, 0
    %p49 = por %p47, %p48
    %p50 = scmp.ne.s32.totalorder %s36, %s37
    %p51 = scmp.eq.s32.totalorder %s15, 3
    %p52 = por %p50, %p51
    %p54 = scmp.ne.s32.totalorder %s37, %s53
    %p55 = scmp.eq.s32.totalorder %s15, 0
    %p56 = por %p54, %p55
    %s58 = sadd.s32 %s57, 1
    %p61 = scmp.eq.s32.totalorder %s9, 3
    %p62 = scmp.ne.s32.totalorder %s57, %s59
    %p63 = scmp.eq.s32.totalorder %s9, 0
    %p64 = por %p62, %p63
    %p65 = scmp.ne.s32.totalorder %s57, %s59
    %p66 = scmp.eq.s32.totalorder %s14, 3
    %p67 = por %p65, %p66
    %p68 = scmp.ne.s32.totalorder %s59, %s60
    %p69 = scmp.eq.s32.totalorder %s14, 0
    %p70 = por %p68, %p69
    %p71 = scmp.ne.s32.totalorder %s59, %s60
    %p72 = scmp.eq.s32.totalorder %s15, 3
    %p73 = por %p71, %p72
    %p75 = scmp.ne.s32.totalorder %s60, %s74
    %p76 = scmp.eq.s32.totalorder %s15, 0
    %p77 = por %p75, %p76
    %s79 = sadd.s32 %s78, 1
    %p82 = scmp.eq.s32.totalorder %s9, 3
    %p83 = scmp.ne.s32.totalorder %s78, %s80
    %p84 = scmp.eq.s32.totalorder %s9, 0
    %p85 = por %p83, %p84
    %p86 = scmp.ne.s32.totalorder %s78, %s80
    %p87 = scmp.eq.s32.totalorder %s14, 3
    %p88 = por %p86, %p87
    %p89 = scmp.ne.s32.totalorder %s80, %s81
    %p90 = scmp.eq.s32.totalorder %s14, 0
    %p91 = por %p89, %p90
    %p92 = scmp.ne.s32.totalorder %s80, %s81
    %p93 = scmp.eq.s32.totalorder %s15, 3
    %p94 = por %p92, %p93
    %p96 = scmp.ne.s32.totalorder %s81, %s95
    %p97 = scmp.eq.s32.totalorder %s15, 0
    %p98 = por %p96, %p97
    %s99 = ssub.s32 %s16, %s28
    %s100 = ssub.s32 %s17, %s24
    %s101 = sor.u32 %s99, %s100
    %p102 = scmp.eq.s32.totalorder %s101, 0
    %s104 = sadd.s32 %s103, 1
    %s105 = scalar_select %p102, %s103, %s104
    %p108 = pneg %p102
    %p109 = scmp.eq.s32.totalorder %s9, 3
    %p110 = por %p108, %p109
    %p111 = scmp.ne.s32.totalorder %s103, %s106
    %p112 = scmp.eq.s32.totalorder %s9, 0
    %p113 = por %p111, %p112
    %p114 = scmp.ne.s32.totalorder %s103, %s106
    %p115 = scmp.eq.s32.totalorder %s14, 3
    %p116 = por %p114, %p115
    %p117 = scmp.ne.s32.totalorder %s106, %s107
    %p118 = scmp.eq.s32.totalorder %s14, 0
    %p119 = por %p117, %p118
    %p120 = scmp.ne.s32.totalorder %s106, %s107
    %p121 = scmp.eq.s32.totalorder %s15, 3
    %p122 = por %p120, %p121
    %p124 = scmp.ne.s32.totalorder %s107, %s123
    %p125 = scmp.eq.s32.totalorder %s15, 0
    %p126 = por %p124, %p125
    %p127 = scmp.le.s32.totalorder 1, %s9
    %p128 = scmp.lt.s32.totalorder %s9, 5
    %p129 = pnand %p127, %p128
    %p130 = pneg %p129
    // Predicated region
    $region9: #{double_conv_forward.5} parent=5 // pred_check
      _
    $region10: #{double_conv_forward.5} parent=5 // pred_check_branch
      %132 = sbr.rel (%p129) target = $region12
    $region11: #{double_conv_forward.5} parent=5 // pred_region
      %s133 = ssub.s32 %s9, 1
      // Predicated region
      $region13: #{double_conv_forward.5} parent=11 // pred_check
        %p134 = pneg %p70
      $region14: #{double_conv_forward.5} parent=11 // pred_check_branch
        %136 = sbr.rel (%p134) target = $region16
      $region15: #{double_conv_forward.5} parent=11 // pred_region
        _
      $region16: #{double_conv_forward.5} parent=11 // pred_fallthru
        _
      // Predicated region
      $region17: #{double_conv_forward.5} parent=11 // pred_check
        %p137 = pneg %p91
      $region18: #{double_conv_forward.5} parent=11 // pred_check_branch
        %139 = sbr.rel (%p137) target = $region20
      $region19: #{double_conv_forward.5} parent=11 // pred_region
        _
      $region20: #{double_conv_forward.5} parent=11 // pred_fallthru
        _
    $region12: #{double_conv_forward.5} parent=5 // pred_fallthru
      _
    %p140 = scmp.lt.s32.totalorder %s9, 4
    // Predicated region
    $region21: #{double_conv_forward.5} parent=5 // pred_check
      %p141 = pneg %p140
    $region22: #{double_conv_forward.5} parent=5 // pred_check_branch
      %143 = sbr.rel (%p141) target = $region24
    $region23: #{double_conv_forward.5} parent=5 // pred_region
      // Predicated region
      $region25: #{double_conv_forward.5} parent=23 // pred_check
        %p144 = pneg %p43
      $region26: #{double_conv_forward.5} parent=23 // pred_check_branch
        %146 = sbr.rel (%p144) target = $region28
      $region27: #{double_conv_forward.5} parent=23 // pred_region
        %s147 = smul.u32 8, %s17
        %p148 = scmp.lt.s32.totalorder %s16, 1
        %s149 = scalar_select %p148, %s16, 1
        %p150 = scmp.lt.s32.totalorder %s147, 15
        %s151 = scalar_select %p150, %s147, 15
        %s152 = smul.addr %s151, 2
        %s153 = smul.addr %s149, 32
        %s154 = sadd.s32 %s152, %s153
        %s155 = smul.addr %s154, 8
        %s156 = scalar_lea.vmem %s0, %s155
        %s157 = smul.u32 8, %s17
      $region28: #{double_conv_forward.5} parent=23 // pred_fallthru
        _
    $region24: #{double_conv_forward.5} parent=5 // pred_fallthru
      _
    %p158 = scmp.le.s32.totalorder 1, %s9
    %p159 = scmp.lt.s32.totalorder %s9, 5
    %p160 = pnand %p158, %p159
    %p161 = pneg %p160
    // Predicated region
    $region29: #{double_conv_forward.5} parent=5 // pred_check
      _
    $region30: #{double_conv_forward.5} parent=5 // pred_check_branch
      %163 = sbr.rel (%p160) target = $region32
    $region31: #{double_conv_forward.5} parent=5 // pred_region
      %s164 = ssub.s32 %s9, 1
      %s165 = smul.u32 8, %s19
      %p166 = scmp.lt.s32.totalorder %s18, 1
      %s167 = scalar_select %p166, %s18, 1
      %p168 = scmp.lt.s32.totalorder %s165, 15
      %s169 = scalar_select %p168, %s165, 15
      %s170 = smul.addr %s169, 2
      %s171 = smul.addr %s167, 32
      %s172 = sadd.s32 %s170, %s171
      %s173 = smul.addr %s172, 8
      %s174 = scalar_lea.vmem %s0, %s173
      %p175 = pneg %p49
      %p176 = pneg %p46
      %p177 = pneg %p70
      %p178 = pneg %p67
      %p179 = pneg %p91
      %p180 = pneg %p88
      %p181 = pneg %p119
      %p182 = pneg %p116
      %s183 = smul.u32 8, %s19
      %p184 = scmp.lt.s32.totalorder %s18, 1
      %s185 = scalar_select %p184, %s18, 1
      %p186 = scmp.lt.s32.totalorder %s183, 15
      %s187 = scalar_select %p186, %s183, 15
      %s188 = smul.addr %s187, 2
      %s189 = smul.addr %s185, 32
      %s190 = sadd.s32 %s188, %s189
      %s191 = smul.addr %s190, 8
      %s192 = scalar_lea.vmem %s3, %s191
      %s193 = smul.u32 8, %s19
      %p194 = scmp.lt.s32.totalorder %s18, 1
      %s195 = scalar_select %p194, %s18, 1
      %p196 = scmp.lt.s32.totalorder %s193, 15
      %s197 = scalar_select %p196, %s193, 15
      %s198 = smul.addr %s197, 2
      %s199 = smul.addr %s195, 32
      %s200 = sadd.s32 %s198, %s199
      %s201 = smul.addr %s200, 8
      %s202 = scalar_lea.vmem %s0, %s201
      %s203 = smul.u32 8, %s19
      %s204 = smul.u32 8, %s19
      %p205 = scmp.lt.s32.totalorder %s18, 1
      %s206 = scalar_select %p205, %s18, 1
      %p207 = scmp.lt.s32.totalorder %s204, 15
      %s208 = scalar_select %p207, %s204, 15
      %s209 = smul.addr %s208, 2
      %s210 = smul.addr %s206, 32
      %s211 = sadd.s32 %s209, %s210
      %s212 = smul.addr %s211, 8
      %s213 = scalar_lea.vmem %s3, %s212
      %s214 = smul.u32 8, %s19
      %v215 = vld [vmem:[%s1] sm:$0x1]
      %v216 = vld [vmem:[%s2] sm:$0x1]
      %v217 = vld [vmem:[%s202] sm:$0xff]
      %v218 = vld [vmem:[%s202 + $0x8] sm:$0xff]
      %v219 = vld [vmem:[%s202 + $0x10] sm:$0xff]
      %v220 = vld [vmem:[%s202 + $0x18] sm:$0xff]
      %v221 = vld [vmem:[%s202 + $0x20] sm:$0xff]
      %v222 = vld [vmem:[%s202 + $0x28] sm:$0xff]
      %v223 = vld [vmem:[%s202 + $0x30] sm:$0xff]
      %v224 = vld [vmem:[%s202 + $0x38] sm:$0xff]
      %v225 = vld [vmem:[%s202 + $0x40] sm:$0xff]
      %v226 = vld [vmem:[%s202 + $0x48] sm:$0xff]
      %v227 = vld [vmem:[%s202 + $0x50] sm:$0xff]
      %v228 = vld [vmem:[%s202 + $0x58] sm:$0xff]
      %v229 = vld [vmem:[%s202 + $0x60] sm:$0xff]
      %v230 = vld [vmem:[%s202 + $0x68] sm:$0xff]
      %v231 = vld [vmem:[%s202 + $0x70] sm:$0xff]
      %v232 = vld [vmem:[%s202 + $0x78] sm:$0xff]
      %v234 = vlaneseq
      %v235 = vshrl.u32 %v234, 7
      %v236 = vsub.s32 0, %v235
      %v237 = vrot.slane %v215, %v236
      %v239 = vmul.f32 %v217, %v237
      %v240 = vmul.f32 %v218, %v237
      %v241 = vmul.f32 %v219, %v237
      %v242 = vmul.f32 %v220, %v237
      %v243 = vmul.f32 %v221, %v237
      %v244 = vmul.f32 %v222, %v237
      %v245 = vmul.f32 %v223, %v237
      %v246 = vmul.f32 %v224, %v237
      %v247 = vmul.f32 %v225, %v237
      %v248 = vmul.f32 %v226, %v237
      %v249 = vmul.f32 %v227, %v237
      %v250 = vmul.f32 %v228, %v237
      %v251 = vmul.f32 %v229, %v237
      %v252 = vmul.f32 %v230, %v237
      %v253 = vmul.f32 %v231, %v237
      %v254 = vmul.f32 %v232, %v237
      %v256 = vlaneseq
      %v257 = vshrl.u32 %v256, 7
      %v258 = vsub.s32 0, %v257
      %v259 = vrot.slane %v216, %v258
      %v261 = vadd.f32 %v239, %v259
      %v262 = vadd.f32 %v240, %v259
      %v263 = vadd.f32 %v241, %v259
      %v264 = vadd.f32 %v242, %v259
      %v265 = vadd.f32 %v243, %v259
      %v266 = vadd.f32 %v244, %v259
      %v267 = vadd.f32 %v245, %v259
      %v268 = vadd.f32 %v246, %v259
      %v269 = vadd.f32 %v247, %v259
      %v270 = vadd.f32 %v248, %v259
      %v271 = vadd.f32 %v249, %v259
      %v272 = vadd.f32 %v250, %v259
      %v273 = vadd.f32 %v251, %v259
      %v274 = vadd.f32 %v252, %v259
      %v275 = vadd.f32 %v253, %v259
      %v276 = vadd.f32 %v254, %v259
      %v277 = vmax.f32 %v261, 0.0
      %v278 = vmax.f32 %v262, 0.0
      %v279 = vmax.f32 %v263, 0.0
      %v280 = vmax.f32 %v264, 0.0
      %v281 = vmax.f32 %v265, 0.0
      %v282 = vmax.f32 %v266, 0.0
      %v283 = vmax.f32 %v267, 0.0
      %v284 = vmax.f32 %v268, 0.0
      %v285 = vmax.f32 %v269, 0.0
      %v286 = vmax.f32 %v270, 0.0
      %v287 = vmax.f32 %v271, 0.0
      %v288 = vmax.f32 %v272, 0.0
      %v289 = vmax.f32 %v273, 0.0
      %v290 = vmax.f32 %v274, 0.0
      %v291 = vmax.f32 %v275, 0.0
      %v292 = vmax.f32 %v276, 0.0
      %293 = vst [vmem:[%s213] sm:$0xff] %v277
      %294 = vst [vmem:[%s213 + $0x8] sm:$0xff] %v278
      %295 = vst [vmem:[%s213 + $0x10] sm:$0xff] %v279
      %296 = vst [vmem:[%s213 + $0x18] sm:$0xff] %v280
      %297 = vst [vmem:[%s213 + $0x20] sm:$0xff] %v281
      %298 = vst [vmem:[%s213 + $0x28] sm:$0xff] %v282
      %299 = vst [vmem:[%s213 + $0x30] sm:$0xff] %v283
      %300 = vst [vmem:[%s213 + $0x38] sm:$0xff] %v284
      %301 = vst [vmem:[%s213 + $0x40] sm:$0xff] %v285
      %302 = vst [vmem:[%s213 + $0x48] sm:$0xff] %v286
      %303 = vst [vmem:[%s213 + $0x50] sm:$0xff] %v287
      %304 = vst [vmem:[%s213 + $0x58] sm:$0xff] %v288
      %305 = vst [vmem:[%s213 + $0x60] sm:$0xff] %v289
      %306 = vst [vmem:[%s213 + $0x68] sm:$0xff] %v290
      %307 = vst [vmem:[%s213 + $0x70] sm:$0xff] %v291
      %308 = vst [vmem:[%s213 + $0x78] sm:$0xff] %v292
      %s309 = smul.u32 8, %s19
      %p310 = scmp.lt.s32.totalorder %s18, 1
      %s311 = scalar_select %p310, %s18, 1
      %p312 = scmp.lt.s32.totalorder %s309, 15
      %s313 = scalar_select %p312, %s309, 15
      %s314 = smul.addr %s313, 2
      %s315 = smul.addr %s311, 32
      %s316 = sadd.s32 %s314, %s315
      %s317 = smul.addr %s316, 8
      %s318 = scalar_lea.vmem %s3, %s317
      // Predicated region
      $region33: #{double_conv_forward.5} parent=31 // pred_check
        %p319 = pneg %p116
      $region34: #{double_conv_forward.5} parent=31 // pred_check_branch
        %321 = sbr.rel (%p319) target = $region36
      $region35: #{double_conv_forward.5} parent=31 // pred_region
        %s322 = smul.u32 8, %s19
      $region36: #{double_conv_forward.5} parent=31 // pred_fallthru
        _
    $region32: #{double_conv_forward.5} parent=5 // pred_fallthru
      _
    %p323 = scmp.le.s32.totalorder 2, %s9
    // Predicated region
    $region37: #{double_conv_forward.5} parent=5 // pred_check
      %p324 = pneg %p323
    $region38: #{double_conv_forward.5} parent=5 // pred_check_branch
      %326 = sbr.rel (%p324) target = $region40
    $region39: #{double_conv_forward.5} parent=5 // pred_region
      %s327 = ssub.s32 %s9, 2
      // Predicated region
      $region41: #{double_conv_forward.5} parent=39 // pred_check
        %p328 = pneg %p122
      $region42: #{double_conv_forward.5} parent=39 // pred_check_branch
        %330 = sbr.rel (%p328) target = $region44
      $region43: #{double_conv_forward.5} parent=39 // pred_region
        %s331 = smul.u32 8, %s21
        %p332 = scmp.lt.s32.totalorder %s20, 1
        %s333 = scalar_select %p332, %s20, 1
        %p334 = scmp.lt.s32.totalorder %s331, 15
        %s335 = scalar_select %p334, %s331, 15
        %s336 = smul.addr %s335, 2
        %s337 = smul.addr %s333, 32
        %s338 = sadd.s32 %s336, %s337
        %s339 = smul.addr %s338, 8
        %s340 = scalar_lea.vmem %s3, %s339
      $region44: #{double_conv_forward.5} parent=39 // pred_fallthru
        _
    $region40: #{double_conv_forward.5} parent=5 // pred_fallthru
      _
  $region6: #{double_conv_forward.5} parent=0 // loop_footer
    %s13 = sadd.s32 1, %s9
  $region7: #{double_conv_forward.5} parent=0 // loop_footer_branch
    %8 = sbr.rel target = $region3
  $region8: #{double_conv_forward.5} parent=0 // loop_exit
    _

// kernel: double_conv_forward.3
$region0: #{double_conv_forward.3}
  #allocation0 [shape = 'u32[]', space=smem, size = 0x4, offset = 0x4, fixed_abs, tag = 'smem constant byte address 0x4 - core index']
  #allocation1 [shape = 'u32[144,128]{1,0:T(1,128)}', space=vmem, size = 0x12000, scoped, tag = 'internal scratch']
  #allocation2 [shape = 'f32[10,18,128]{2,1,0:T(8,128)}', space=vmem, size = 0x1e000, scoped, tag = 'scratch operand']
  #allocation3 [shape = 'bf16[128,1152]{1,0:T(16,128)(2,1)}', space=vmem, size = 0x48000, scoped, tag = 'scratch operand']
  %s0 = inlined_call_operand.vmem [shape: f32[2,16,16,128], index: 0, kind: input, shape index: {}]
  %s1 = inlined_call_operand.vmem [shape: bf16[1152,128], index: 1, kind: input, shape index: {}]
  %s2 = inlined_call_operand.vmem [shape: f32[1,128], index: 2, kind: input, shape index: {}]
  %s3 = inlined_call_operand.vmem [shape: f32[1,128], index: 3, kind: input, shape index: {}]
  %s4 = inlined_call_operand.vmem [shape: f32[2,16,16,128], index: 4, kind: output, shape index: {0}]
  %s5 = inlined_call_operand.vmem [shape: f32[4,8,128], index: 5, kind: output, shape index: {1}]
  %6 = xla_tuple %s4, %s5
  %s7 = sld [smem:[#allocation0]]
  $region65: #{double_conv_forward.3} parent=0
    _
  %s9 = ssub.s32 1, %s7
  %s10 = scalar_select 0, %s9, %s7
  loop: start=0, step=1, limit=6
  $region2: #{double_conv_forward.3} parent=0 // loop_pre_header
    _
  $region3: #{double_conv_forward.3} parent=0 // loop_header
    %s12 = sphi 0, %s16
    %p13 = scmp.ge.s32.totalorder %s12, 6
    %s19 = sphi 0, %s31
    %s20 = sphi 0, %s27
    %s21 = sphi 0, %s19
    %s22 = sphi 0, %s20
    %s23 = sphi 0, %s21
    %s24 = sphi 0, %s22
    %s34 = sphi 0, %s36
    %s37 = sphi 0, %s34
    %s38 = sphi 0, %s37
    %s54 = sphi 0, %s38
    %s58 = sphi 0, %s58
    %s60 = sphi 0, %s58
    %s61 = sphi 0, %s60
    %s75 = sphi 0, %s61
    %s79 = sphi 0, %s79
    %s81 = sphi 0, %s79
    %s82 = sphi 0, %s81
    %s96 = sphi 0, %s82
    %s100 = sphi 0, %s100
    %s102 = sphi 0, %s100
    %s103 = sphi 0, %s102
    %s117 = sphi 0, %s103
    %s125 = sphi 0, %s127
    %s128 = sphi 0, %s125
    %s129 = sphi 0, %s128
    %s145 = sphi 0, %s129
    %s155 = sphi 0, %s157
    %s158 = sphi 0, %s155
    %s159 = sphi 0, %s158
    %s175 = sphi 0, %s159
  $region4: #{double_conv_forward.3} parent=0 // loop_header_branch
    %15 = sbr.rel (%p13) target = $region8
  $region5: #{double_conv_forward.3} parent=0 // loop_body
    %s17 = ssub.s32 %s12, 1
    %s18 = ssub.s32 %s12, 2
    %s25 = sadd.s32 1, %s20
    %p26 = scmp.ge.s32.totalorder %s25, 2
    %s27 = scalar_select %p26, 0, %s25
    %s28 = sadd.s32 1, %s19
    %s29 = scalar_select %p26, %s28, %s19
    %p30 = scmp.ge.s32.totalorder %s29, 2
    %s31 = scalar_select %p30, 0, %s29
    %s32 = ssub.s32 %s19, %s31
    %p33 = scmp.eq.s32.totalorder %s32, 0
    %s35 = sadd.s32 %s34, 1
    %s36 = scalar_select %p33, %s34, %s35
    %p39 = pneg %p33
    %p40 = scmp.eq.s32.totalorder %s12, 3
    %p41 = por %p39, %p40
    %p42 = scmp.ne.s32.totalorder %s34, %s37
    %p43 = scmp.eq.s32.totalorder %s12, 0
    %p44 = por %p42, %p43
    %p45 = scmp.ne.s32.totalorder %s34, %s37
    %p46 = scmp.eq.s32.totalorder %s17, 3
    %p47 = por %p45, %p46
    %p48 = scmp.ne.s32.totalorder %s37, %s38
    %p49 = scmp.eq.s32.totalorder %s17, 0
    %p50 = por %p48, %p49
    %p51 = scmp.ne.s32.totalorder %s37, %s38
    %p52 = scmp.eq.s32.totalorder %s18, 3
    %p53 = por %p51, %p52
    %p55 = scmp.ne.s32.totalorder %s38, %s54
    %p56 = scmp.eq.s32.totalorder %s18, 0
    %p57 = por %p55, %p56
    %s59 = sadd.s32 %s58, 1
    %p62 = scmp.eq.s32.totalorder %s12, 3
    %p63 = scmp.ne.s32.totalorder %s58, %s60
    %p64 = scmp.eq.s32.totalorder %s12, 0
    %p65 = por %p63, %p64
    %p66 = scmp.ne.s32.totalorder %s58, %s60
    %p67 = scmp.eq.s32.totalorder %s17, 3
    %p68 = por %p66, %p67
    %p69 = scmp.ne.s32.totalorder %s60, %s61
    %p70 = scmp.eq.s32.totalorder %s17, 0
    %p71 = por %p69, %p70
    %p72 = scmp.ne.s32.totalorder %s60, %s61
    %p73 = scmp.eq.s32.totalorder %s18, 3
    %p74 = por %p72, %p73
    %p76 = scmp.ne.s32.totalorder %s61, %s75
    %p77 = scmp.eq.s32.totalorder %s18, 0
    %p78 = por %p76, %p77
    %s80 = sadd.s32 %s79, 1
    %p83 = scmp.eq.s32.totalorder %s12, 3
    %p84 = scmp.ne.s32.totalorder %s79, %s81
    %p85 = scmp.eq.s32.totalorder %s12, 0
    %p86 = por %p84, %p85
    %p87 = scmp.ne.s32.totalorder %s79, %s81
    %p88 = scmp.eq.s32.totalorder %s17, 3
    %p89 = por %p87, %p88
    %p90 = scmp.ne.s32.totalorder %s81, %s82
    %p91 = scmp.eq.s32.totalorder %s17, 0
    %p92 = por %p90, %p91
    %p93 = scmp.ne.s32.totalorder %s81, %s82
    %p94 = scmp.eq.s32.totalorder %s18, 3
    %p95 = por %p93, %p94
    %p97 = scmp.ne.s32.totalorder %s82, %s96
    %p98 = scmp.eq.s32.totalorder %s18, 0
    %p99 = por %p97, %p98
    %s101 = sadd.s32 %s100, 1
    %p104 = scmp.eq.s32.totalorder %s12, 3
    %p105 = scmp.ne.s32.totalorder %s100, %s102
    %p106 = scmp.eq.s32.totalorder %s12, 0
    %p107 = por %p105, %p106
    %p108 = scmp.ne.s32.totalorder %s100, %s102
    %p109 = scmp.eq.s32.totalorder %s17, 3
    %p110 = por %p108, %p109
    %p111 = scmp.ne.s32.totalorder %s102, %s103
    %p112 = scmp.eq.s32.totalorder %s17, 0
    %p113 = por %p111, %p112
    %p114 = scmp.ne.s32.totalorder %s102, %s103
    %p115 = scmp.eq.s32.totalorder %s18, 3
    %p116 = por %p114, %p115
    %p118 = scmp.ne.s32.totalorder %s103, %s117
    %p119 = scmp.eq.s32.totalorder %s18, 0
    %p120 = por %p118, %p119
    %s121 = ssub.s32 %s19, %s31
    %s122 = ssub.s32 %s20, %s27
    %s123 = sor.u32 %s121, %s122
    %p124 = scmp.eq.s32.totalorder %s123, 0
    %s126 = sadd.s32 %s125, 1
    %s127 = scalar_select %p124, %s125, %s126
    %p130 = pneg %p124
    %p131 = scmp.eq.s32.totalorder %s12, 3
    %p132 = por %p130, %p131
    %p133 = scmp.ne.s32.totalorder %s125, %s128
    %p134 = scmp.eq.s32.totalorder %s12, 0
    %p135 = por %p133, %p134
    %p136 = scmp.ne.s32.totalorder %s125, %s128
    %p137 = scmp.eq.s32.totalorder %s17, 3
    %p138 = por %p136, %p137
    %p139 = scmp.ne.s32.totalorder %s128, %s129
    %p140 = scmp.eq.s32.totalorder %s17, 0
    %p141 = por %p139, %p140
    %p142 = scmp.ne.s32.totalorder %s128, %s129
    %p143 = scmp.eq.s32.totalorder %s18, 3
    %p144 = por %p142, %p143
    %p146 = scmp.ne.s32.totalorder %s129, %s145
    %p147 = scmp.eq.s32.totalorder %s18, 0
    %p148 = por %p146, %p147
    %s149 = smul.u32 %s19, 2
    %s150 = sadd.s32 %s149, %s20
    %s151 = smul.u32 %s31, 2
    %s152 = sadd.s32 %s151, %s27
    %s153 = ssub.s32 %s150, %s152
    %p154 = scmp.eq.s32.totalorder %s153, 0
    %s156 = sadd.s32 %s155, 1
    %s157 = scalar_select %p154, %s155, %s156
    %p160 = pneg %p154
    %p161 = scmp.eq.s32.totalorder %s12, 3
    %p162 = por %p160, %p161
    %p163 = scmp.ne.s32.totalorder %s155, %s158
    %p164 = scmp.eq.s32.totalorder %s12, 0
    %p165 = por %p163, %p164
    %p166 = scmp.ne.s32.totalorder %s155, %s158
    %p167 = scmp.eq.s32.totalorder %s17, 3
    %p168 = por %p166, %p167
    %p169 = scmp.ne.s32.totalorder %s158, %s159
    %p170 = scmp.eq.s32.totalorder %s17, 0
    %p171 = por %p169, %p170
    %p172 = scmp.ne.s32.totalorder %s158, %s159
    %p173 = scmp.eq.s32.totalorder %s18, 3
    %p174 = por %p172, %p173
    %p176 = scmp.ne.s32.totalorder %s159, %s175
    %p177 = scmp.eq.s32.totalorder %s18, 0
    %p178 = por %p176, %p177
    %p179 = scmp.le.s32.totalorder 1, %s12
    %p180 = scmp.lt.s32.totalorder %s12, 5
    %p181 = pnand %p179, %p180
    %p182 = pneg %p181
    // Predicated region
    $region9: #{double_conv_forward.3} parent=5 // pred_check
      _
    $region10: #{double_conv_forward.3} parent=5 // pred_check_branch
      %184 = sbr.rel (%p181) target = $region12
    $region11: #{double_conv_forward.3} parent=5 // pred_region
      %s185 = ssub.s32 %s12, 1
      // Predicated region
      $region13: #{double_conv_forward.3} parent=11 // pred_check
        %p186 = pneg %p71
      $region14: #{double_conv_forward.3} parent=11 // pred_check_branch
        %188 = sbr.rel (%p186) target = $region16
      $region15: #{double_conv_forward.3} parent=11 // pred_region
        _
      $region16: #{double_conv_forward.3} parent=11 // pred_fallthru
        _
      // Predicated region
      $region17: #{double_conv_forward.3} parent=11 // pred_check
        %p189 = pneg %p92
      $region18: #{double_conv_forward.3} parent=11 // pred_check_branch
        %191 = sbr.rel (%p189) target = $region20
      $region19: #{double_conv_forward.3} parent=11 // pred_region
        _
      $region20: #{double_conv_forward.3} parent=11 // pred_fallthru
        _
      // Predicated region
      $region21: #{double_conv_forward.3} parent=11 // pred_check
        %p192 = pneg %p113
      $region22: #{double_conv_forward.3} parent=11 // pred_check_branch
        %194 = sbr.rel (%p192) target = $region24
      $region23: #{double_conv_forward.3} parent=11 // pred_region
        _
      $region24: #{double_conv_forward.3} parent=11 // pred_fallthru
        _
    $region12: #{double_conv_forward.3} parent=5 // pred_fallthru
      _
    %p195 = scmp.lt.s32.totalorder %s12, 4
    // Predicated region
    $region25: #{double_conv_forward.3} parent=5 // pred_check
      %p196 = pneg %p195
    $region26: #{double_conv_forward.3} parent=5 // pred_check_branch
      %198 = sbr.rel (%p196) target = $region28
    $region27: #{double_conv_forward.3} parent=5 // pred_region
      // Predicated region
      $region29: #{double_conv_forward.3} parent=27 // pred_check
        %p199 = pneg %p44
      $region30: #{double_conv_forward.3} parent=27 // pred_check_branch
        %201 = sbr.rel (%p199) target = $region32
      $region31: #{double_conv_forward.3} parent=27 // pred_region
        %p202 = scmp.lt.s32.totalorder %s19, 1
        %s203 = scalar_select %p202, %s19, 1
        %s204 = smul.addr %s203, 32
        %s205 = smul.addr %s204, 8
        %s206 = scalar_lea.vmem %s0, %s205
      $region32: #{double_conv_forward.3} parent=27 // pred_fallthru
        _
    $region28: #{double_conv_forward.3} parent=5 // pred_fallthru
      _
    %p207 = scmp.le.s32.totalorder 1, %s12
    %p208 = scmp.lt.s32.totalorder %s12, 5
    %p209 = pnand %p207, %p208
    %p210 = pneg %p209
    // Predicated region
    $region33: #{double_conv_forward.3} parent=5 // pred_check
      _
    $region34: #{double_conv_forward.3} parent=5 // pred_check_branch
      %212 = sbr.rel (%p209) target = $region36
    $region35: #{double_conv_forward.3} parent=5 // pred_region
      %s213 = ssub.s32 %s12, 1
      %p214 = scmp.lt.s32.totalorder %s21, 1
      %s215 = scalar_select %p214, %s21, 1
      %s216 = smul.addr %s215, 32
      %s217 = smul.addr %s216, 8
      %s218 = scalar_lea.vmem %s0, %s217
      %p219 = pneg %p50
      %p220 = pneg %p47
      %p221 = pneg %p71
      %p222 = pneg %p68
      %p223 = pneg %p92
      %p224 = pneg %p89
      %p225 = pneg %p113
      %p226 = pneg %p110
      %p227 = pneg %p141
      %p228 = pneg %p138
      %s229 = smul.u32 8, %s22
      %p230 = scmp.lt.s32.totalorder %s21, 1
      %s231 = scalar_select %p230, %s21, 1
      %p232 = scmp.lt.s32.totalorder %s229, 15
      %s233 = scalar_select %p232, %s229, 15
      %s234 = smul.addr %s233, 2
      %s235 = smul.addr %s231, 32
      %s236 = sadd.s32 %s234, %s235
      %s237 = smul.addr %s236, 8
      %s238 = scalar_lea.vmem %s4, %s237
      %p239 = pneg %p171
      %p240 = pneg %p168
      %s241 = smul.u32 %s21, 2
      %s242 = sadd.s32 %s241, %s22
      %p243 = scmp.lt.s32.totalorder %s242, 3
      %s244 = scalar_select %p243, %s242, 3
      %s245 = smul.addr %s244, 8
      %s246 = scalar_lea.vmem %s5, %s245
      %p247 = scmp.lt.s32.totalorder %s21, 1
      %s248 = scalar_select %p247, %s21, 1
      %s249 = smul.addr %s248, 32
      %s250 = smul.addr %s249, 8
      %s251 = scalar_lea.vmem %s0, %s250
      %s252 = smul.u32 8, %s22
      %p253 = scmp.lt.s32.totalorder %s21, 1
      %s254 = scalar_select %p253, %s21, 1
      %p255 = scmp.lt.s32.totalorder %s252, 15
      %s256 = scalar_select %p255, %s252, 15
      %s257 = smul.addr %s256, 2
      %s258 = smul.addr %s254, 32
      %s259 = sadd.s32 %s257, %s258
      %s260 = smul.addr %s259, 8
      %s261 = scalar_lea.vmem %s4, %s260
      %s262 = smul.u32 8, %s22
      %s263 = smul.u32 %s21, 2
      %s264 = sadd.s32 %s263, %s22
      %p265 = scmp.lt.s32.totalorder %s264, 3
      %s266 = scalar_select %p265, %s264, 3
      %s267 = smul.addr %s266, 8
      %s268 = scalar_lea.vmem %s5, %s267
      %s269 = smul.u32 %s21, 2
      %s270 = sadd.s32 %s269, %s22
      %s272 = smul.u32 %s22, 8
      %273 = vst [vmem:[#allocation2] sm:$0xff] 0.0
      %274 = vst [vmem:[#allocation2 + $0x8] sm:$0xff] 0.0
      %275 = vst [vmem:[#allocation2 + $0x10] sm:$0x3] 0.0
      %276 = vst [vmem:[#allocation2 + $0x18] sm:$0xff] 0.0
      %277 = vst [vmem:[#allocation2 + $0x20] sm:$0xff] 0.0
      %278 = vst [vmem:[#allocation2 + $0x28] sm:$0x3] 0.0
      %279 = vst [vmem:[#allocation2 + $0x30] sm:$0xff] 0.0
      %280 = vst [vmem:[#allocation2 + $0x38] sm:$0xff] 0.0
      %281 = vst [vmem:[#allocation2 + $0x40] sm:$0x3] 0.0
      %282 = vst [vmem:[#allocation2 + $0x48] sm:$0xff] 0.0
      %283 = vst [vmem:[#allocation2 + $0x50] sm:$0xff] 0.0
      %284 = vst [vmem:[#allocation2 + $0x58] sm:$0x3] 0.0
      %285 = vst [vmem:[#allocation2 + $0x60] sm:$0xff] 0.0
      %286 = vst [vmem:[#allocation2 + $0x68] sm:$0xff] 0.0
      %287 = vst [vmem:[#allocation2 + $0x70] sm:$0x3] 0.0
      %288 = vst [vmem:[#allocation2 + $0x78] sm:$0xff] 0.0
      %289 = vst [vmem:[#allocation2 + $0x80] sm:$0xff] 0.0
      %290 = vst [vmem:[#allocation2 + $0x88] sm:$0x3] 0.0
      %291 = vst [vmem:[#allocation2 + $0x90] sm:$0xff] 0.0
      %292 = vst [vmem:[#allocation2 + $0x98] sm:$0xff] 0.0
      %293 = vst [vmem:[#allocation2 + $0xa0] sm:$0x3] 0.0
      %294 = vst [vmem:[#allocation2 + $0xa8] sm:$0xff] 0.0
      %295 = vst [vmem:[#allocation2 + $0xb0] sm:$0xff] 0.0
      %296 = vst [vmem:[#allocation2 + $0xb8] sm:$0x3] 0.0
      %297 = vst [vmem:[#allocation2 + $0xc0] sm:$0xff] 0.0
      %298 = vst [vmem:[#allocation2 + $0xc8] sm:$0xff] 0.0
      %299 = vst [vmem:[#allocation2 + $0xd0] sm:$0x3] 0.0
      %300 = vst [vmem:[#allocation2 + $0xd8] sm:$0xff] 0.0
      %301 = vst [vmem:[#allocation2 + $0xe0] sm:$0xff] 0.0
      %302 = vst [vmem:[#allocation2 + $0xe8] sm:$0x3] 0.0
      %s303 = smul.u32 %s272, 16
      %s304 = scalar_lea.vmem %s251, %s303
      %v305 = vld [vmem:[%s304] sm:$0xff]
      %v306 = vld [vmem:[%s304 + $0x8] sm:$0xff]
      %v307 = vld [vmem:[%s304 + $0x10] sm:$0xff]
      %v308 = vld [vmem:[%s304 + $0x18] sm:$0xff]
      %v309 = vld [vmem:[%s304 + $0x20] sm:$0xff]
      %v310 = vld [vmem:[%s304 + $0x28] sm:$0xff]
      %v311 = vld [vmem:[%s304 + $0x30] sm:$0xff]
      %v312 = vld [vmem:[%s304 + $0x38] sm:$0xff]
      %v313 = vld [vmem:[%s304 + $0x40] sm:$0xff]
      %v314 = vld [vmem:[%s304 + $0x48] sm:$0xff]
      %v315 = vld [vmem:[%s304 + $0x50] sm:$0xff]
      %v316 = vld [vmem:[%s304 + $0x58] sm:$0xff]
      %v317 = vld [vmem:[%s304 + $0x60] sm:$0xff]
      %v318 = vld [vmem:[%s304 + $0x68] sm:$0xff]
      %v319 = vld [vmem:[%s304 + $0x70] sm:$0xff]
      %v320 = vld [vmem:[%s304 + $0x78] sm:$0xff]
      %s321 = scalar_lea.vmem [#allocation2], 24
      %322 = vst [vmem:[%s321 + $0x1] sm:$0xff] %v305
      %323 = vst [vmem:[%s321 + $0x9] sm:$0xff] %v306
      %324 = vst [vmem:[%s321 + $0x19] sm:$0xff] %v307
      %325 = vst [vmem:[%s321 + $0x21] sm:$0xff] %v308
      %326 = vst [vmem:[%s321 + $0x31] sm:$0xff] %v309
      %327 = vst [vmem:[%s321 + $0x39] sm:$0xff] %v310
      %328 = vst [vmem:[%s321 + $0x49] sm:$0xff] %v311
      %329 = vst [vmem:[%s321 + $0x51] sm:$0xff] %v312
      %330 = vst [vmem:[%s321 + $0x61] sm:$0xff] %v313
      %331 = vst [vmem:[%s321 + $0x69] sm:$0xff] %v314
      %332 = vst [vmem:[%s321 + $0x79] sm:$0xff] %v315
      %333 = vst [vmem:[%s321 + $0x81] sm:$0xff] %v316
      %334 = vst [vmem:[%s321 + $0x91] sm:$0xff] %v317
      %335 = vst [vmem:[%s321 + $0x99] sm:$0xff] %v318
      %336 = vst [vmem:[%s321 + $0xa9] sm:$0xff] %v319
      %337 = vst [vmem:[%s321 + $0xb1] sm:$0xff] %v320
      %p338 = scmp.gt.s32.totalorder %s22, 0
      // Predicated region
      $region37: #{double_conv_forward.3} parent=35 // pred_check
        %p339 = pneg %p338
      $region38: #{double_conv_forward.3} parent=35 // pred_check_branch
        %341 = sbr.rel (%p339) target = $region40
      $region39: #{double_conv_forward.3} parent=35 // pred_region
        %s342 = ssub.s32 %s272, 1
        %s343 = smul.u32 %s342, 16
        %s344 = scalar_lea.vmem %s251, %s343
        %v345 = vld [vmem:[%s344] sm:$0xff]
        %v346 = vld [vmem:[%s344 + $0x8] sm:$0xff]
        %347 = vst [vmem:[#allocation2 + $0x1] sm:$0xff] %v345
        %348 = vst [vmem:[#allocation2 + $0x9] sm:$0xff] %v346
      $region40: #{double_conv_forward.3} parent=35 // pred_fallthru
        _
      %p349 = scmp.lt.s32.totalorder %s22, 1
      // Predicated region
      $region41: #{double_conv_forward.3} parent=35 // pred_check
        %p350 = pneg %p349
      $region42: #{double_conv_forward.3} parent=35 // pred_check_branch
        %352 = sbr.rel (%p350) target = $region44
      $region43: #{double_conv_forward.3} parent=35 // pred_region
        %s353 = sadd.s32 %s272, 8
        %s354 = smul.u32 %s353, 16
        %s355 = scalar_lea.vmem %s251, %s354
        %v356 = vld [vmem:[%s355] sm:$0xff]
        %v357 = vld [vmem:[%s355 + $0x8] sm:$0xff]
        %s358 = scalar_lea.vmem [#allocation2], 216
        %359 = vst [vmem:[%s358 + $0x1] sm:$0xff] %v356
        %360 = vst [vmem:[%s358 + $0x9] sm:$0xff] %v357
      $region44: #{double_conv_forward.3} parent=35 // pred_fallthru
        _
      %v361 = vld [vmem:[#allocation2] sm:$0xff]
      %v362 = vld [vmem:[#allocation2 + $0x8] sm:$0xff]
      %v363 = vld [vmem:[#allocation2 + $0x18] sm:$0xff]
      %v364 = vld [vmem:[#allocation2 + $0x20] sm:$0xff]
      %v365 = vld [vmem:[#allocation2 + $0x30] sm:$0xff]
      %v366 = vld [vmem:[#allocation2 + $0x38] sm:$0xff]
      %v367 = vld [vmem:[#allocation2 + $0x48] sm:$0xff]
      %v368 = vld [vmem:[#allocation2 + $0x50] sm:$0xff]
      %v369 = vld [vmem:[#allocation2 + $0x60] sm:$0xff]
      %v370 = vld [vmem:[#allocation2 + $0x68] sm:$0xff]
      %v371 = vld [vmem:[#allocation2 + $0x78] sm:$0xff]
      %v372 = vld [vmem:[#allocation2 + $0x80] sm:$0xff]
      %v373 = vld [vmem:[#allocation2 + $0x90] sm:$0xff]
      %v374 = vld [vmem:[#allocation2 + $0x98] sm:$0xff]
      %v375 = vld [vmem:[#allocation2 + $0xa8] sm:$0xff]
      %v376 = vld [vmem:[#allocation2 + $0xb0] sm:$0xff]
      %v377 = vpack.c.bf16 %v362, %v361
      %v378 = vpack.c.bf16 %v364, %v363
      %v379 = vpack.c.bf16 %v366, %v365
      %v380 = vpack.c.bf16 %v368, %v367
      %v381 = vpack.c.bf16 %v370, %v369
      %v382 = vpack.c.bf16 %v372, %v371
      %v383 = vpack.c.bf16 %v374, %v373
      %v384 = vpack.c.bf16 %v376, %v375
      %385 = vst [vmem:[#allocation3] sm:$0xff] %v377
      %386 = vst [vmem:[#allocation3 + $0x48] sm:$0xff] %v378
      %387 = vst [vmem:[#allocation3 + $0x90] sm:$0xff] %v379
      %388 = vst [vmem:[#allocation3 + $0xd8] sm:$0xff] %v380
      %389 = vst [vmem:[#allocation3 + $0x120] sm:$0xff] %v381
      %390 = vst [vmem:[#allocation3 + $0x168] sm:$0xff] %v382
      %391 = vst [vmem:[#allocation3 + $0x1b0] sm:$0xff] %v383
      %392 = vst [vmem:[#allocation3 + $0x1f8] sm:$0xff] %v384
      %v393 = vld [vmem:[#allocation2 + $0x1] sm:$0xff]
      %v394 = vld [vmem:[#allocation2 + $0x9] sm:$0xff]
      %v395 = vld [vmem:[#allocation2 + $0x19] sm:$0xff]
      %v396 = vld [vmem:[#allocation2 + $0x21] sm:$0xff]
      %v397 = vld [vmem:[#allocation2 + $0x31] sm:$0xff]
      %v398 = vld [vmem:[#allocation2 + $0x39] sm:$0xff]
      %v399 = vld [vmem:[#allocation2 + $0x49] sm:$0xff]
      %v400 = vld [vmem:[#allocation2 + $0x51] sm:$0xff]
      %v401 = vld [vmem:[#allocation2 + $0x61] sm:$0xff]
      %v402 = vld [vmem:[#allocation2 + $0x69] sm:$0xff]
      %v403 = vld [vmem:[#allocation2 + $0x79] sm:$0xff]
      %v404 = vld [vmem:[#allocation2 + $0x81] sm:$0xff]
      %v405 = vld [vmem:[#allocation2 + $0x91] sm:$0xff]
      %v406 = vld [vmem:[#allocation2 + $0x99] sm:$0xff]
      %v407 = vld [vmem:[#allocation2 + $0xa9] sm:$0xff]
      %v408 = vld [vmem:[#allocation2 + $0xb1] sm:$0xff]
      %v409 = vpack.c.bf16 %v394, %v393
      %v410 = vpack.c.bf16 %v396, %v395
      %v411 = vpack.c.bf16 %v398, %v397
      %v412 = vpack.c.bf16 %v400, %v399
      %v413 = vpack.c.bf16 %v402, %v401
      %v414 = vpack.c.bf16 %v404, %v403
      %v415 = vpack.c.bf16 %v406, %v405
      %v416 = vpack.c.bf16 %v408, %v407
      %417 = vst [vmem:[#allocation3 + $0x8] sm:$0xff] %v409
      %418 = vst [vmem:[#allocation3 + $0x50] sm:$0xff] %v410
      %419 = vst [vmem:[#allocation3 + $0x98] sm:$0xff] %v411
      %420 = vst [vmem:[#allocation3 + $0xe0] sm:$0xff] %v412
      %421 = vst [vmem:[#allocation3 + $0x128] sm:$0xff] %v413
      %422 = vst [vmem:[#allocation3 + $0x170] sm:$0xff] %v414
      %423 = vst [vmem:[#allocation3 + $0x1b8] sm:$0xff] %v415
      %424 = vst [vmem:[#allocation3 + $0x200] sm:$0xff] %v416
      %v425 = vld [vmem:[#allocation2 + $0x2] sm:$0xff]
      %v426 = vld [vmem:[#allocation2 + $0xa] sm:$0xff]
      %v427 = vld [vmem:[#allocation2 + $0x1a] sm:$0xff]
      %v428 = vld [vmem:[#allocation2 + $0x22] sm:$0xff]
      %v429 = vld [vmem:[#allocation2 + $0x32] sm:$0xff]
      %v430 = vld [vmem:[#allocation2 + $0x3a] sm:$0xff]
      %v431 = vld [vmem:[#allocation2 + $0x4a] sm:$0xff]
      %v432 = vld [vmem:[#allocation2 + $0x52] sm:$0xff]
      %v433 = vld [vmem:[#allocation2 + $0x62] sm:$0xff]
      %v434 = vld [vmem:[#allocation2 + $0x6a] sm:$0xff]
      %v435 = vld [vmem:[#allocation2 + $0x7a] sm:$0xff]
      %v436 = vld [vmem:[#allocation2 + $0x82] sm:$0xff]
      %v437 = vld [vmem:[#allocation2 + $0x92] sm:$0xff]
      %v438 = vld [vmem:[#allocation2 + $0x9a] sm:$0xff]
      %v439 = vld [vmem:[#allocation2 + $0xaa] sm:$0xff]
      %v440 = vld [vmem:[#allocation2 + $0xb2] sm:$0xff]
      %v441 = vpack.c.bf16 %v426, %v425
      %v442 = vpack.c.bf16 %v428, %v427
      %v443 = vpack.c.bf16 %v430, %v429
      %v444 = vpack.c.bf16 %v432, %v431
      %v445 = vpack.c.bf16 %v434, %v433
      %v446 = vpack.c.bf16 %v436, %v435
      %v447 = vpack.c.bf16 %v438, %v437
      %v448 = vpack.c.bf16 %v440, %v439
      %449 = vst [vmem:[#allocation3 + $0x10] sm:$0xff] %v441
      %450 = vst [vmem:[#allocation3 + $0x58] sm:$0xff] %v442
      %451 = vst [vmem:[#allocation3 + $0xa0] sm:$0xff] %v443
      %452 = vst [vmem:[#allocation3 + $0xe8] sm:$0xff] %v444
      %453 = vst [vmem:[#allocation3 + $0x130] sm:$0xff] %v445
      %454 = vst [vmem:[#allocation3 + $0x178] sm:$0xff] %v446
      %455 = vst [vmem:[#allocation3 + $0x1c0] sm:$0xff] %v447
      %456 = vst [vmem:[#allocation3 + $0x208] sm:$0xff] %v448
      %v457 = vld [vmem:[%s321] sm:$0xff]
      %v458 = vld [vmem:[%s321 + $0x8] sm:$0xff]
      %v459 = vld [vmem:[%s321 + $0x18] sm:$0xff]
      %v460 = vld [vmem:[%s321 + $0x20] sm:$0xff]
      %v461 = vld [vmem:[%s321 + $0x30] sm:$0xff]
      %v462 = vld [vmem:[%s321 + $0x38] sm:$0xff]
      %v463 = vld [vmem:[%s321 + $0x48] sm:$0xff]
      %v464 = vld [vmem:[%s321 + $0x50] sm:$0xff]
      %v465 = vld [vmem:[%s321 + $0x60] sm:$0xff]
      %v466 = vld [vmem:[%s321 + $0x68] sm:$0xff]
      %v467 = vld [vmem:[%s321 + $0x78] sm:$0xff]
      %v468 = vld [vmem:[%s321 + $0x80] sm:$0xff]
      %v469 = vld [vmem:[%s321 + $0x90] sm:$0xff]
      %v470 = vld [vmem:[%s321 + $0x98] sm:$0xff]
      %v471 = vld [vmem:[%s321 + $0xa8] sm:$0xff]
      %v472 = vld [vmem:[%s321 + $0xb0] sm:$0xff]
      %v473 = vpack.c.bf16 %v458, %v457
      %v474 = vpack.c.bf16 %v460, %v459
      %v475 = vpack.c.bf16 %v462, %v461
      %v476 = vpack.c.bf16 %v464, %v463
      %v477 = vpack.c.bf16 %v466, %v465
      %v478 = vpack.c.bf16 %v468, %v467
      %v479 = vpack.c.bf16 %v470, %v469
      %v480 = vpack.c.bf16 %v472, %v471
      %481 = vst [vmem:[#allocation3 + $0x18] sm:$0xff] %v473
      %482 = vst [vmem:[#allocation3 + $0x60] sm:$0xff] %v474
      %483 = vst [vmem:[#allocation3 + $0xa8] sm:$0xff] %v475
      %484 = vst [vmem:[#allocation3 + $0xf0] sm:$0xff] %v476
      %485 = vst [vmem:[#allocation3 + $0x138] sm:$0xff] %v477
      %486 = vst [vmem:[#allocation3 + $0x180] sm:$0xff] %v478
      %487 = vst [vmem:[#allocation3 + $0x1c8] sm:$0xff] %v479
      %488 = vst [vmem:[#allocation3 + $0x210] sm:$0xff] %v480
      %v489 = vld [vmem:[%s321 + $0x1] sm:$0xff]
      %v490 = vld [vmem:[%s321 + $0x9] sm:$0xff]
      %v491 = vld [vmem:[%s321 + $0x19] sm:$0xff]
      %v492 = vld [vmem:[%s321 + $0x21] sm:$0xff]
      %v493 = vld [vmem:[%s321 + $0x31] sm:$0xff]
      %v494 = vld [vmem:[%s321 + $0x39] sm:$0xff]
      %v495 = vld [vmem:[%s321 + $0x49] sm:$0xff]
      %v496 = vld [vmem:[%s321 + $0x51] sm:$0xff]
      %v497 = vld [vmem:[%s321 + $0x61] sm:$0xff]
      %v498 = vld [vmem:[%s321 + $0x69] sm:$0xff]
      %v499 = vld [vmem:[%s321 + $0x79] sm:$0xff]
      %v500 = vld [vmem:[%s321 + $0x81] sm:$0xff]
      %v501 = vld [vmem:[%s321 + $0x91] sm:$0xff]
      %v502 = vld [vmem:[%s321 + $0x99] sm:$0xff]
      %v503 = vld [vmem:[%s321 + $0xa9] sm:$0xff]
      %v504 = vld [vmem:[%s321 + $0xb1] sm:$0xff]
      %v505 = vpack.c.bf16 %v490, %v489
      %v506 = vpack.c.bf16 %v492, %v491
      %v507 = vpack.c.bf16 %v494, %v493
      %v508 = vpack.c.bf16 %v496, %v495
      %v509 = vpack.c.bf16 %v498, %v497
      %v510 = vpack.c.bf16 %v500, %v499
      %v511 = vpack.c.bf16 %v502, %v501
      %v512 = vpack.c.bf16 %v504, %v503
      %513 = vst [vmem:[#allocation3 + $0x20] sm:$0xff] %v505
      %514 = vst [vmem:[#allocation3 + $0x68] sm:$0xff] %v506
      %515 = vst [vmem:[#allocation3 + $0xb0] sm:$0xff] %v507
      %516 = vst [vmem:[#allocation3 + $0xf8] sm:$0xff] %v508
      %517 = vst [vmem:[#allocation3 + $0x140] sm:$0xff] %v509
      %518 = vst [vmem:[#allocation3 + $0x188] sm:$0xff] %v510
      %519 = vst [vmem:[#allocation3 + $0x1d0] sm:$0xff] %v511
      %520 = vst [vmem:[#allocation3 + $0x218] sm:$0xff] %v512
      %v521 = vld [vmem:[%s321 + $0x2] sm:$0xff]
      %v522 = vld [vmem:[%s321 + $0xa] sm:$0xff]
      %v523 = vld [vmem:[%s321 + $0x1a] sm:$0xff]
      %v524 = vld [vmem:[%s321 + $0x22] sm:$0xff]
      %v525 = vld [vmem:[%s321 + $0x32] sm:$0xff]
      %v526 = vld [vmem:[%s321 + $0x3a] sm:$0xff]
      %v527 = vld [vmem:[%s321 + $0x4a] sm:$0xff]
      %v528 = vld [vmem:[%s321 + $0x52] sm:$0xff]
      %v529 = vld [vmem:[%s321 + $0x62] sm:$0xff]
      %v530 = vld [vmem:[%s321 + $0x6a] sm:$0xff]
      %v531 = vld [vmem:[%s321 + $0x7a] sm:$0xff]
      %v532 = vld [vmem:[%s321 + $0x82] sm:$0xff]
      %v533 = vld [vmem:[%s321 + $0x92] sm:$0xff]
      %v534 = vld [vmem:[%s321 + $0x9a] sm:$0xff]
      %v535 = vld [vmem:[%s321 + $0xaa] sm:$0xff]
      %v536 = vld [vmem:[%s321 + $0xb2] sm:$0xff]
      %v537 = vpack.c.bf16 %v522, %v521
      %v538 = vpack.c.bf16 %v524, %v523
      %v539 = vpack.c.bf16 %v526, %v525
      %v540 = vpack.c.bf16 %v528, %v527
      %v541 = vpack.c.bf16 %v530, %v529
      %v542 = vpack.c.bf16 %v532, %v531
      %v543 = vpack.c.bf16 %v534, %v533
      %v544 = vpack.c.bf16 %v536, %v535
      %545 = vst [vmem:[#allocation3 + $0x28] sm:$0xff] %v537
      %546 = vst [vmem:[#allocation3 + $0x70] sm:$0xff] %v538
      %547 = vst [vmem:[#allocation3 + $0xb8] sm:$0xff] %v539
      %548 = vst [vmem:[#allocation3 + $0x100] sm:$0xff] %v540
      %549 = vst [vmem:[#allocation3 + $0x148] sm:$0xff] %v541
      %550 = vst [vmem:[#allocation3 + $0x190] sm:$0xff] %v542
      %551 = vst [vmem:[#allocation3 + $0x1d8] sm:$0xff] %v543
      %552 = vst [vmem:[#allocation3 + $0x220] sm:$0xff] %v544
      %s553 = scalar_lea.vmem [#allocation2], 48
      %v554 = vld [vmem:[%s553] sm:$0xff]
      %v555 = vld [vmem:[%s553 + $0x8] sm:$0xff]
      %v556 = vld [vmem:[%s553 + $0x18] sm:$0xff]
      %v557 = vld [vmem:[%s553 + $0x20] sm:$0xff]
      %v558 = vld [vmem:[%s553 + $0x30] sm:$0xff]
      %v559 = vld [vmem:[%s553 + $0x38] sm:$0xff]
      %v560 = vld [vmem:[%s553 + $0x48] sm:$0xff]
      %v561 = vld [vmem:[%s553 + $0x50] sm:$0xff]
      %v562 = vld [vmem:[%s553 + $0x60] sm:$0xff]
      %v563 = vld [vmem:[%s553 + $0x68] sm:$0xff]
      %v564 = vld [vmem:[%s553 + $0x78] sm:$0xff]
      %v565 = vld [vmem:[%s553 + $0x80] sm:$0xff]
      %v566 = vld [vmem:[%s553 + $0x90] sm:$0xff]
      %v567 = vld [vmem:[%s553 + $0x98] sm:$0xff]
      %v568 = vld [vmem:[%s553 + $0xa8] sm:$0xff]
      %v569 = vld [vmem:[%s553 + $0xb0] sm:$0xff]
      %v570 = vpack.c.bf16 %v555, %v554
      %v571 = vpack.c.bf16 %v557, %v556
      %v572 = vpack.c.bf16 %v559, %v558
      %v573 = vpack.c.bf16 %v561, %v560
      %v574 = vpack.c.bf16 %v563, %v562
      %v575 = vpack.c.bf16 %v565, %v564
      %v576 = vpack.c.bf16 %v567, %v566
      %v577 = vpack.c.bf16 %v569, %v568
      %578 = vst [vmem:[#allocation3 + $0x30] sm:$0xff] %v570
      %579 = vst [vmem:[#allocation3 + $0x78] sm:$0xff] %v571
      %580 = vst [vmem:[#allocation3 + $0xc0] sm:$0xff] %v572
      %581 = vst [vmem:[#allocation3 + $0x108] sm:$0xff] %v573
      %582 = vst [vmem:[#allocation3 + $0x150] sm:$0xff] %v574
      %583 = vst [vmem:[#allocation3 + $0x198] sm:$0xff] %v575
      %584 = vst [vmem:[#allocation3 + $0x1e0] sm:$0xff] %v576
      %585 = vst [vmem:[#allocation3 + $0x228] sm:$0xff] %v577
      %v586 = vld [vmem:[%s553 + $0x1] sm:$0xff]
      %v587 = vld [vmem:[%s553 + $0x9] sm:$0xff]
      %v588 = vld [vmem:[%s553 + $0x19] sm:$0xff]
      %v589 = vld [vmem:[%s553 + $0x21] sm:$0xff]
      %v590 = vld [vmem:[%s553 + $0x31] sm:$0xff]
      %v591 = vld [vmem:[%s553 + $0x39] sm:$0xff]
      %v592 = vld [vmem:[%s553 + $0x49] sm:$0xff]
      %v593 = vld [vmem:[%s553 + $0x51] sm:$0xff]
      %v594 = vld [vmem:[%s553 + $0x61] sm:$0xff]
      %v595 = vld [vmem:[%s553 + $0x69] sm:$0xff]
      %v596 = vld [vmem:[%s553 + $0x79] sm:$0xff]
      %v597 = vld [vmem:[%s553 + $0x81] sm:$0xff]
      %v598 = vld [vmem:[%s553 + $0x91] sm:$0xff]
      %v599 = vld [vmem:[%s553 + $0x99] sm:$0xff]
      %v600 = vld [vmem:[%s553 + $0xa9] sm:$0xff]
      %v601 = vld [vmem:[%s553 + $0xb1] sm:$0xff]
      %v602 = vpack.c.bf16 %v587, %v586
      %v603 = vpack.c.bf16 %v589, %v588
      %v604 = vpack.c.bf16 %v591, %v590
      %v605 = vpack.c.bf16 %v593, %v592
      %v606 = vpack.c.bf16 %v595, %v594
      %v607 = vpack.c.bf16 %v597, %v596
      %v608 = vpack.c.bf16 %v599, %v598
      %v609 = vpack.c.bf16 %v601, %v600
      %610 = vst [vmem:[#allocation3 + $0x38] sm:$0xff] %v602
      %611 = vst [vmem:[#allocation3 + $0x80] sm:$0xff] %v603
      %612 = vst [vmem:[#allocation3 + $0xc8] sm:$0xff] %v604
      %613 = vst [vmem:[#allocation3 + $0x110] sm:$0xff] %v605
      %614 = vst [vmem:[#allocation3 + $0x158] sm:$0xff] %v606
      %615 = vst [vmem:[#allocation3 + $0x1a0] sm:$0xff] %v607
      %616 = vst [vmem:[#allocation3 + $0x1e8] sm:$0xff] %v608
      %617 = vst [vmem:[#allocation3 + $0x230] sm:$0xff] %v609
      %v618 = vld [vmem:[%s553 + $0x2] sm:$0xff]
      %v619 = vld [vmem:[%s553 + $0xa] sm:$0xff]
      %v620 = vld [vmem:[%s553 + $0x1a] sm:$0xff]
      %v621 = vld [vmem:[%s553 + $0x22] sm:$0xff]
      %v622 = vld [vmem:[%s553 + $0x32] sm:$0xff]
      %v623 = vld [vmem:[%s553 + $0x3a] sm:$0xff]
      %v624 = vld [vmem:[%s553 + $0x4a] sm:$0xff]
      %v625 = vld [vmem:[%s553 + $0x52] sm:$0xff]
      %v626 = vld [vmem:[%s553 + $0x62] sm:$0xff]
      %v627 = vld [vmem:[%s553 + $0x6a] sm:$0xff]
      %v628 = vld [vmem:[%s553 + $0x7a] sm:$0xff]
      %v629 = vld [vmem:[%s553 + $0x82] sm:$0xff]
      %v630 = vld [vmem:[%s553 + $0x92] sm:$0xff]
      %v631 = vld [vmem:[%s553 + $0x9a] sm:$0xff]
      %v632 = vld [vmem:[%s553 + $0xaa] sm:$0xff]
      %v633 = vld [vmem:[%s553 + $0xb2] sm:$0xff]
      %v634 = vpack.c.bf16 %v619, %v618
      %v635 = vpack.c.bf16 %v621, %v620
      %v636 = vpack.c.bf16 %v623, %v622
      %v637 = vpack.c.bf16 %v625, %v624
      %v638 = vpack.c.bf16 %v627, %v626
      %v639 = vpack.c.bf16 %v629, %v628
      %v640 = vpack.c.bf16 %v631, %v630
      %v641 = vpack.c.bf16 %v633, %v632
      %642 = vst [vmem:[#allocation3 + $0x40] sm:$0xff] %v634
      %643 = vst [vmem:[#allocation3 + $0x88] sm:$0xff] %v635
      %644 = vst [vmem:[#allocation3 + $0xd0] sm:$0xff] %v636
      %645 = vst [vmem:[#allocation3 + $0x118] sm:$0xff] %v637
      %646 = vst [vmem:[#allocation3 + $0x160] sm:$0xff] %v638
      %647 = vst [vmem:[#allocation3 + $0x1a8] sm:$0xff] %v639
      %648 = vst [vmem:[#allocation3 + $0x1f0] sm:$0xff] %v640
      %649 = vst [vmem:[#allocation3 + $0x238] sm:$0xff] %v641
      %v650 = vld [vmem:[#allocation3] sm:$0xff]
      %v651 = vld [vmem:[#allocation3 + $0x8] sm:$0xff]
      %v652 = vld [vmem:[#allocation3 + $0x10] sm:$0xff]
      %v653 = vld [vmem:[#allocation3 + $0x18] sm:$0xff]
      %v654 = vld [vmem:[#allocation3 + $0x20] sm:$0xff]
      %v655 = vld [vmem:[#allocation3 + $0x28] sm:$0xff]
      %v656 = vld [vmem:[#allocation3 + $0x30] sm:$0xff]
      %v657 = vld [vmem:[#allocation3 + $0x38] sm:$0xff]
      %v658 = vld [vmem:[#allocation3 + $0x40] sm:$0xff]
      %v659 = vld [vmem:[#allocation3 + $0x48] sm:$0xff]
      %v660 = vld [vmem:[#allocation3 + $0x50] sm:$0xff]
      %v661 = vld [vmem:[#allocation3 + $0x58] sm:$0xff]
      %v662 = vld [vmem:[#allocation3 + $0x60] sm:$0xff]
      %v663 = vld [vmem:[#allocation3 + $0x68] sm:$0xff]
      %v664 = vld [vmem:[#allocation3 + $0x70] sm:$0xff]
      %v665 = vld [vmem:[#allocation3 + $0x78] sm:$0xff]
      %v666 = vld [vmem:[#allocation3 + $0x80] sm:$0xff]
      %v667 = vld [vmem:[#allocation3 + $0x88] sm:$0xff]
      %v668 = vld [vmem:[#allocation3 + $0x90] sm:$0xff]
      %v669 = vld [vmem:[#allocation3 + $0x98] sm:$0xff]
      %v670 = vld [vmem:[#allocation3 + $0xa0] sm:$0xff]
      %v671 = vld [vmem:[#allocation3 + $0xa8] sm:$0xff]
      %v672 = vld [vmem:[#allocation3 + $0xb0] sm:$0xff]
      %v673 = vld [vmem:[#allocation3 + $0xb8] sm:$0xff]
      %v674 = vld [vmem:[#allocation3 + $0xc0] sm:$0xff]
      %v675 = vld [vmem:[#allocation3 + $0xc8] sm:$0xff]
      %v676 = vld [vmem:[#allocation3 + $0xd0] sm:$0xff]
      %v677 = vld [vmem:[#allocation3 + $0xd8] sm:$0xff]
      %v678 = vld [vmem:[#allocation3 + $0xe0] sm:$0xff]
      %v679 = vld [vmem:[#allocation3 + $0xe8] sm:$0xff]
      %v680 = vld [vmem:[#allocation3 + $0xf0] sm:$0xff]
      %v681 = vld [vmem:[#allocation3 + $0xf8] sm:$0xff]
      %v682 = vld [vmem:[#allocation3 + $0x100] sm:$0xff]
      %v683 = vld [vmem:[#allocation3 + $0x108] sm:$0xff]
      %v684 = vld [vmem:[#allocation3 + $0x110] sm:$0xff]
      %v685 = vld [vmem:[#allocation3 + $0x118] sm:$0xff]
      %v686 = vld [vmem:[#allocation3 + $0x120] sm:$0xff]
      %v687 = vld [vmem:[#allocation3 + $0x128] sm:$0xff]
      %v688 = vld [vmem:[#allocation3 + $0x130] sm:$0xff]
      %v689 = vld [vmem:[#allocation3 + $0x138] sm:$0xff]
      %v690 = vld [vmem:[#allocation3 + $0x140] sm:$0xff]
      %v691 = vld [vmem:[#allocation3 + $0x148] sm:$0xff]
      %v692 = vld [vmem:[#allocation3 + $0x150] sm:$0xff]
      %v693 = vld [vmem:[#allocation3 + $0x158] sm:$0xff]
      %v694 = vld [vmem:[#allocation3 + $0x160] sm:$0xff]
      %v695 = vld [vmem:[#allocation3 + $0x168] sm:$0xff]
      %v696 = vld [vmem:[#allocation3 + $0x170] sm:$0xff]
      %v697 = vld [vmem:[#allocation3 + $0x178] sm:$0xff]
      %v698 = vld [vmem:[#allocation3 + $0x180] sm:$0xff]
      %v699 = vld [vmem:[#allocation3 + $0x188] sm:$0xff]
      %v700 = vld [vmem:[#allocation3 + $0x190] sm:$0xff]
      %v701 = vld [vmem:[#allocation3 + $0x198] sm:$0xff]
      %v702 = vld [vmem:[#allocation3 + $0x1a0] sm:$0xff]
      %v703 = vld [vmem:[#allocation3 + $0x1a8] sm:$0xff]
      %v704 = vld [vmem:[#allocation3 + $0x1b0] sm:$0xff]
      %v705 = vld [vmem:[#allocation3 + $0x1b8] sm:$0xff]
      %v706 = vld [vmem:[#allocation3 + $0x1c0] sm:$0xff]
      %v707 = vld [vmem:[#allocation3 + $0x1c8] sm:$0xff]
      %v708 = vld [vmem:[#allocation3 + $0x1d0] sm:$0xff]
      %v709 = vld [vmem:[#allocation3 + $0x1d8] sm:$0xff]
      %v710 = vld [vmem:[#allocation3 + $0x1e0] sm:$0xff]
      %v711 = vld [vmem:[#allocation3 + $0x1e8] sm:$0xff]
      %v712 = vld [vmem:[#allocation3 + $0x1f0] sm:$0xff]
      %v713 = vld [vmem:[#allocation3 + $0x1f8] sm:$0xff]
      %v714 = vld [vmem:[#allocation3 + $0x200] sm:$0xff]
      %v715 = vld [vmem:[#allocation3 + $0x208] sm:$0xff]
      %v716 = vld [vmem:[#allocation3 + $0x210] sm:$0xff]
      %v717 = vld [vmem:[#allocation3 + $0x218] sm:$0xff]
      %v718 = vld [vmem:[#allocation3 + $0x220] sm:$0xff]
      %v719 = vld [vmem:[#allocation3 + $0x228] sm:$0xff]
      %v720 = vld [vmem:[#allocation3 + $0x230] sm:$0xff]
      %v721 = vld [vmem:[#allocation3 + $0x238] sm:$0xff]
      %v722 = vld [vmem:[%s1] sm:$0xf]
      %v723 = vld [vmem:[%s1 + $0x4] sm:$0xf]
      %v724 = vld [vmem:[%s1 + $0x8] sm:$0xf]
      %v725 = vld [vmem:[%s1 + $0xc] sm:$0xf]
      %v726 = vld [vmem:[%s1 + $0x10] sm:$0xf]
      %v727 = vld [vmem:[%s1 + $0x14] sm:$0xf]
      %v728 = vld [vmem:[%s1 + $0x18] sm:$0xf]
      %v729 = vld [vmem:[%s1 + $0x1c] sm:$0xf]
      %v730 = vld [vmem:[%s1 + $0x20] sm:$0xf]
      %v731 = vld [vmem:[%s1 + $0x24] sm:$0xf]
      %v732 = vld [vmem:[%s1 + $0x28] sm:$0xf]
      %v733 = vld [vmem:[%s1 + $0x2c] sm:$0xf]
      %v734 = vld [vmem:[%s1 + $0x30] sm:$0xf]
      %v735 = vld [vmem:[%s1 + $0x34] sm:$0xf]
      %v736 = vld [vmem:[%s1 + $0x38] sm:$0xf]
      %v737 = vld [vmem:[%s1 + $0x3c] sm:$0xf]
      %v738 = vld [vmem:[%s1 + $0x40] sm:$0xf]
      %v739 = vld [vmem:[%s1 + $0x44] sm:$0xf]
      %v740 = vld [vmem:[%s1 + $0x48] sm:$0xf]
      %v741 = vld [vmem:[%s1 + $0x4c] sm:$0xf]
      %v742 = vld [vmem:[%s1 + $0x50] sm:$0xf]
      %v743 = vld [vmem:[%s1 + $0x54] sm:$0xf]
      %v744 = vld [vmem:[%s1 + $0x58] sm:$0xf]
      %v745 = vld [vmem:[%s1 + $0x5c] sm:$0xf]
      %v746 = vld [vmem:[%s1 + $0x60] sm:$0xf]
      %v747 = vld [vmem:[%s1 + $0x64] sm:$0xf]
      %v748 = vld [vmem:[%s1 + $0x68] sm:$0xf]
      %v749 = vld [vmem:[%s1 + $0x6c] sm:$0xf]
      %v750 = vld [vmem:[%s1 + $0x70] sm:$0xf]
      %v751 = vld [vmem:[%s1 + $0x74] sm:$0xf]
      %v752 = vld [vmem:[%s1 + $0x78] sm:$0xf]
      %v753 = vld [vmem:[%s1 + $0x7c] sm:$0xf]
      %v754 = vld [vmem:[%s1 + $0x80] sm:$0xf]
      %v755 = vld [vmem:[%s1 + $0x84] sm:$0xf]
      %v756 = vld [vmem:[%s1 + $0x88] sm:$0xf]
      %v757 = vld [vmem:[%s1 + $0x8c] sm:$0xf]
      %v758 = vld [vmem:[%s1 + $0x90] sm:$0xf]
      %v759 = vld [vmem:[%s1 + $0x94] sm:$0xf]
      %v760 = vld [vmem:[%s1 + $0x98] sm:$0xf]
      %v761 = vld [vmem:[%s1 + $0x9c] sm:$0xf]
      %v762 = vld [vmem:[%s1 + $0xa0] sm:$0xf]
      %v763 = vld [vmem:[%s1 + $0xa4] sm:$0xf]
      %v764 = vld [vmem:[%s1 + $0xa8] sm:$0xf]
      %v765 = vld [vmem:[%s1 + $0xac] sm:$0xf]
      %v766 = vld [vmem:[%s1 + $0xb0] sm:$0xf]
      %v767 = vld [vmem:[%s1 + $0xb4] sm:$0xf]
      %v768 = vld [vmem:[%s1 + $0xb8] sm:$0xf]
      %v769 = vld [vmem:[%s1 + $0xbc] sm:$0xf]
      %v770 = vld [vmem:[%s1 + $0xc0] sm:$0xf]
      %v771 = vld [vmem:[%s1 + $0xc4] sm:$0xf]
      %v772 = vld [vmem:[%s1 + $0xc8] sm:$0xf]
      %v773 = vld [vmem:[%s1 + $0xcc] sm:$0xf]
      %v774 = vld [vmem:[%s1 + $0xd0] sm:$0xf]
      %v775 = vld [vmem:[%s1 + $0xd4] sm:$0xf]
      %v776 = vld [vmem:[%s1 + $0xd8] sm:$0xf]
      %v777 = vld [vmem:[%s1 + $0xdc] sm:$0xf]
      %v778 = vld [vmem:[%s1 + $0xe0] sm:$0xf]
      %v779 = vld [vmem:[%s1 + $0xe4] sm:$0xf]
      %v780 = vld [vmem:[%s1 + $0xe8] sm:$0xf]
      %v781 = vld [vmem:[%s1 + $0xec] sm:$0xf]
      %v782 = vld [vmem:[%s1 + $0xf0] sm:$0xf]
      %v783 = vld [vmem:[%s1 + $0xf4] sm:$0xf]
      %v784 = vld [vmem:[%s1 + $0xf8] sm:$0xf]
      %v785 = vld [vmem:[%s1 + $0xfc] sm:$0xf]
      %v786 = vld [vmem:[%s1 + $0x100] sm:$0xf]
      %v787 = vld [vmem:[%s1 + $0x104] sm:$0xf]
      %v788 = vld [vmem:[%s1 + $0x108] sm:$0xf]
      %v789 = vld [vmem:[%s1 + $0x10c] sm:$0xf]
      %v790 = vld [vmem:[%s1 + $0x110] sm:$0xf]
      %v791 = vld [vmem:[%s1 + $0x114] sm:$0xf]
      %v792 = vld [vmem:[%s1 + $0x118] sm:$0xf]
      %v793 = vld [vmem:[%s1 + $0x11c] sm:$0xf]
      %v794 = vld [vmem:[%s1 + $0x120] sm:$0xf]
      %v795 = vld [vmem:[%s1 + $0x124] sm:$0xf]
      %v796 = vld [vmem:[%s1 + $0x128] sm:$0xf]
      %v797 = vld [vmem:[%s1 + $0x12c] sm:$0xf]
      %v798 = vld [vmem:[%s1 + $0x130] sm:$0xf]
      %v799 = vld [vmem:[%s1 + $0x134] sm:$0xf]
      %v800 = vld [vmem:[%s1 + $0x138] sm:$0xf]
      %v801 = vld [vmem:[%s1 + $0x13c] sm:$0xf]
      %v802 = vld [vmem:[%s1 + $0x140] sm:$0xf]
      %v803 = vld [vmem:[%s1 + $0x144] sm:$0xf]
      %v804 = vld [vmem:[%s1 + $0x148] sm:$0xf]
      %v805 = vld [vmem:[%s1 + $0x14c] sm:$0xf]
      %v806 = vld [vmem:[%s1 + $0x150] sm:$0xf]
      %v807 = vld [vmem:[%s1 + $0x154] sm:$0xf]
      %v808 = vld [vmem:[%s1 + $0x158] sm:$0xf]
      %v809 = vld [vmem:[%s1 + $0x15c] sm:$0xf]
      %v810 = vld [vmem:[%s1 + $0x160] sm:$0xf]
      %v811 = vld [vmem:[%s1 + $0x164] sm:$0xf]
      %v812 = vld [vmem:[%s1 + $0x168] sm:$0xf]
      %v813 = vld [vmem:[%s1 + $0x16c] sm:$0xf]
      %v814 = vld [vmem:[%s1 + $0x170] sm:$0xf]
      %v815 = vld [vmem:[%s1 + $0x174] sm:$0xf]
      %v816 = vld [vmem:[%s1 + $0x178] sm:$0xf]
      %v817 = vld [vmem:[%s1 + $0x17c] sm:$0xf]
      %v818 = vld [vmem:[%s1 + $0x180] sm:$0xf]
      %v819 = vld [vmem:[%s1 + $0x184] sm:$0xf]
      %v820 = vld [vmem:[%s1 + $0x188] sm:$0xf]
      %v821 = vld [vmem:[%s1 + $0x18c] sm:$0xf]
      %v822 = vld [vmem:[%s1 + $0x190] sm:$0xf]
      %v823 = vld [vmem:[%s1 + $0x194] sm:$0xf]
      %v824 = vld [vmem:[%s1 + $0x198] sm:$0xf]
      %v825 = vld [vmem:[%s1 + $0x19c] sm:$0xf]
      %v826 = vld [vmem:[%s1 + $0x1a0] sm:$0xf]
      %v827 = vld [vmem:[%s1 + $0x1a4] sm:$0xf]
      %v828 = vld [vmem:[%s1 + $0x1a8] sm:$0xf]
      %v829 = vld [vmem:[%s1 + $0x1ac] sm:$0xf]
      %v830 = vld [vmem:[%s1 + $0x1b0] sm:$0xf]
      %v831 = vld [vmem:[%s1 + $0x1b4] sm:$0xf]
      %v832 = vld [vmem:[%s1 + $0x1b8] sm:$0xf]
      %v833 = vld [vmem:[%s1 + $0x1bc] sm:$0xf]
      %v834 = vld [vmem:[%s1 + $0x1c0] sm:$0xf]
      %v835 = vld [vmem:[%s1 + $0x1c4] sm:$0xf]
      %v836 = vld [vmem:[%s1 + $0x1c8] sm:$0xf]
      %v837 = vld [vmem:[%s1 + $0x1cc] sm:$0xf]
      %v838 = vld [vmem:[%s1 + $0x1d0] sm:$0xf]
      %v839 = vld [vmem:[%s1 + $0x1d4] sm:$0xf]
      %v840 = vld [vmem:[%s1 + $0x1d8] sm:$0xf]
      %v841 = vld [vmem:[%s1 + $0x1dc] sm:$0xf]
      %v842 = vld [vmem:[%s1 + $0x1e0] sm:$0xf]
      %v843 = vld [vmem:[%s1 + $0x1e4] sm:$0xf]
      %v844 = vld [vmem:[%s1 + $0x1e8] sm:$0xf]
      %v845 = vld [vmem:[%s1 + $0x1ec] sm:$0xf]
      %v846 = vld [vmem:[%s1 + $0x1f0] sm:$0xf]
      %v847 = vld [vmem:[%s1 + $0x1f4] sm:$0xf]
      %v848 = vld [vmem:[%s1 + $0x1f8] sm:$0xf]
      %v849 = vld [vmem:[%s1 + $0x1fc] sm:$0xf]
      %v850 = vld [vmem:[%s1 + $0x200] sm:$0xf]
      %v851 = vld [vmem:[%s1 + $0x204] sm:$0xf]
      %v852 = vld [vmem:[%s1 + $0x208] sm:$0xf]
      %v853 = vld [vmem:[%s1 + $0x20c] sm:$0xf]
      %v854 = vld [vmem:[%s1 + $0x210] sm:$0xf]
      %v855 = vld [vmem:[%s1 + $0x214] sm:$0xf]
      %v856 = vld [vmem:[%s1 + $0x218] sm:$0xf]
      %v857 = vld [vmem:[%s1 + $0x21c] sm:$0xf]
      %v858 = vld [vmem:[%s1 + $0x220] sm:$0xf]
      %v859 = vld [vmem:[%s1 + $0x224] sm:$0xf]
      %v860 = vld [vmem:[%s1 + $0x228] sm:$0xf]
      %v861 = vld [vmem:[%s1 + $0x22c] sm:$0xf]
      %v862 = vld [vmem:[%s1 + $0x230] sm:$0xf]
      %v863 = vld [vmem:[%s1 + $0x234] sm:$0xf]
      %v864 = vld [vmem:[%s1 + $0x238] sm:$0xf]
      %v865 = vld [vmem:[%s1 + $0x23c] sm:$0xf]
      %v1010 = vunpack.c.l.b16 %v722
      %v1011 = vunpack.c.l.b16 %v723
      %v1012 = vunpack.c.l.b16 %v724
      %v1013 = vunpack.c.l.b16 %v725
      %v1014 = vunpack.c.l.b16 %v726
      %v1015 = vunpack.c.l.b16 %v727
      %v1016 = vunpack.c.l.b16 %v728
      %v1017 = vunpack.c.l.b16 %v729
      %v1018 = vunpack.c.l.b16 %v730
      %v1019 = vunpack.c.l.b16 %v731
      %v1020 = vunpack.c.l.b16 %v732
      %v1021 = vunpack.c.l.b16 %v733
      %v1022 = vunpack.c.l.b16 %v734
      %v1023 = vunpack.c.l.b16 %v735
      %v1024 = vunpack.c.l.b16 %v736
      %v1025 = vunpack.c.l.b16 %v737
      %v1026 = vunpack.c.l.b16 %v738
      %v1027 = vunpack.c.l.b16 %v739
      %v1028 = vunpack.c.l.b16 %v740
      %v1029 = vunpack.c.l.b16 %v741
      %v1030 = vunpack.c.l.b16 %v742
      %v1031 = vunpack.c.l.b16 %v743
      %v1032 = vunpack.c.l.b16 %v744
      %v1033 = vunpack.c.l.b16 %v745
      %v1034 = vunpack.c.l.b16 %v746
      %v1035 = vunpack.c.l.b16 %v747
      %v1036 = vunpack.c.l.b16 %v748
      %v1037 = vunpack.c.l.b16 %v749
      %v1038 = vunpack.c.l.b16 %v750
      %v1039 = vunpack.c.l.b16 %v751
      %v1040 = vunpack.c.l.b16 %v752
      %v1041 = vunpack.c.l.b16 %v753
      %v1042 = vunpack.c.l.b16 %v754
      %v1043 = vunpack.c.l.b16 %v755
      %v1044 = vunpack.c.l.b16 %v756
      %v1045 = vunpack.c.l.b16 %v757
      %v1046 = vunpack.c.l.b16 %v758
      %v1047 = vunpack.c.l.b16 %v759
      %v1048 = vunpack.c.l.b16 %v760
      %v1049 = vunpack.c.l.b16 %v761
      %v1050 = vunpack.c.l.b16 %v762
      %v1051 = vunpack.c.l.b16 %v763
      %v1052 = vunpack.c.l.b16 %v764
      %v1053 = vunpack.c.l.b16 %v765
      %v1054 = vunpack.c.l.b16 %v766
      %v1055 = vunpack.c.l.b16 %v767
      %v1056 = vunpack.c.l.b16 %v768
      %v1057 = vunpack.c.l.b16 %v769
      %v1058 = vunpack.c.l.b16 %v770
      %v1059 = vunpack.c.l.b16 %v771
      %v1060 = vunpack.c.l.b16 %v772
      %v1061 = vunpack.c.l.b16 %v773
      %v1062 = vunpack.c.l.b16 %v774
      %v1063 = vunpack.c.l.b16 %v775
      %v1064 = vunpack.c.l.b16 %v776
      %v1065 = vunpack.c.l.b16 %v777
      %v1066 = vunpack.c.l.b16 %v778
      %v1067 = vunpack.c.l.b16 %v779
      %v1068 = vunpack.c.l.b16 %v780
      %v1069 = vunpack.c.l.b16 %v781
      %v1070 = vunpack.c.l.b16 %v782
      %v1071 = vunpack.c.l.b16 %v783
      %v1072 = vunpack.c.l.b16 %v784
      %v1073 = vunpack.c.l.b16 %v785
      %v1074 = vunpack.c.l.b16 %v786
      %v1075 = vunpack.c.l.b16 %v787
      %v1076 = vunpack.c.l.b16 %v788
      %v1077 = vunpack.c.l.b16 %v789
      %v1078 = vunpack.c.l.b16 %v790
      %v1079 = vunpack.c.l.b16 %v791
      %v1080 = vunpack.c.l.b16 %v792
      %v1081 = vunpack.c.l.b16 %v793
      %v1082 = vunpack.c.l.b16 %v794
      %v1083 = vunpack.c.l.b16 %v795
      %v1084 = vunpack.c.l.b16 %v796
      %v1085 = vunpack.c.l.b16 %v797
      %v1086 = vunpack.c.l.b16 %v798
      %v1087 = vunpack.c.l.b16 %v799
      %v1088 = vunpack.c.l.b16 %v800
      %v1089 = vunpack.c.l.b16 %v801
      %v1090 = vunpack.c.l.b16 %v802
      %v1091 = vunpack.c.l.b16 %v803
      %v1092 = vunpack.c.l.b16 %v804
      %v1093 = vunpack.c.l.b16 %v805
      %v1094 = vunpack.c.l.b16 %v806
      %v1095 = vunpack.c.l.b16 %v807
      %v1096 = vunpack.c.l.b16 %v808
      %v1097 = vunpack.c.l.b16 %v809
      %v1098 = vunpack.c.l.b16 %v810
      %v1099 = vunpack.c.l.b16 %v811
      %v1100 = vunpack.c.l.b16 %v812
      %v1101 = vunpack.c.l.b16 %v813
      %v1102 = vunpack.c.l.b16 %v814
      %v1103 = vunpack.c.l.b16 %v815
      %v1104 = vunpack.c.l.b16 %v816
      %v1105 = vunpack.c.l.b16 %v817
      %v1106 = vunpack.c.l.b16 %v818
      %v1107 = vunpack.c.l.b16 %v819
      %v1108 = vunpack.c.l.b16 %v820
      %v1109 = vunpack.c.l.b16 %v821
      %v1110 = vunpack.c.l.b16 %v822
      %v1111 = vunpack.c.l.b16 %v823
      %v1112 = vunpack.c.l.b16 %v824
      %v1113 = vunpack.c.l.b16 %v825
      %v1114 = vunpack.c.l.b16 %v826
      %v1115 = vunpack.c.l.b16 %v827
      %v1116 = vunpack.c.l.b16 %v828
      %v1117 = vunpack.c.l.b16 %v829
      %v1118 = vunpack.c.l.b16 %v830
      %v1119 = vunpack.c.l.b16 %v831
      %v1120 = vunpack.c.l.b16 %v832
      %v1121 = vunpack.c.l.b16 %v833
      %v1122 = vunpack.c.l.b16 %v834
      %v1123 = vunpack.c.l.b16 %v835
      %v1124 = vunpack.c.l.b16 %v836
      %v1125 = vunpack.c.l.b16 %v837
      %v1126 = vunpack.c.l.b16 %v838
      %v1127 = vunpack.c.l.b16 %v839
      %v1128 = vunpack.c.l.b16 %v840
      %v1129 = vunpack.c.l.b16 %v841
      %v1130 = vunpack.c.l.b16 %v842
      %v1131 = vunpack.c.l.b16 %v843
      %v1132 = vunpack.c.l.b16 %v844
      %v1133 = vunpack.c.l.b16 %v845
      %v1134 = vunpack.c.l.b16 %v846
      %v1135 = vunpack.c.l.b16 %v847
      %v1136 = vunpack.c.l.b16 %v848
      %v1137 = vunpack.c.l.b16 %v849
      %v1138 = vunpack.c.l.b16 %v850
      %v1139 = vunpack.c.l.b16 %v851
      %v1140 = vunpack.c.l.b16 %v852
      %v1141 = vunpack.c.l.b16 %v853
      %v1142 = vunpack.c.l.b16 %v854
      %v1143 = vunpack.c.l.b16 %v855
      %v1144 = vunpack.c.l.b16 %v856
      %v1145 = vunpack.c.l.b16 %v857
      %v1146 = vunpack.c.l.b16 %v858
      %v1147 = vunpack.c.l.b16 %v859
      %v1148 = vunpack.c.l.b16 %v860
      %v1149 = vunpack.c.l.b16 %v861
      %v1150 = vunpack.c.l.b16 %v862
      %v1151 = vunpack.c.l.b16 %v863
      %v1152 = vunpack.c.l.b16 %v864
      %v1153 = vunpack.c.l.b16 %v865
      %v1154 = vpack.c.b16 %v1011, %v1010
      %v1155 = vpack.c.b16 %v1013, %v1012
      %v1156 = vpack.c.b16 %v1015, %v1014
      %v1157 = vpack.c.b16 %v1017, %v1016
      %v1158 = vpack.c.b16 %v1019, %v1018
      %v1159 = vpack.c.b16 %v1021, %v1020
      %v1160 = vpack.c.b16 %v1023, %v1022
      %v1161 = vpack.c.b16 %v1025, %v1024
      %v1162 = vpack.c.b16 %v1027, %v1026
      %v1163 = vpack.c.b16 %v1029, %v1028
      %v1164 = vpack.c.b16 %v1031, %v1030
      %v1165 = vpack.c.b16 %v1033, %v1032
      %v1166 = vpack.c.b16 %v1035, %v1034
      %v1167 = vpack.c.b16 %v1037, %v1036
      %v1168 = vpack.c.b16 %v1039, %v1038
      %v1169 = vpack.c.b16 %v1041, %v1040
      %v1170 = vpack.c.b16 %v1043, %v1042
      %v1171 = vpack.c.b16 %v1045, %v1044
      %v1172 = vpack.c.b16 %v1047, %v1046
      %v1173 = vpack.c.b16 %v1049, %v1048
      %v1174 = vpack.c.b16 %v1051, %v1050
      %v1175 = vpack.c.b16 %v1053, %v1052
      %v1176 = vpack.c.b16 %v1055, %v1054
      %v1177 = vpack.c.b16 %v1057, %v1056
      %v1178 = vpack.c.b16 %v1059, %v1058
      %v1179 = vpack.c.b16 %v1061, %v1060
      %v1180 = vpack.c.b16 %v1063, %v1062
      %v1181 = vpack.c.b16 %v1065, %v1064
      %v1182 = vpack.c.b16 %v1067, %v1066
      %v1183 = vpack.c.b16 %v1069, %v1068
      %v1184 = vpack.c.b16 %v1071, %v1070
      %v1185 = vpack.c.b16 %v1073, %v1072
      %v1186 = vpack.c.b16 %v1075, %v1074
      %v1187 = vpack.c.b16 %v1077, %v1076
      %v1188 = vpack.c.b16 %v1079, %v1078
      %v1189 = vpack.c.b16 %v1081, %v1080
      %v1190 = vpack.c.b16 %v1083, %v1082
      %v1191 = vpack.c.b16 %v1085, %v1084
      %v1192 = vpack.c.b16 %v1087, %v1086
      %v1193 = vpack.c.b16 %v1089, %v1088
      %v1194 = vpack.c.b16 %v1091, %v1090
      %v1195 = vpack.c.b16 %v1093, %v1092
      %v1196 = vpack.c.b16 %v1095, %v1094
      %v1197 = vpack.c.b16 %v1097, %v1096
      %v1198 = vpack.c.b16 %v1099, %v1098
      %v1199 = vpack.c.b16 %v1101, %v1100
      %v1200 = vpack.c.b16 %v1103, %v1102
      %v1201 = vpack.c.b16 %v1105, %v1104
      %v1202 = vpack.c.b16 %v1107, %v1106
      %v1203 = vpack.c.b16 %v1109, %v1108
      %v1204 = vpack.c.b16 %v1111, %v1110
      %v1205 = vpack.c.b16 %v1113, %v1112
      %v1206 = vpack.c.b16 %v1115, %v1114
      %v1207 = vpack.c.b16 %v1117, %v1116
      %v1208 = vpack.c.b16 %v1119, %v1118
      %v1209 = vpack.c.b16 %v1121, %v1120
      %v1210 = vpack.c.b16 %v1123, %v1122
      %v1211 = vpack.c.b16 %v1125, %v1124
      %v1212 = vpack.c.b16 %v1127, %v1126
      %v1213 = vpack.c.b16 %v1129, %v1128
      %v1214 = vpack.c.b16 %v1131, %v1130
      %v1215 = vpack.c.b16 %v1133, %v1132
      %v1216 = vpack.c.b16 %v1135, %v1134
      %v1217 = vpack.c.b16 %v1137, %v1136
      %v1218 = vpack.c.b16 %v1139, %v1138
      %v1219 = vpack.c.b16 %v1141, %v1140
      %v1220 = vpack.c.b16 %v1143, %v1142
      %v1221 = vpack.c.b16 %v1145, %v1144
      %v1222 = vpack.c.b16 %v1147, %v1146
      %v1223 = vpack.c.b16 %v1149, %v1148
      %v1224 = vpack.c.b16 %v1151, %v1150
      %v1225 = vpack.c.b16 %v1153, %v1152
      %1298 = vmatprep.subr.bf16.mxu0 0
      %1299 = vmatpush1.bf16.msra.mxu0 %v1154
      %1300 = vmatprep.subr.bf16.mxu0 0
      %1301 = vmatpush1.bf16.msra.mxu0 %v1155
      %1302 = vmatprep.subr.bf16.mxu0 0
      %1303 = vmatpush1.bf16.msra.mxu0 %v1156
      %1304 = vmatprep.subr.bf16.mxu0 0
      %1305 = vmatpush1.bf16.msra.mxu0 %v1157
      %1306 = vmatprep.subr.bf16.mxu0 0
      %1307 = vmatpush1.bf16.msra.mxu0 %v1158
      %1308 = vmatprep.subr.bf16.mxu0 0
      %1309 = vmatpush1.bf16.msra.mxu0 %v1159
      %1310 = vmatprep.subr.bf16.mxu0 0
      %1311 = vmatpush1.bf16.msra.mxu0 %v1160
      %1312 = vmatprep.subr.bf16.mxu0 0
      %1313 = vmatpush1.bf16.msra.mxu0 %v1161
      %1314 = vmatprep.subr.bf16.mxu0 0
      %1315 = vmatpush1.bf16.msra.mxu0 %v1162
      %1316 = vmatprep.subr.bf16.mxu0 0
      %1317 = vmatpush1.bf16.msra.mxu0 %v1163
      %1318 = vmatprep.subr.bf16.mxu0 0
      %1319 = vmatpush1.bf16.msra.mxu0 %v1164
      %1320 = vmatprep.subr.bf16.mxu0 0
      %1321 = vmatpush1.bf16.msra.mxu0 %v1165
      %1322 = vmatprep.subr.bf16.mxu0 0
      %1323 = vmatpush1.bf16.msra.mxu0 %v1166
      %1324 = vmatprep.subr.bf16.mxu0 0
      %1325 = vmatpush1.bf16.msra.mxu0 %v1167
      %1326 = vmatprep.subr.bf16.mxu0 0
      %1327 = vmatpush1.bf16.msra.mxu0 %v1168
      %1328 = vmatprep.subr.bf16.mxu0 0
      %1329 = vmatpush1.bf16.msra.mxu0 %v1169
      %1330 = vmatprep.mubr.bf16.mxu0 %v651
      %1331 = vmatmul.mubr.bf16.gmra.mrb[0].mxu0 %v650
      %v1332 = vpop.f32.mrb[0].mxu0
      %v1333 = vadd.f32 0.0, %v1332
      %v1334 = vpop.f32.mrb[0].mxu0
      %v1335 = vpop.f32.mrb[0].mxu0
      %v1336 = vadd.f32 0.0, %v1335
      %v1337 = vpop.f32.mrb[0].mxu0
      %1338 = vmatprep.mubr.bf16.mxu0 %v660
      %1339 = vmatmul.mubr.bf16.gmra.mrb[0].mxu0 %v659
      %v1340 = vpop.f32.mrb[0].mxu0
      %v1341 = vadd.f32 0.0, %v1340
      %v1342 = vpop.f32.mrb[0].mxu0
      %v1343 = vpop.f32.mrb[0].mxu0
      %v1344 = vadd.f32 0.0, %v1343
      %v1345 = vpop.f32.mrb[0].mxu0
      %1346 = vmatprep.mubr.bf16.mxu0 %v669
      %1347 = vmatmul.mubr.bf16.gmra.mrb[0].mxu0 %v668
      %v1348 = vpop.f32.mrb[0].mxu0
      %v1349 = vadd.f32 0.0, %v1348
      %v1350 = vpop.f32.mrb[0].mxu0
      %v1351 = vpop.f32.mrb[0].mxu0
      %v1352 = vadd.f32 0.0, %v1351
      %v1353 = vpop.f32.mrb[0].mxu0
      %1354 = vmatprep.mubr.bf16.mxu0 %v678
      %1355 = vmatmul.mubr.bf16.gmra.mrb[0].mxu0 %v677
      %v1356 = vpop.f32.mrb[0].mxu0
      %v1357 = vadd.f32 0.0, %v1356
      %v1358 = vpop.f32.mrb[0].mxu0
      %v1359 = vpop.f32.mrb[0].mxu0
      %v1360 = vadd.f32 0.0, %v1359
      %v1361 = vpop.f32.mrb[0].mxu0
      %1362 = vmatprep.mubr.bf16.mxu0 %v687
      %1363 = vmatmul.mubr.bf16.gmra.mrb[0].mxu0 %v686
      %v1364 = vpop.f32.mrb[0].mxu0
      %v1365 = vadd.f32 0.0, %v1364
      %v1366 = vpop.f32.mrb[0].mxu0
      %v1367 = vpop.f32.mrb[0].mxu0
      %v1368 = vadd.f32 0.0, %v1367
      %v1369 = vpop.f32.mrb[0].mxu0
      %1370 = vmatprep.mubr.bf16.mxu0 %v696
      %1371 = vmatmul.mubr.bf16.gmra.mrb[0].mxu0 %v695
      %v1372 = vpop.f32.mrb[0].mxu0
      %v1373 = vadd.f32 0.0, %v1372
      %v1374 = vpop.f32.mrb[0].mxu0
      %v1375 = vpop.f32.mrb[0].mxu0
      %v1376 = vadd.f32 0.0, %v1375
      %v1377 = vpop.f32.mrb[0].mxu0
      %1378 = vmatprep.mubr.bf16.mxu0 %v705
      %1379 = vmatmul.mubr.bf16.gmra.mrb[0].mxu0 %v704
      %v1380 = vpop.f32.mrb[0].mxu0
      %v1381 = vadd.f32 0.0, %v1380
      %v1382 = vpop.f32.mrb[0].mxu0
      %v1383 = vpop.f32.mrb[0].mxu0
      %v1384 = vadd.f32 0.0, %v1383
      %v1385 = vpop.f32.mrb[0].mxu0
      %1386 = vmatprep.mubr.bf16.mxu0 %v714
      %1387 = vmatmul.mubr.bf16.gmra.mrb[0].mxu0 %v713
      %v1388 = vpop.f32.mrb[0].mxu0
      %v1389 = vadd.f32 0.0, %v1388
      %v1390 = vpop.f32.mrb[0].mxu0
      %v1391 = vpop.f32.mrb[0].mxu0
      %v1392 = vadd.f32 0.0, %v1391
      %v1393 = vpop.f32.mrb[0].mxu0
      %1394 = vdwg.mxu0
      %1395 = vmatprep.subr.bf16.mxu0 0
      %1396 = vmatpush1.bf16.msra.mxu0 %v1170
      %1397 = vmatprep.subr.bf16.mxu0 0
      %1398 = vmatpush1.bf16.msra.mxu0 %v1171
      %1399 = vmatprep.subr.bf16.mxu0 0
      %1400 = vmatpush1.bf16.msra.mxu0 %v1172
      %1401 = vmatprep.subr.bf16.mxu0 0
      %1402 = vmatpush1.bf16.msra.mxu0 %v1173
      %1403 = vmatprep.subr.bf16.mxu0 0
      %1404 = vmatpush1.bf16.msra.mxu0 %v1174
      %1405 = vmatprep.subr.bf16.mxu0 0
      %1406 = vmatpush1.bf16.msra.mxu0 %v1175
      %1407 = vmatprep.subr.bf16.mxu0 0
      %1408 = vmatpush1.bf16.msra.mxu0 %v1176
      %1409 = vmatprep.subr.bf16.mxu0 0
      %1410 = vmatpush1.bf16.msra.mxu0 %v1177
      %1411 = vmatprep.subr.bf16.mxu0 0
      %1412 = vmatpush1.bf16.msra.mxu0 %v1178
      %1413 = vmatprep.subr.bf16.mxu0 0
      %1414 = vmatpush1.bf16.msra.mxu0 %v1179
      %1415 = vmatprep.subr.bf16.mxu0 0
      %1416 = vmatpush1.bf16.msra.mxu0 %v1180
      %1417 = vmatprep.subr.bf16.mxu0 0
      %1418 = vmatpush1.bf16.msra.mxu0 %v1181
      %1419 = vmatprep.subr.bf16.mxu0 0
      %1420 = vmatpush1.bf16.msra.mxu0 %v1182
      %1421 = vmatprep.subr.bf16.mxu0 0
      %1422 = vmatpush1.bf16.msra.mxu0 %v1183
      %1423 = vmatprep.subr.bf16.mxu0 0
      %1424 = vmatpush1.bf16.msra.mxu0 %v1184
      %1425 = vmatprep.subr.bf16.mxu0 0
      %1426 = vmatpush1.bf16.msra.mxu0 %v1185
      %1427 = vmatprep.mubr.bf16.mxu0 %v653
      %1428 = vmatmul.mubr.bf16.gmra.mrb[0].mxu0 %v652
      %v1429 = vpop.f32.mrb[0].mxu0
      %v1430 = vadd.f32 %v1333, %v1429
      %v1431 = vpop.f32.mrb[0].mxu0
      %v1432 = vpop.f32.mrb[0].mxu0
      %v1433 = vadd.f32 %v1336, %v1432
      %v1434 = vpop.f32.mrb[0].mxu0
      %1435 = vmatprep.mubr.bf16.mxu0 %v662
      %1436 = vmatmul.mubr.bf16.gmra.mrb[0].mxu0 %v661
      %v1437 = vpop.f32.mrb[0].mxu0
      %v1438 = vadd.f32 %v1341, %v1437
      %v1439 = vpop.f32.mrb[0].mxu0
      %v1440 = vpop.f32.mrb[0].mxu0
      %v1441 = vadd.f32 %v1344, %v1440
      %v1442 = vpop.f32.mrb[0].mxu0
      %1443 = vmatprep.mubr.bf16.mxu0 %v671
      %1444 = vmatmul.mubr.bf16.gmra.mrb[0].mxu0 %v670
      %v1445 = vpop.f32.mrb[0].mxu0
      %v1446 = vadd.f32 %v1349, %v1445
      %v1447 = vpop.f32.mrb[0].mxu0
      %v1448 = vpop.f32.mrb[0].mxu0
      %v1449 = vadd.f32 %v1352, %v1448
      %v1450 = vpop.f32.mrb[0].mxu0
      %1451 = vmatprep.mubr.bf16.mxu0 %v680
      %1452 = vmatmul.mubr.bf16.gmra.mrb[0].mxu0 %v679
      %v1453 = vpop.f32.mrb[0].mxu0
      %v1454 = vadd.f32 %v1357, %v1453
      %v1455 = vpop.f32.mrb[0].mxu0
      %v1456 = vpop.f32.mrb[0].mxu0
      %v1457 = vadd.f32 %v1360, %v1456
      %v1458 = vpop.f32.mrb[0].mxu0
      %1459 = vmatprep.mubr.bf16.mxu0 %v689
      %1460 = vmatmul.mubr.bf16.gmra.mrb[0].mxu0 %v688
      %v1461 = vpop.f32.mrb[0].mxu0
      %v1462 = vadd.f32 %v1365, %v1461
      %v1463 = vpop.f32.mrb[0].mxu0
      %v1464 = vpop.f32.mrb[0].mxu0
      %v1465 = vadd.f32 %v1368, %v1464
      %v1466 = vpop.f32.mrb[0].mxu0
      %1467 = vmatprep.mubr.bf16.mxu0 %v698
      %1468 = vmatmul.mubr.bf16.gmra.mrb[0].mxu0 %v697
      %v1469 = vpop.f32.mrb[0].mxu0
      %v1470 = vadd.f32 %v1373, %v1469
      %v1471 = vpop.f32.mrb[0].mxu0
      %v1472 = vpop.f32.mrb[0].mxu0
      %v1473 = vadd.f32 %v1376, %v1472
      %v1474 = vpop.f32.mrb[0].mxu0
      %1475 = vmatprep.mubr.bf16.mxu0 %v707
      %1476 = vmatmul.mubr.bf16.gmra.mrb[0].mxu0 %v706
      %v1477 = vpop.f32.mrb[0].mxu0
      %v1478 = vadd.f32 %v1381, %v1477
      %v1479 = vpop.f32.mrb[0].mxu0
      %v1480 = vpop.f32.mrb[0].mxu0
      %v1481 = vadd.f32 %v1384, %v1480
      %v1482 = vpop.f32.mrb[0].mxu0
      %1483 = vmatprep.mubr.bf16.mxu0 %v716
      %1484 = vmatmul.mubr.bf16.gmra.mrb[0].mxu0 %v715
      %v1485 = vpop.f32.mrb[0].mxu0
      %v1486 = vadd.f32 %v1389, %v1485
      %v1487 = vpop.f32.mrb[0].mxu0
      %v1488 = vpop.f32.mrb[0].mxu0
      %v1489 = vadd.f32 %v1392, %v1488
      %v1490 = vpop.f32.mrb[0].mxu0
      %1491 = vdwg.mxu0
      %1492 = vmatprep.subr.bf16.mxu0 0
      %1493 = vmatpush1.bf16.msra.mxu0 %v1186
      %1494 = vmatprep.subr.bf16.mxu0 0
      %1495 = vmatpush1.bf16.msra.mxu0 %v1187
      %1496 = vmatprep.subr.bf16.mxu0 0
      %1497 = vmatpush1.bf16.msra.mxu0 %v1188
      %1498 = vmatprep.subr.bf16.mxu0 0
      %1499 = vmatpush1.bf16.msra.mxu0 %v1189
      %1500 = vmatprep.subr.bf16.mxu0 0
      %1501 = vmatpush1.bf16.msra.mxu0 %v1190
      %1502 = vmatprep.subr.bf16.mxu0 0
      %1503 = vmatpush1.bf16.msra.mxu0 %v1191
      %1504 = vmatprep.subr.bf16.mxu0 0
      %1505 = vmatpush1.bf16.msra.mxu0 %v1192
      %1506 = vmatprep.subr.bf16.mxu0 0
      %1507 = vmatpush1.bf16.msra.mxu0 %v1193
      %1508 = vmatprep.subr.bf16.mxu0 0
      %1509 = vmatpush1.bf16.msra.mxu0 %v1194
      %1510 = vmatprep.subr.bf16.mxu0 0
      %1511 = vmatpush1.bf16.msra.mxu0 %v1195
      %1512 = vmatprep.subr.bf16.mxu0 0
      %1513 = vmatpush1.bf16.msra.mxu0 %v1196
      %1514 = vmatprep.subr.bf16.mxu0 0
      %1515 = vmatpush1.bf16.msra.mxu0 %v1197
      %1516 = vmatprep.subr.bf16.mxu0 0
      %1517 = vmatpush1.bf16.msra.mxu0 %v1198
      %1518 = vmatprep.subr.bf16.mxu0 0
      %1519 = vmatpush1.bf16.msra.mxu0 %v1199
      %1520 = vmatprep.subr.bf16.mxu0 0
      %1521 = vmatpush1.bf16.msra.mxu0 %v1200
      %1522 = vmatprep.subr.bf16.mxu0 0
      %1523 = vmatpush1.bf16.msra.mxu0 %v1201
      %1524 = vmatprep.mubr.bf16.mxu0 %v655
      %1525 = vmatmul.mubr.bf16.gmra.mrb[0].mxu0 %v654
      %v1526 = vpop.f32.mrb[0].mxu0
      %v1527 = vadd.f32 %v1430, %v1526
      %v1528 = vpop.f32.mrb[0].mxu0
      %v1529 = vpop.f32.mrb[0].mxu0
      %v1530 = vadd.f32 %v1433, %v1529
      %v1531 = vpop.f32.mrb[0].mxu0
      %1532 = vmatprep.mubr.bf16.mxu0 %v664
      %1533 = vmatmul.mubr.bf16.gmra.mrb[0].mxu0 %v663
      %v1534 = vpop.f32.mrb[0].mxu0
      %v1535 = vadd.f32 %v1438, %v1534
      %v1536 = vpop.f32.mrb[0].mxu0
      %v1537 = vpop.f32.mrb[0].mxu0
      %v1538 = vadd.f32 %v1441, %v1537
      %v1539 = vpop.f32.mrb[0].mxu0
      %1540 = vmatprep.mubr.bf16.mxu0 %v673
      %1541 = vmatmul.mubr.bf16.gmra.mrb[0].mxu0 %v672
      %v1542 = vpop.f32.mrb[0].mxu0
      %v1543 = vadd.f32 %v1446, %v1542
      %v1544 = vpop.f32.mrb[0].mxu0
      %v1545 = vpop.f32.mrb[0].mxu0
      %v1546 = vadd.f32 %v1449, %v1545
      %v1547 = vpop.f32.mrb[0].mxu0
      %1548 = vmatprep.mubr.bf16.mxu0 %v682
      %1549 = vmatmul.mubr.bf16.gmra.mrb[0].mxu0 %v681
      %v1550 = vpop.f32.mrb[0].mxu0
      %v1551 = vadd.f32 %v1454, %v1550
      %v1552 = vpop.f32.mrb[0].mxu0
      %v1553 = vpop.f32.mrb[0].mxu0
      %v1554 = vadd.f32 %v1457, %v1553
      %v1555 = vpop.f32.mrb[0].mxu0
      %1556 = vmatprep.mubr.bf16.mxu0 %v691
      %1557 = vmatmul.mubr.bf16.gmra.mrb[0].mxu0 %v690
      %v1558 = vpop.f32.mrb[0].mxu0
      %v1559 = vadd.f32 %v1462, %v1558
      %v1560 = vpop.f32.mrb[0].mxu0
      %v1561 = vpop.f32.mrb[0].mxu0
      %v1562 = vadd.f32 %v1465, %v1561
      %v1563 = vpop.f32.mrb[0].mxu0
      %1564 = vmatprep.mubr.bf16.mxu0 %v700
      %1565 = vmatmul.mubr.bf16.gmra.mrb[0].mxu0 %v699
      %v1566 = vpop.f32.mrb[0].mxu0
      %v1567 = vadd.f32 %v1470, %v1566
      %v1568 = vpop.f32.mrb[0].mxu0
      %v1569 = vpop.f32.mrb[0].mxu0
      %v1570 = vadd.f32 %v1473, %v1569
      %v1571 = vpop.f32.mrb[0].mxu0
      %1572 = vmatprep.mubr.bf16.mxu0 %v709
      %1573 = vmatmul.mubr.bf16.gmra.mrb[0].mxu0 %v708
      %v1574 = vpop.f32.mrb[0].mxu0
      %v1575 = vadd.f32 %v1478, %v1574
      %v1576 = vpop.f32.mrb[0].mxu0
      %v1577 = vpop.f32.mrb[0].mxu0
      %v1578 = vadd.f32 %v1481, %v1577
      %v1579 = vpop.f32.mrb[0].mxu0
      %1580 = vmatprep.mubr.bf16.mxu0 %v718
      %1581 = vmatmul.mubr.bf16.gmra.mrb[0].mxu0 %v717
      %v1582 = vpop.f32.mrb[0].mxu0
      %v1583 = vadd.f32 %v1486, %v1582
      %v1584 = vpop.f32.mrb[0].mxu0
      %v1585 = vpop.f32.mrb[0].mxu0
      %v1586 = vadd.f32 %v1489, %v1585
      %v1587 = vpop.f32.mrb[0].mxu0
      %1588 = vdwg.mxu0
      %1589 = vmatprep.subr.bf16.mxu0 0
      %1590 = vmatpush1.bf16.msra.mxu0 %v1202
      %1591 = vmatprep.subr.bf16.mxu0 0
      %1592 = vmatpush1.bf16.msra.mxu0 %v1203
      %1593 = vmatprep.subr.bf16.mxu0 0
      %1594 = vmatpush1.bf16.msra.mxu0 %v1204
      %1595 = vmatprep.subr.bf16.mxu0 0
      %1596 = vmatpush1.bf16.msra.mxu0 %v1205
      %1597 = vmatprep.subr.bf16.mxu0 0
      %1598 = vmatpush1.bf16.msra.mxu0 %v1206
      %1599 = vmatprep.subr.bf16.mxu0 0
      %1600 = vmatpush1.bf16.msra.mxu0 %v1207
      %1601 = vmatprep.subr.bf16.mxu0 0
      %1602 = vmatpush1.bf16.msra.mxu0 %v1208
      %1603 = vmatprep.subr.bf16.mxu0 0
      %1604 = vmatpush1.bf16.msra.mxu0 %v1209
      %1605 = vmatprep.subr.bf16.mxu0 0
      %1606 = vmatpush1.bf16.msra.mxu0 %v1210
      %1607 = vmatprep.subr.bf16.mxu0 0
      %1608 = vmatpush1.bf16.msra.mxu0 %v1211
      %1609 = vmatprep.subr.bf16.mxu0 0
      %1610 = vmatpush1.bf16.msra.mxu0 %v1212
      %1611 = vmatprep.subr.bf16.mxu0 0
      %1612 = vmatpush1.bf16.msra.mxu0 %v1213
      %1613 = vmatprep.subr.bf16.mxu0 0
      %1614 = vmatpush1.bf16.msra.mxu0 %v1214
      %1615 = vmatprep.subr.bf16.mxu0 0
      %1616 = vmatpush1.bf16.msra.mxu0 %v1215
      %1617 = vmatprep.subr.bf16.mxu0 0
      %1618 = vmatpush1.bf16.msra.mxu0 %v1216
      %1619 = vmatprep.subr.bf16.mxu0 0
      %1620 = vmatpush1.bf16.msra.mxu0 %v1217
      %1621 = vmatprep.mubr.bf16.mxu0 %v657
      %1622 = vmatmul.mubr.bf16.gmra.mrb[0].mxu0 %v656
      %v1623 = vpop.f32.mrb[0].mxu0
      %v1624 = vadd.f32 %v1527, %v1623
      %v1625 = vpop.f32.mrb[0].mxu0
      %v1626 = vpop.f32.mrb[0].mxu0
      %v1627 = vadd.f32 %v1530, %v1626
      %v1628 = vpop.f32.mrb[0].mxu0
      %1629 = vmatprep.mubr.bf16.mxu0 %v666
      %1630 = vmatmul.mubr.bf16.gmra.mrb[0].mxu0 %v665
      %v1631 = vpop.f32.mrb[0].mxu0
      %v1632 = vadd.f32 %v1535, %v1631
      %v1633 = vpop.f32.mrb[0].mxu0
      %v1634 = vpop.f32.mrb[0].mxu0
      %v1635 = vadd.f32 %v1538, %v1634
      %v1636 = vpop.f32.mrb[0].mxu0
      %1637 = vmatprep.mubr.bf16.mxu0 %v675
      %1638 = vmatmul.mubr.bf16.gmra.mrb[0].mxu0 %v674
      %v1639 = vpop.f32.mrb[0].mxu0
      %v1640 = vadd.f32 %v1543, %v1639
      %v1641 = vpop.f32.mrb[0].mxu0
      %v1642 = vpop.f32.mrb[0].mxu0
      %v1643 = vadd.f32 %v1546, %v1642
      %v1644 = vpop.f32.mrb[0].mxu0
      %1645 = vmatprep.mubr.bf16.mxu0 %v684
      %1646 = vmatmul.mubr.bf16.gmra.mrb[0].mxu0 %v683
      %v1647 = vpop.f32.mrb[0].mxu0
      %v1648 = vadd.f32 %v1551, %v1647
      %v1649 = vpop.f32.mrb[0].mxu0
      %v1650 = vpop.f32.mrb[0].mxu0
      %v1651 = vadd.f32 %v1554, %v1650
      %v1652 = vpop.f32.mrb[0].mxu0
      %1653 = vmatprep.mubr.bf16.mxu0 %v693
      %1654 = vmatmul.mubr.bf16.gmra.mrb[0].mxu0 %v692
      %v1655 = vpop.f32.mrb[0].mxu0
      %v1656 = vadd.f32 %v1559, %v1655
      %v1657 = vpop.f32.mrb[0].mxu0
      %v1658 = vpop.f32.mrb[0].mxu0
      %v1659 = vadd.f32 %v1562, %v1658
      %v1660 = vpop.f32.mrb[0].mxu0
      %1661 = vmatprep.mubr.bf16.mxu0 %v702
      %1662 = vmatmul.mubr.bf16.gmra.mrb[0].mxu0 %v701
      %v1663 = vpop.f32.mrb[0].mxu0
      %v1664 = vadd.f32 %v1567, %v1663
      %v1665 = vpop.f32.mrb[0].mxu0
      %v1666 = vpop.f32.mrb[0].mxu0
      %v1667 = vadd.f32 %v1570, %v1666
      %v1668 = vpop.f32.mrb[0].mxu0
      %1669 = vmatprep.mubr.bf16.mxu0 %v711
      %1670 = vmatmul.mubr.bf16.gmra.mrb[0].mxu0 %v710
      %v1671 = vpop.f32.mrb[0].mxu0
      %v1672 = vadd.f32 %v1575, %v1671
      %v1673 = vpop.f32.mrb[0].mxu0
      %v1674 = vpop.f32.mrb[0].mxu0
      %v1675 = vadd.f32 %v1578, %v1674
      %v1676 = vpop.f32.mrb[0].mxu0
      %1677 = vmatprep.mubr.bf16.mxu0 %v720
      %1678 = vmatmul.mubr.bf16.gmra.mrb[0].mxu0 %v719
      %v1679 = vpop.f32.mrb[0].mxu0
      %v1680 = vadd.f32 %v1583, %v1679
      %v1681 = vpop.f32.mrb[0].mxu0
      %v1682 = vpop.f32.mrb[0].mxu0
      %v1683 = vadd.f32 %v1586, %v1682
      %v1684 = vpop.f32.mrb[0].mxu0
      %1685 = vdwg.mxu0
      %1686 = vmatprep.subr.bf16.mxu0 0
      %1687 = vmatpush1.bf16.msra.mxu0 %v1218
      %1688 = vmatprep.subr.bf16.mxu0 0
      %1689 = vmatpush1.bf16.msra.mxu0 %v1219
      %1690 = vmatprep.subr.bf16.mxu0 0
      %1691 = vmatpush1.bf16.msra.mxu0 %v1220
      %1692 = vmatprep.subr.bf16.mxu0 0
      %1693 = vmatpush1.bf16.msra.mxu0 %v1221
      %1694 = vmatprep.subr.bf16.mxu0 0
      %1695 = vmatpush1.bf16.msra.mxu0 %v1222
      %1696 = vmatprep.subr.bf16.mxu0 0
      %1697 = vmatpush1.bf16.msra.mxu0 %v1223
      %1698 = vmatprep.subr.bf16.mxu0 0
      %1699 = vmatpush1.bf16.msra.mxu0 %v1224
      %1700 = vmatprep.subr.bf16.mxu0 0
      %1701 = vmatpush1.bf16.msra.mxu0 %v1225
      %1702 = vmatprep.subr.bf16.mxu0 0
      %1703 = vmatpush1.bf16.msra.mxu0 0
      %1704 = vmatprep.subr.bf16.mxu0 0
      %1705 = vmatpush1.bf16.msra.mxu0 0
      %1706 = vmatprep.subr.bf16.mxu0 0
      %1707 = vmatpush1.bf16.msra.mxu0 0
      %1708 = vmatprep.subr.bf16.mxu0 0
      %1709 = vmatpush1.bf16.msra.mxu0 0
      %1710 = vmatprep.subr.bf16.mxu0 0
      %1711 = vmatpush1.bf16.msra.mxu0 0
      %1712 = vmatprep.subr.bf16.mxu0 0
      %1713 = vmatpush1.bf16.msra.mxu0 0
      %1714 = vmatprep.subr.bf16.mxu0 0
      %1715 = vmatpush1.bf16.msra.mxu0 0
      %1716 = vmatprep.subr.bf16.mxu0 0
      %1717 = vmatpush1.bf16.msra.mxu0 0
      %1718 = vmatprep.mubr.bf16.mxu0 0
      %1719 = vmatmul.mubr.bf16.gmra.mrb[0].mxu0 %v658
      %v1720 = vpop.f32.mrb[0].mxu0
      %v1721 = vadd.f32 %v1624, %v1720
      %v1722 = vpop.f32.mrb[0].mxu0
      %v1723 = vpop.f32.mrb[0].mxu0
      %v1724 = vadd.f32 %v1627, %v1723
      %v1725 = vpop.f32.mrb[0].mxu0
      %1726 = vmatprep.mubr.bf16.mxu0 0
      %1727 = vmatmul.mubr.bf16.gmra.mrb[0].mxu0 %v667
      %v1728 = vpop.f32.mrb[0].mxu0
      %v1729 = vadd.f32 %v1632, %v1728
      %v1730 = vpop.f32.mrb[0].mxu0
      %v1731 = vpop.f32.mrb[0].mxu0
      %v1732 = vadd.f32 %v1635, %v1731
      %v1733 = vpop.f32.mrb[0].mxu0
      %1734 = vmatprep.mubr.bf16.mxu0 0
      %1735 = vmatmul.mubr.bf16.gmra.mrb[0].mxu0 %v676
      %v1736 = vpop.f32.mrb[0].mxu0
      %v1737 = vadd.f32 %v1640, %v1736
      %v1738 = vpop.f32.mrb[0].mxu0
      %v1739 = vpop.f32.mrb[0].mxu0
      %v1740 = vadd.f32 %v1643, %v1739
      %v1741 = vpop.f32.mrb[0].mxu0
      %1742 = vmatprep.mubr.bf16.mxu0 0
      %1743 = vmatmul.mubr.bf16.gmra.mrb[0].mxu0 %v685
      %v1744 = vpop.f32.mrb[0].mxu0
      %v1745 = vadd.f32 %v1648, %v1744
      %v1746 = vpop.f32.mrb[0].mxu0
      %v1747 = vpop.f32.mrb[0].mxu0
      %v1748 = vadd.f32 %v1651, %v1747
      %v1749 = vpop.f32.mrb[0].mxu0
      %1750 = vmatprep.mubr.bf16.mxu0 0
      %1751 = vmatmul.mubr.bf16.gmra.mrb[0].mxu0 %v694
      %v1752 = vpop.f32.mrb[0].mxu0
      %v1753 = vadd.f32 %v1656, %v1752
      %v1754 = vpop.f32.mrb[0].mxu0
      %v1755 = vpop.f32.mrb[0].mxu0
      %v1756 = vadd.f32 %v1659, %v1755
      %v1757 = vpop.f32.mrb[0].mxu0
      %1758 = vmatprep.mubr.bf16.mxu0 0
      %1759 = vmatmul.mubr.bf16.gmra.mrb[0].mxu0 %v703
      %v1760 = vpop.f32.mrb[0].mxu0
      %v1761 = vadd.f32 %v1664, %v1760
      %v1762 = vpop.f32.mrb[0].mxu0
      %v1763 = vpop.f32.mrb[0].mxu0
      %v1764 = vadd.f32 %v1667, %v1763
      %v1765 = vpop.f32.mrb[0].mxu0
      %1766 = vmatprep.mubr.bf16.mxu0 0
      %1767 = vmatmul.mubr.bf16.gmra.mrb[0].mxu0 %v712
      %v1768 = vpop.f32.mrb[0].mxu0
      %v1769 = vadd.f32 %v1672, %v1768
      %v1770 = vpop.f32.mrb[0].mxu0
      %v1771 = vpop.f32.mrb[0].mxu0
      %v1772 = vadd.f32 %v1675, %v1771
      %v1773 = vpop.f32.mrb[0].mxu0
      %1774 = vmatprep.mubr.bf16.mxu0 0
      %1775 = vmatmul.mubr.bf16.gmra.mrb[0].mxu0 %v721
      %v1776 = vpop.f32.mrb[0].mxu0
      %v1777 = vadd.f32 %v1680, %v1776
      %v1778 = vpop.f32.mrb[0].mxu0
      %v1779 = vpop.f32.mrb[0].mxu0
      %v1780 = vadd.f32 %v1683, %v1779
      %v1781 = vpop.f32.mrb[0].mxu0
      %1782 = vdwg.mxu0
      %v1783 = vadd.f32 %v1721, %v1724
      %v1784 = vadd.f32 %v1783, %v1729
      %v1785 = vadd.f32 %v1784, %v1732
      %v1786 = vadd.f32 %v1785, %v1737
      %v1787 = vadd.f32 %v1786, %v1740
      %v1788 = vadd.f32 %v1787, %v1745
      %v1789 = vadd.f32 %v1788, %v1748
      %v1790 = vadd.f32 %v1789, %v1753
      %v1791 = vadd.f32 %v1790, %v1756
      %v1792 = vadd.f32 %v1791, %v1761
      %v1793 = vadd.f32 %v1792, %v1764
      %v1794 = vadd.f32 %v1793, %v1769
      %v1795 = vadd.f32 %v1794, %v1772
      %v1796 = vadd.f32 %v1795, %v1777
      %v1797 = vadd.f32 %v1796, %v1780
      %v1798 = vrot.slane %v1797, 4
      %v1799 = vadd.f32 %v1797, %v1798
      %v1800 = vrot.slane %v1799, 2
      %v1801 = vadd.f32 %v1799, %v1800
      %v1802 = vrot.slane %v1801, 1
      %v1803 = vadd.f32 %v1801, %v1802
      %v1804 = vmul.f32 %v1721, %v1721
      %v1805 = vmul.f32 %v1724, %v1724
      %v1806 = vmul.f32 %v1729, %v1729
      %v1807 = vmul.f32 %v1732, %v1732
      %v1808 = vmul.f32 %v1737, %v1737
      %v1809 = vmul.f32 %v1740, %v1740
      %v1810 = vmul.f32 %v1745, %v1745
      %v1811 = vmul.f32 %v1748, %v1748
      %v1812 = vmul.f32 %v1753, %v1753
      %v1813 = vmul.f32 %v1756, %v1756
      %v1814 = vmul.f32 %v1761, %v1761
      %v1815 = vmul.f32 %v1764, %v1764
      %v1816 = vmul.f32 %v1769, %v1769
      %v1817 = vmul.f32 %v1772, %v1772
      %v1818 = vmul.f32 %v1777, %v1777
      %v1819 = vmul.f32 %v1780, %v1780
      %v1820 = vadd.f32 %v1804, %v1805
      %v1821 = vadd.f32 %v1820, %v1806
      %v1822 = vadd.f32 %v1821, %v1807
      %v1823 = vadd.f32 %v1822, %v1808
      %v1824 = vadd.f32 %v1823, %v1809
      %v1825 = vadd.f32 %v1824, %v1810
      %v1826 = vadd.f32 %v1825, %v1811
      %v1827 = vadd.f32 %v1826, %v1812
      %v1828 = vadd.f32 %v1827, %v1813
      %v1829 = vadd.f32 %v1828, %v1814
      %v1830 = vadd.f32 %v1829, %v1815
      %v1831 = vadd.f32 %v1830, %v1816
      %v1832 = vadd.f32 %v1831, %v1817
      %v1833 = vadd.f32 %v1832, %v1818
      %v1834 = vadd.f32 %v1833, %v1819
      %v1835 = vrot.slane %v1834, 4
      %v1836 = vadd.f32 %v1834, %v1835
      %v1837 = vrot.slane %v1836, 2
      %v1838 = vadd.f32 %v1836, %v1837
      %v1839 = vrot.slane %v1838, 1
      %v1840 = vadd.f32 %v1838, %v1839
      %vm1841 = vcmask 1040384
      %v1842 = vsel %vm1841, %v1803, %v1840
      %vm1843 = vcmask 1041408
      %v1844 = vsel %vm1843, %v1842, 0.0
      %1845 = vst [vmem:[%s268] sm:$0xff] %v1844
      %1846 = vst [vmem:[%s261] sm:$0xff] %v1721
      %1847 = vst [vmem:[%s261 + $0x8] sm:$0xff] %v1724
      %1848 = vst [vmem:[%s261 + $0x10] sm:$0xff] %v1729
      %1849 = vst [vmem:[%s261 + $0x18] sm:$0xff] %v1732
      %1850 = vst [vmem:[%s261 + $0x20] sm:$0xff] %v1737
      %1851 = vst [vmem:[%s261 + $0x28] sm:$0xff] %v1740
      %1852 = vst [vmem:[%s261 + $0x30] sm:$0xff] %v1745
      %1853 = vst [vmem:[%s261 + $0x38] sm:$0xff] %v1748
      %1854 = vst [vmem:[%s261 + $0x40] sm:$0xff] %v1753
      %1855 = vst [vmem:[%s261 + $0x48] sm:$0xff] %v1756
      %1856 = vst [vmem:[%s261 + $0x50] sm:$0xff] %v1761
      %1857 = vst [vmem:[%s261 + $0x58] sm:$0xff] %v1764
      %1858 = vst [vmem:[%s261 + $0x60] sm:$0xff] %v1769
      %1859 = vst [vmem:[%s261 + $0x68] sm:$0xff] %v1772
      %1860 = vst [vmem:[%s261 + $0x70] sm:$0xff] %v1777
      %1861 = vst [vmem:[%s261 + $0x78] sm:$0xff] %v1780
      %s1862 = smul.u32 8, %s22
      %p1863 = scmp.lt.s32.totalorder %s21, 1
      %s1864 = scalar_select %p1863, %s21, 1
      %p1865 = scmp.lt.s32.totalorder %s1862, 15
      %s1866 = scalar_select %p1865, %s1862, 15
      %s1867 = smul.addr %s1866, 2
      %s1868 = smul.addr %s1864, 32
      %s1869 = sadd.s32 %s1867, %s1868
      %s1870 = smul.addr %s1869, 8
      %s1871 = scalar_lea.vmem %s4, %s1870
      %s1872 = smul.u32 %s21, 2
      %s1873 = sadd.s32 %s1872, %s22
      %p1874 = scmp.lt.s32.totalorder %s1873, 3
      %s1875 = scalar_select %p1874, %s1873, 3
      %s1876 = smul.addr %s1875, 8
      %s1877 = scalar_lea.vmem %s5, %s1876
      // Predicated region
      $region45: #{double_conv_forward.3} parent=35 // pred_check
        %p1878 = pneg %p138
      $region46: #{double_conv_forward.3} parent=35 // pred_check_branch
        %1880 = sbr.rel (%p1878) target = $region48
      $region47: #{double_conv_forward.3} parent=35 // pred_region
        %s1881 = smul.u32 8, %s22
      $region48: #{double_conv_forward.3} parent=35 // pred_fallthru
        _
      // Predicated region
      $region49: #{double_conv_forward.3} parent=35 // pred_check
        %p1882 = pneg %p168
      $region50: #{double_conv_forward.3} parent=35 // pred_check_branch
        %1884 = sbr.rel (%p1882) target = $region52
      $region51: #{double_conv_forward.3} parent=35 // pred_region
        %s1885 = smul.u32 %s21, 2
        %s1886 = sadd.s32 %s1885, %s22
      $region52: #{double_conv_forward.3} parent=35 // pred_fallthru
        _
    $region36: #{double_conv_forward.3} parent=5 // pred_fallthru
      _
    %p1887 = scmp.le.s32.totalorder 2, %s12
    // Predicated region
    $region53: #{double_conv_forward.3} parent=5 // pred_check
      %p1888 = pneg %p1887
    $region54: #{double_conv_forward.3} parent=5 // pred_check_branch
      %1890 = sbr.rel (%p1888) target = $region56
    $region55: #{double_conv_forward.3} parent=5 // pred_region
      %s1891 = ssub.s32 %s12, 2
      // Predicated region
      $region57: #{double_conv_forward.3} parent=55 // pred_check
        %p1892 = pneg %p144
      $region58: #{double_conv_forward.3} parent=55 // pred_check_branch
        %1894 = sbr.rel (%p1892) target = $region60
      $region59: #{double_conv_forward.3} parent=55 // pred_region
        %s1895 = smul.u32 8, %s24
        %p1896 = scmp.lt.s32.totalorder %s23, 1
        %s1897 = scalar_select %p1896, %s23, 1
        %p1898 = scmp.lt.s32.totalorder %s1895, 15
        %s1899 = scalar_select %p1898, %s1895, 15
        %s1900 = smul.addr %s1899, 2
        %s1901 = smul.addr %s1897, 32
        %s1902 = sadd.s32 %s1900, %s1901
        %s1903 = smul.addr %s1902, 8
        %s1904 = scalar_lea.vmem %s4, %s1903
      $region60: #{double_conv_forward.3} parent=55 // pred_fallthru
        _
      // Predicated region
      $region61: #{double_conv_forward.3} parent=55 // pred_check
        %p1905 = pneg %p174
      $region62: #{double_conv_forward.3} parent=55 // pred_check_branch
        %1907 = sbr.rel (%p1905) target = $region64
      $region63: #{double_conv_forward.3} parent=55 // pred_region
        %s1908 = smul.u32 %s23, 2
        %s1909 = sadd.s32 %s1908, %s24
        %p1910 = scmp.lt.s32.totalorder %s1909, 3
        %s1911 = scalar_select %p1910, %s1909, 3
        %s1912 = smul.addr %s1911, 8
        %s1913 = scalar_lea.vmem %s5, %s1912
      $region64: #{double_conv_forward.3} parent=55 // pred_fallthru
        _
    $region56: #{double_conv_forward.3} parent=5 // pred_fallthru
      _
  $region6: #{double_conv_forward.3} parent=0 // loop_footer
    %s16 = sadd.s32 1, %s12
  $region7: #{double_conv_forward.3} parent=0 // loop_footer_branch
    %11 = sbr.rel target = $region3
  $region8: #{double_conv_forward.3} parent=0 // loop_exit
    _

// kernel: double_conv_forward.4
$region0: #{double_conv_forward.4}
  #allocation0 [shape = 'u32[]', space=smem, size = 0x4, offset = 0x4, fixed_abs, tag = 'smem constant byte address 0x4 - core index']
  #allocation1 [shape = 'u32[144,128]{1,0:T(1,128)}', space=vmem, size = 0x12000, scoped, tag = 'internal scratch']
  #allocation2 [shape = 'f32[10,18,128]{2,1,0:T(8,128)}', space=vmem, size = 0x1e000, scoped, tag = 'scratch operand']
  #allocation3 [shape = 'bf16[128,1152]{1,0:T(16,128)(2,1)}', space=vmem, size = 0x48000, scoped, tag = 'scratch operand']
  %s0 = inlined_call_operand.vmem [shape: f32[2,16,16,128], index: 0, kind: input, shape index: {}]
  %s1 = inlined_call_operand.vmem [shape: bf16[1152,128], index: 1, kind: input, shape index: {}]
  %s2 = inlined_call_operand.vmem [shape: f32[1,128], index: 2, kind: input, shape index: {}]
  %s3 = inlined_call_operand.vmem [shape: f32[1,128], index: 3, kind: input, shape index: {}]
  %s4 = inlined_call_operand.vmem [shape: f32[2,16,16,128], index: 4, kind: output, shape index: {0}]
  %s5 = inlined_call_operand.vmem [shape: f32[4,8,128], index: 5, kind: output, shape index: {1}]
  %6 = xla_tuple %s4, %s5
  %s7 = sld [smem:[#allocation0]]
  $region65: #{double_conv_forward.4} parent=0
    _
  %s9 = ssub.s32 1, %s7
  %s10 = scalar_select 0, %s9, %s7
  loop: start=0, step=1, limit=6
  $region2: #{double_conv_forward.4} parent=0 // loop_pre_header
    _
  $region3: #{double_conv_forward.4} parent=0 // loop_header
    %s12 = sphi 0, %s16
    %p13 = scmp.ge.s32.totalorder %s12, 6
    %s19 = sphi 0, %s31
    %s20 = sphi 0, %s27
    %s21 = sphi 0, %s19
    %s22 = sphi 0, %s20
    %s23 = sphi 0, %s21
    %s24 = sphi 0, %s22
    %s34 = sphi 0, %s36
    %s37 = sphi 0, %s34
    %s38 = sphi 0, %s37
    %s54 = sphi 0, %s38
    %s58 = sphi 0, %s58
    %s60 = sphi 0, %s58
    %s61 = sphi 0, %s60
    %s75 = sphi 0, %s61
    %s79 = sphi 0, %s79
    %s81 = sphi 0, %s79
    %s82 = sphi 0, %s81
    %s96 = sphi 0, %s82
    %s100 = sphi 0, %s100
    %s102 = sphi 0, %s100
    %s103 = sphi 0, %s102
    %s117 = sphi 0, %s103
    %s125 = sphi 0, %s127
    %s128 = sphi 0, %s125
    %s129 = sphi 0, %s128
    %s145 = sphi 0, %s129
    %s155 = sphi 0, %s157
    %s158 = sphi 0, %s155
    %s159 = sphi 0, %s158
    %s175 = sphi 0, %s159
  $region4: #{double_conv_forward.4} parent=0 // loop_header_branch
    %15 = sbr.rel (%p13) target = $region8
  $region5: #{double_conv_forward.4} parent=0 // loop_body
    %s17 = ssub.s32 %s12, 1
    %s18 = ssub.s32 %s12, 2
    %s25 = sadd.s32 1, %s20
    %p26 = scmp.ge.s32.totalorder %s25, 2
    %s27 = scalar_select %p26, 0, %s25
    %s28 = sadd.s32 1, %s19
    %s29 = scalar_select %p26, %s28, %s19
    %p30 = scmp.ge.s32.totalorder %s29, 2
    %s31 = scalar_select %p30, 0, %s29
    %s32 = ssub.s32 %s19, %s31
    %p33 = scmp.eq.s32.totalorder %s32, 0
    %s35 = sadd.s32 %s34, 1
    %s36 = scalar_select %p33, %s34, %s35
    %p39 = pneg %p33
    %p40 = scmp.eq.s32.totalorder %s12, 3
    %p41 = por %p39, %p40
    %p42 = scmp.ne.s32.totalorder %s34, %s37
    %p43 = scmp.eq.s32.totalorder %s12, 0
    %p44 = por %p42, %p43
    %p45 = scmp.ne.s32.totalorder %s34, %s37
    %p46 = scmp.eq.s32.totalorder %s17, 3
    %p47 = por %p45, %p46
    %p48 = scmp.ne.s32.totalorder %s37, %s38
    %p49 = scmp.eq.s32.totalorder %s17, 0
    %p50 = por %p48, %p49
    %p51 = scmp.ne.s32.totalorder %s37, %s38
    %p52 = scmp.eq.s32.totalorder %s18, 3
    %p53 = por %p51, %p52
    %p55 = scmp.ne.s32.totalorder %s38, %s54
    %p56 = scmp.eq.s32.totalorder %s18, 0
    %p57 = por %p55, %p56
    %s59 = sadd.s32 %s58, 1
    %p62 = scmp.eq.s32.totalorder %s12, 3
    %p63 = scmp.ne.s32.totalorder %s58, %s60
    %p64 = scmp.eq.s32.totalorder %s12, 0
    %p65 = por %p63, %p64
    %p66 = scmp.ne.s32.totalorder %s58, %s60
    %p67 = scmp.eq.s32.totalorder %s17, 3
    %p68 = por %p66, %p67
    %p69 = scmp.ne.s32.totalorder %s60, %s61
    %p70 = scmp.eq.s32.totalorder %s17, 0
    %p71 = por %p69, %p70
    %p72 = scmp.ne.s32.totalorder %s60, %s61
    %p73 = scmp.eq.s32.totalorder %s18, 3
    %p74 = por %p72, %p73
    %p76 = scmp.ne.s32.totalorder %s61, %s75
    %p77 = scmp.eq.s32.totalorder %s18, 0
    %p78 = por %p76, %p77
    %s80 = sadd.s32 %s79, 1
    %p83 = scmp.eq.s32.totalorder %s12, 3
    %p84 = scmp.ne.s32.totalorder %s79, %s81
    %p85 = scmp.eq.s32.totalorder %s12, 0
    %p86 = por %p84, %p85
    %p87 = scmp.ne.s32.totalorder %s79, %s81
    %p88 = scmp.eq.s32.totalorder %s17, 3
    %p89 = por %p87, %p88
    %p90 = scmp.ne.s32.totalorder %s81, %s82
    %p91 = scmp.eq.s32.totalorder %s17, 0
    %p92 = por %p90, %p91
    %p93 = scmp.ne.s32.totalorder %s81, %s82
    %p94 = scmp.eq.s32.totalorder %s18, 3
    %p95 = por %p93, %p94
    %p97 = scmp.ne.s32.totalorder %s82, %s96
    %p98 = scmp.eq.s32.totalorder %s18, 0
    %p99 = por %p97, %p98
    %s101 = sadd.s32 %s100, 1
    %p104 = scmp.eq.s32.totalorder %s12, 3
    %p105 = scmp.ne.s32.totalorder %s100, %s102
    %p106 = scmp.eq.s32.totalorder %s12, 0
    %p107 = por %p105, %p106
    %p108 = scmp.ne.s32.totalorder %s100, %s102
    %p109 = scmp.eq.s32.totalorder %s17, 3
    %p110 = por %p108, %p109
    %p111 = scmp.ne.s32.totalorder %s102, %s103
    %p112 = scmp.eq.s32.totalorder %s17, 0
    %p113 = por %p111, %p112
    %p114 = scmp.ne.s32.totalorder %s102, %s103
    %p115 = scmp.eq.s32.totalorder %s18, 3
    %p116 = por %p114, %p115
    %p118 = scmp.ne.s32.totalorder %s103, %s117
    %p119 = scmp.eq.s32.totalorder %s18, 0
    %p120 = por %p118, %p119
    %s121 = ssub.s32 %s19, %s31
    %s122 = ssub.s32 %s20, %s27
    %s123 = sor.u32 %s121, %s122
    %p124 = scmp.eq.s32.totalorder %s123, 0
    %s126 = sadd.s32 %s125, 1
    %s127 = scalar_select %p124, %s125, %s126
    %p130 = pneg %p124
    %p131 = scmp.eq.s32.totalorder %s12, 3
    %p132 = por %p130, %p131
    %p133 = scmp.ne.s32.totalorder %s125, %s128
    %p134 = scmp.eq.s32.totalorder %s12, 0
    %p135 = por %p133, %p134
    %p136 = scmp.ne.s32.totalorder %s125, %s128
    %p137 = scmp.eq.s32.totalorder %s17, 3
    %p138 = por %p136, %p137
    %p139 = scmp.ne.s32.totalorder %s128, %s129
    %p140 = scmp.eq.s32.totalorder %s17, 0
    %p141 = por %p139, %p140
    %p142 = scmp.ne.s32.totalorder %s128, %s129
    %p143 = scmp.eq.s32.totalorder %s18, 3
    %p144 = por %p142, %p143
    %p146 = scmp.ne.s32.totalorder %s129, %s145
    %p147 = scmp.eq.s32.totalorder %s18, 0
    %p148 = por %p146, %p147
    %s149 = smul.u32 %s19, 2
    %s150 = sadd.s32 %s149, %s20
    %s151 = smul.u32 %s31, 2
    %s152 = sadd.s32 %s151, %s27
    %s153 = ssub.s32 %s150, %s152
    %p154 = scmp.eq.s32.totalorder %s153, 0
    %s156 = sadd.s32 %s155, 1
    %s157 = scalar_select %p154, %s155, %s156
    %p160 = pneg %p154
    %p161 = scmp.eq.s32.totalorder %s12, 3
    %p162 = por %p160, %p161
    %p163 = scmp.ne.s32.totalorder %s155, %s158
    %p164 = scmp.eq.s32.totalorder %s12, 0
    %p165 = por %p163, %p164
    %p166 = scmp.ne.s32.totalorder %s155, %s158
    %p167 = scmp.eq.s32.totalorder %s17, 3
    %p168 = por %p166, %p167
    %p169 = scmp.ne.s32.totalorder %s158, %s159
    %p170 = scmp.eq.s32.totalorder %s17, 0
    %p171 = por %p169, %p170
    %p172 = scmp.ne.s32.totalorder %s158, %s159
    %p173 = scmp.eq.s32.totalorder %s18, 3
    %p174 = por %p172, %p173
    %p176 = scmp.ne.s32.totalorder %s159, %s175
    %p177 = scmp.eq.s32.totalorder %s18, 0
    %p178 = por %p176, %p177
    %p179 = scmp.le.s32.totalorder 1, %s12
    %p180 = scmp.lt.s32.totalorder %s12, 5
    %p181 = pnand %p179, %p180
    %p182 = pneg %p181
    // Predicated region
    $region9: #{double_conv_forward.4} parent=5 // pred_check
      _
    $region10: #{double_conv_forward.4} parent=5 // pred_check_branch
      %184 = sbr.rel (%p181) target = $region12
    $region11: #{double_conv_forward.4} parent=5 // pred_region
      %s185 = ssub.s32 %s12, 1
      // Predicated region
      $region13: #{double_conv_forward.4} parent=11 // pred_check
        %p186 = pneg %p71
      $region14: #{double_conv_forward.4} parent=11 // pred_check_branch
        %188 = sbr.rel (%p186) target = $region16
      $region15: #{double_conv_forward.4} parent=11 // pred_region
        _
      $region16: #{double_conv_forward.4} parent=11 // pred_fallthru
        _
      // Predicated region
      $region17: #{double_conv_forward.4} parent=11 // pred_check
        %p189 = pneg %p92
      $region18: #{double_conv_forward.4} parent=11 // pred_check_branch
        %191 = sbr.rel (%p189) target = $region20
      $region19: #{double_conv_forward.4} parent=11 // pred_region
        _
      $region20: #{double_conv_forward.4} parent=11 // pred_fallthru
        _
      // Predicated region
      $region21: #{double_conv_forward.4} parent=11 // pred_check
        %p192 = pneg %p113
      $region22: #{double_conv_forward.4} parent=11 // pred_check_branch
        %194 = sbr.rel (%p192) target = $region24
      $region23: #{double_conv_forward.4} parent=11 // pred_region
        _
      $region24: #{double_conv_forward.4} parent=11 // pred_fallthru
        _
    $region12: #{double_conv_forward.4} parent=5 // pred_fallthru
      _
    %p195 = scmp.lt.s32.totalorder %s12, 4
    // Predicated region
    $region25: #{double_conv_forward.4} parent=5 // pred_check
      %p196 = pneg %p195
    $region26: #{double_conv_forward.4} parent=5 // pred_check_branch
      %198 = sbr.rel (%p196) target = $region28
    $region27: #{double_conv_forward.4} parent=5 // pred_region
      // Predicated region
      $region29: #{double_conv_forward.4} parent=27 // pred_check
        %p199 = pneg %p44
      $region30: #{double_conv_forward.4} parent=27 // pred_check_branch
        %201 = sbr.rel (%p199) target = $region32
      $region31: #{double_conv_forward.4} parent=27 // pred_region
        %p202 = scmp.lt.s32.totalorder %s19, 1
        %s203 = scalar_select %p202, %s19, 1
        %s204 = smul.addr %s203, 32
        %s205 = smul.addr %s204, 8
        %s206 = scalar_lea.vmem %s0, %s205
      $region32: #{double_conv_forward.4} parent=27 // pred_fallthru
        _
    $region28: #{double_conv_forward.4} parent=5 // pred_fallthru
      _
    %p207 = scmp.le.s32.totalorder 1, %s12
    %p208 = scmp.lt.s32.totalorder %s12, 5
    %p209 = pnand %p207, %p208
    %p210 = pneg %p209
    // Predicated region
    $region33: #{double_conv_forward.4} parent=5 // pred_check
      _
    $region34: #{double_conv_forward.4} parent=5 // pred_check_branch
      %212 = sbr.rel (%p209) target = $region36
    $region35: #{double_conv_forward.4} parent=5 // pred_region
      %s213 = ssub.s32 %s12, 1
      %p214 = scmp.lt.s32.totalorder %s21, 1
      %s215 = scalar_select %p214, %s21, 1
      %s216 = smul.addr %s215, 32
      %s217 = smul.addr %s216, 8
      %s218 = scalar_lea.vmem %s0, %s217
      %p219 = pneg %p50
      %p220 = pneg %p47
      %p221 = pneg %p71
      %p222 = pneg %p68
      %p223 = pneg %p92
      %p224 = pneg %p89
      %p225 = pneg %p113
      %p226 = pneg %p110
      %p227 = pneg %p141
      %p228 = pneg %p138
      %s229 = smul.u32 8, %s22
      %p230 = scmp.lt.s32.totalorder %s21, 1
      %s231 = scalar_select %p230, %s21, 1
      %p232 = scmp.lt.s32.totalorder %s229, 15
      %s233 = scalar_select %p232, %s229, 15
      %s234 = smul.addr %s233, 2
      %s235 = smul.addr %s231, 32
      %s236 = sadd.s32 %s234, %s235
      %s237 = smul.addr %s236, 8
      %s238 = scalar_lea.vmem %s4, %s237
      %p239 = pneg %p171
      %p240 = pneg %p168
      %s241 = smul.u32 %s21, 2
      %s242 = sadd.s32 %s241, %s22
      %p243 = scmp.lt.s32.totalorder %s242, 3
      %s244 = scalar_select %p243, %s242, 3
      %s245 = smul.addr %s244, 8
      %s246 = scalar_lea.vmem %s5, %s245
      %p247 = scmp.lt.s32.totalorder %s21, 1
      %s248 = scalar_select %p247, %s21, 1
      %s249 = smul.addr %s248, 32
      %s250 = smul.addr %s249, 8
      %s251 = scalar_lea.vmem %s0, %s250
      %s252 = smul.u32 8, %s22
      %p253 = scmp.lt.s32.totalorder %s21, 1
      %s254 = scalar_select %p253, %s21, 1
      %p255 = scmp.lt.s32.totalorder %s252, 15
      %s256 = scalar_select %p255, %s252, 15
      %s257 = smul.addr %s256, 2
      %s258 = smul.addr %s254, 32
      %s259 = sadd.s32 %s257, %s258
      %s260 = smul.addr %s259, 8
      %s261 = scalar_lea.vmem %s4, %s260
      %s262 = smul.u32 8, %s22
      %s263 = smul.u32 %s21, 2
      %s264 = sadd.s32 %s263, %s22
      %p265 = scmp.lt.s32.totalorder %s264, 3
      %s266 = scalar_select %p265, %s264, 3
      %s267 = smul.addr %s266, 8
      %s268 = scalar_lea.vmem %s5, %s267
      %s269 = smul.u32 %s21, 2
      %s270 = sadd.s32 %s269, %s22
      %s272 = smul.u32 %s22, 8
      %v273 = vld [vmem:[%s2] sm:$0x1]
      %v274 = vld [vmem:[%s3] sm:$0x1]
      %275 = vst [vmem:[#allocation2] sm:$0xff] 0.0
      %276 = vst [vmem:[#allocation2 + $0x8] sm:$0xff] 0.0
      %277 = vst [vmem:[#allocation2 + $0x10] sm:$0x3] 0.0
      %278 = vst [vmem:[#allocation2 + $0x18] sm:$0xff] 0.0
      %279 = vst [vmem:[#allocation2 + $0x20] sm:$0xff] 0.0
      %280 = vst [vmem:[#allocation2 + $0x28] sm:$0x3] 0.0
      %281 = vst [vmem:[#allocation2 + $0x30] sm:$0xff] 0.0
      %282 = vst [vmem:[#allocation2 + $0x38] sm:$0xff] 0.0
      %283 = vst [vmem:[#allocation2 + $0x40] sm:$0x3] 0.0
      %284 = vst [vmem:[#allocation2 + $0x48] sm:$0xff] 0.0
      %285 = vst [vmem:[#allocation2 + $0x50] sm:$0xff] 0.0
      %286 = vst [vmem:[#allocation2 + $0x58] sm:$0x3] 0.0
      %287 = vst [vmem:[#allocation2 + $0x60] sm:$0xff] 0.0
      %288 = vst [vmem:[#allocation2 + $0x68] sm:$0xff] 0.0
      %289 = vst [vmem:[#allocation2 + $0x70] sm:$0x3] 0.0
      %290 = vst [vmem:[#allocation2 + $0x78] sm:$0xff] 0.0
      %291 = vst [vmem:[#allocation2 + $0x80] sm:$0xff] 0.0
      %292 = vst [vmem:[#allocation2 + $0x88] sm:$0x3] 0.0
      %293 = vst [vmem:[#allocation2 + $0x90] sm:$0xff] 0.0
      %294 = vst [vmem:[#allocation2 + $0x98] sm:$0xff] 0.0
      %295 = vst [vmem:[#allocation2 + $0xa0] sm:$0x3] 0.0
      %296 = vst [vmem:[#allocation2 + $0xa8] sm:$0xff] 0.0
      %297 = vst [vmem:[#allocation2 + $0xb0] sm:$0xff] 0.0
      %298 = vst [vmem:[#allocation2 + $0xb8] sm:$0x3] 0.0
      %299 = vst [vmem:[#allocation2 + $0xc0] sm:$0xff] 0.0
      %300 = vst [vmem:[#allocation2 + $0xc8] sm:$0xff] 0.0
      %301 = vst [vmem:[#allocation2 + $0xd0] sm:$0x3] 0.0
      %302 = vst [vmem:[#allocation2 + $0xd8] sm:$0xff] 0.0
      %303 = vst [vmem:[#allocation2 + $0xe0] sm:$0xff] 0.0
      %304 = vst [vmem:[#allocation2 + $0xe8] sm:$0x3] 0.0
      %s305 = smul.u32 %s272, 16
      %s306 = scalar_lea.vmem %s251, %s305
      %v307 = vld [vmem:[%s306] sm:$0xff]
      %v308 = vld [vmem:[%s306 + $0x8] sm:$0xff]
      %v309 = vld [vmem:[%s306 + $0x10] sm:$0xff]
      %v310 = vld [vmem:[%s306 + $0x18] sm:$0xff]
      %v311 = vld [vmem:[%s306 + $0x20] sm:$0xff]
      %v312 = vld [vmem:[%s306 + $0x28] sm:$0xff]
      %v313 = vld [vmem:[%s306 + $0x30] sm:$0xff]
      %v314 = vld [vmem:[%s306 + $0x38] sm:$0xff]
      %v315 = vld [vmem:[%s306 + $0x40] sm:$0xff]
      %v316 = vld [vmem:[%s306 + $0x48] sm:$0xff]
      %v317 = vld [vmem:[%s306 + $0x50] sm:$0xff]
      %v318 = vld [vmem:[%s306 + $0x58] sm:$0xff]
      %v319 = vld [vmem:[%s306 + $0x60] sm:$0xff]
      %v320 = vld [vmem:[%s306 + $0x68] sm:$0xff]
      %v321 = vld [vmem:[%s306 + $0x70] sm:$0xff]
      %v322 = vld [vmem:[%s306 + $0x78] sm:$0xff]
      %v324 = vlaneseq
      %v325 = vshrl.u32 %v324, 7
      %v326 = vsub.s32 0, %v325
      %v327 = vrot.slane %v273, %v326
      %v329 = vmul.f32 %v307, %v327
      %v330 = vmul.f32 %v308, %v327
      %v331 = vmul.f32 %v309, %v327
      %v332 = vmul.f32 %v310, %v327
      %v333 = vmul.f32 %v311, %v327
      %v334 = vmul.f32 %v312, %v327
      %v335 = vmul.f32 %v313, %v327
      %v336 = vmul.f32 %v314, %v327
      %v337 = vmul.f32 %v315, %v327
      %v338 = vmul.f32 %v316, %v327
      %v339 = vmul.f32 %v317, %v327
      %v340 = vmul.f32 %v318, %v327
      %v341 = vmul.f32 %v319, %v327
      %v342 = vmul.f32 %v320, %v327
      %v343 = vmul.f32 %v321, %v327
      %v344 = vmul.f32 %v322, %v327
      %v346 = vlaneseq
      %v347 = vshrl.u32 %v346, 7
      %v348 = vsub.s32 0, %v347
      %v349 = vrot.slane %v274, %v348
      %v351 = vadd.f32 %v329, %v349
      %v352 = vadd.f32 %v330, %v349
      %v353 = vadd.f32 %v331, %v349
      %v354 = vadd.f32 %v332, %v349
      %v355 = vadd.f32 %v333, %v349
      %v356 = vadd.f32 %v334, %v349
      %v357 = vadd.f32 %v335, %v349
      %v358 = vadd.f32 %v336, %v349
      %v359 = vadd.f32 %v337, %v349
      %v360 = vadd.f32 %v338, %v349
      %v361 = vadd.f32 %v339, %v349
      %v362 = vadd.f32 %v340, %v349
      %v363 = vadd.f32 %v341, %v349
      %v364 = vadd.f32 %v342, %v349
      %v365 = vadd.f32 %v343, %v349
      %v366 = vadd.f32 %v344, %v349
      %v367 = vmax.f32 %v351, 0.0
      %v368 = vmax.f32 %v352, 0.0
      %v369 = vmax.f32 %v353, 0.0
      %v370 = vmax.f32 %v354, 0.0
      %v371 = vmax.f32 %v355, 0.0
      %v372 = vmax.f32 %v356, 0.0
      %v373 = vmax.f32 %v357, 0.0
      %v374 = vmax.f32 %v358, 0.0
      %v375 = vmax.f32 %v359, 0.0
      %v376 = vmax.f32 %v360, 0.0
      %v377 = vmax.f32 %v361, 0.0
      %v378 = vmax.f32 %v362, 0.0
      %v379 = vmax.f32 %v363, 0.0
      %v380 = vmax.f32 %v364, 0.0
      %v381 = vmax.f32 %v365, 0.0
      %v382 = vmax.f32 %v366, 0.0
      %s383 = scalar_lea.vmem [#allocation2], 24
      %384 = vst [vmem:[%s383 + $0x1] sm:$0xff] %v367
      %385 = vst [vmem:[%s383 + $0x9] sm:$0xff] %v368
      %386 = vst [vmem:[%s383 + $0x19] sm:$0xff] %v369
      %387 = vst [vmem:[%s383 + $0x21] sm:$0xff] %v370
      %388 = vst [vmem:[%s383 + $0x31] sm:$0xff] %v371
      %389 = vst [vmem:[%s383 + $0x39] sm:$0xff] %v372
      %390 = vst [vmem:[%s383 + $0x49] sm:$0xff] %v373
      %391 = vst [vmem:[%s383 + $0x51] sm:$0xff] %v374
      %392 = vst [vmem:[%s383 + $0x61] sm:$0xff] %v375
      %393 = vst [vmem:[%s383 + $0x69] sm:$0xff] %v376
      %394 = vst [vmem:[%s383 + $0x79] sm:$0xff] %v377
      %395 = vst [vmem:[%s383 + $0x81] sm:$0xff] %v378
      %396 = vst [vmem:[%s383 + $0x91] sm:$0xff] %v379
      %397 = vst [vmem:[%s383 + $0x99] sm:$0xff] %v380
      %398 = vst [vmem:[%s383 + $0xa9] sm:$0xff] %v381
      %399 = vst [vmem:[%s383 + $0xb1] sm:$0xff] %v382
      %p400 = scmp.gt.s32.totalorder %s22, 0
      // Predicated region
      $region37: #{double_conv_forward.4} parent=35 // pred_check
        %p401 = pneg %p400
      $region38: #{double_conv_forward.4} parent=35 // pred_check_branch
        %403 = sbr.rel (%p401) target = $region40
      $region39: #{double_conv_forward.4} parent=35 // pred_region
        %s404 = ssub.s32 %s272, 1
        %s405 = smul.u32 %s404, 16
        %s406 = scalar_lea.vmem %s251, %s405
        %v407 = vld [vmem:[%s406] sm:$0xff]
        %v408 = vld [vmem:[%s406 + $0x8] sm:$0xff]
        %v409 = vmul.f32 %v407, %v327
        %v410 = vmul.f32 %v408, %v327
        %v411 = vadd.f32 %v409, %v349
        %v412 = vadd.f32 %v410, %v349
        %v413 = vmax.f32 %v411, 0.0
        %v414 = vmax.f32 %v412, 0.0
        %415 = vst [vmem:[#allocation2 + $0x1] sm:$0xff] %v413
        %416 = vst [vmem:[#allocation2 + $0x9] sm:$0xff] %v414
      $region40: #{double_conv_forward.4} parent=35 // pred_fallthru
        _
      %p417 = scmp.lt.s32.totalorder %s22, 1
      // Predicated region
      $region41: #{double_conv_forward.4} parent=35 // pred_check
        %p418 = pneg %p417
      $region42: #{double_conv_forward.4} parent=35 // pred_check_branch
        %420 = sbr.rel (%p418) target = $region44
      $region43: #{double_conv_forward.4} parent=35 // pred_region
        %s421 = sadd.s32 %s272, 8
        %s422 = smul.u32 %s421, 16
        %s423 = scalar_lea.vmem %s251, %s422
        %v424 = vld [vmem:[%s423] sm:$0xff]
        %v425 = vld [vmem:[%s423 + $0x8] sm:$0xff]
        %v426 = vmul.f32 %v424, %v327
        %v427 = vmul.f32 %v425, %v327
        %v428 = vadd.f32 %v426, %v349
        %v429 = vadd.f32 %v427, %v349
        %v430 = vmax.f32 %v428, 0.0
        %v431 = vmax.f32 %v429, 0.0
        %s432 = scalar_lea.vmem [#allocation2], 216
        %433 = vst [vmem:[%s432 + $0x1] sm:$0xff] %v430
        %434 = vst [vmem:[%s432 + $0x9] sm:$0xff] %v431
      $region44: #{double_conv_forward.4} parent=35 // pred_fallthru
        _
      %v435 = vld [vmem:[#allocation2] sm:$0xff]
      %v436 = vld [vmem:[#allocation2 + $0x8] sm:$0xff]
      %v437 = vld [vmem:[#allocation2 + $0x18] sm:$0xff]
      %v438 = vld [vmem:[#allocation2 + $0x20] sm:$0xff]
      %v439 = vld [vmem:[#allocation2 + $0x30] sm:$0xff]
      %v440 = vld [vmem:[#allocation2 + $0x38] sm:$0xff]
      %v441 = vld [vmem:[#allocation2 + $0x48] sm:$0xff]
      %v442 = vld [vmem:[#allocation2 + $0x50] sm:$0xff]
      %v443 = vld [vmem:[#allocation2 + $0x60] sm:$0xff]
      %v444 = vld [vmem:[#allocation2 + $0x68] sm:$0xff]
      %v445 = vld [vmem:[#allocation2 + $0x78] sm:$0xff]
      %v446 = vld [vmem:[#allocation2 + $0x80] sm:$0xff]
      %v447 = vld [vmem:[#allocation2 + $0x90] sm:$0xff]
      %v448 = vld [vmem:[#allocation2 + $0x98] sm:$0xff]
      %v449 = vld [vmem:[#allocation2 + $0xa8] sm:$0xff]
      %v450 = vld [vmem:[#allocation2 + $0xb0] sm:$0xff]
      %v451 = vpack.c.bf16 %v436, %v435
      %v452 = vpack.c.bf16 %v438, %v437
      %v453 = vpack.c.bf16 %v440, %v439
      %v454 = vpack.c.bf16 %v442, %v441
      %v455 = vpack.c.bf16 %v444, %v443
      %v456 = vpack.c.bf16 %v446, %v445
      %v457 = vpack.c.bf16 %v448, %v447
      %v458 = vpack.c.bf16 %v450, %v449
      %459 = vst [vmem:[#allocation3] sm:$0xff] %v451
      %460 = vst [vmem:[#allocation3 + $0x48] sm:$0xff] %v452
      %461 = vst [vmem:[#allocation3 + $0x90] sm:$0xff] %v453
      %462 = vst [vmem:[#allocation3 + $0xd8] sm:$0xff] %v454
      %463 = vst [vmem:[#allocation3 + $0x120] sm:$0xff] %v455
      %464 = vst [vmem:[#allocation3 + $0x168] sm:$0xff] %v456
      %465 = vst [vmem:[#allocation3 + $0x1b0] sm:$0xff] %v457
      %466 = vst [vmem:[#allocation3 + $0x1f8] sm:$0xff] %v458
      %v467 = vld [vmem:[#allocation2 + $0x1] sm:$0xff]
      %v468 = vld [vmem:[#allocation2 + $0x9] sm:$0xff]
      %v469 = vld [vmem:[#allocation2 + $0x19] sm:$0xff]
      %v470 = vld [vmem:[#allocation2 + $0x21] sm:$0xff]
      %v471 = vld [vmem:[#allocation2 + $0x31] sm:$0xff]
      %v472 = vld [vmem:[#allocation2 + $0x39] sm:$0xff]
      %v473 = vld [vmem:[#allocation2 + $0x49] sm:$0xff]
      %v474 = vld [vmem:[#allocation2 + $0x51] sm:$0xff]
      %v475 = vld [vmem:[#allocation2 + $0x61] sm:$0xff]
      %v476 = vld [vmem:[#allocation2 + $0x69] sm:$0xff]
      %v477 = vld [vmem:[#allocation2 + $0x79] sm:$0xff]
      %v478 = vld [vmem:[#allocation2 + $0x81] sm:$0xff]
      %v479 = vld [vmem:[#allocation2 + $0x91] sm:$0xff]
      %v480 = vld [vmem:[#allocation2 + $0x99] sm:$0xff]
      %v481 = vld [vmem:[#allocation2 + $0xa9] sm:$0xff]
      %v482 = vld [vmem:[#allocation2 + $0xb1] sm:$0xff]
      %v483 = vpack.c.bf16 %v468, %v467
      %v484 = vpack.c.bf16 %v470, %v469
      %v485 = vpack.c.bf16 %v472, %v471
      %v486 = vpack.c.bf16 %v474, %v473
      %v487 = vpack.c.bf16 %v476, %v475
      %v488 = vpack.c.bf16 %v478, %v477
      %v489 = vpack.c.bf16 %v480, %v479
      %v490 = vpack.c.bf16 %v482, %v481
      %491 = vst [vmem:[#allocation3 + $0x8] sm:$0xff] %v483
      %492 = vst [vmem:[#allocation3 + $0x50] sm:$0xff] %v484
      %493 = vst [vmem:[#allocation3 + $0x98] sm:$0xff] %v485
      %494 = vst [vmem:[#allocation3 + $0xe0] sm:$0xff] %v486
      %495 = vst [vmem:[#allocation3 + $0x128] sm:$0xff] %v487
      %496 = vst [vmem:[#allocation3 + $0x170] sm:$0xff] %v488
      %497 = vst [vmem:[#allocation3 + $0x1b8] sm:$0xff] %v489
      %498 = vst [vmem:[#allocation3 + $0x200] sm:$0xff] %v490
      %v499 = vld [vmem:[#allocation2 + $0x2] sm:$0xff]
      %v500 = vld [vmem:[#allocation2 + $0xa] sm:$0xff]
      %v501 = vld [vmem:[#allocation2 + $0x1a] sm:$0xff]
      %v502 = vld [vmem:[#allocation2 + $0x22] sm:$0xff]
      %v503 = vld [vmem:[#allocation2 + $0x32] sm:$0xff]
      %v504 = vld [vmem:[#allocation2 + $0x3a] sm:$0xff]
      %v505 = vld [vmem:[#allocation2 + $0x4a] sm:$0xff]
      %v506 = vld [vmem:[#allocation2 + $0x52] sm:$0xff]
      %v507 = vld [vmem:[#allocation2 + $0x62] sm:$0xff]
      %v508 = vld [vmem:[#allocation2 + $0x6a] sm:$0xff]
      %v509 = vld [vmem:[#allocation2 + $0x7a] sm:$0xff]
      %v510 = vld [vmem:[#allocation2 + $0x82] sm:$0xff]
      %v511 = vld [vmem:[#allocation2 + $0x92] sm:$0xff]
      %v512 = vld [vmem:[#allocation2 + $0x9a] sm:$0xff]
      %v513 = vld [vmem:[#allocation2 + $0xaa] sm:$0xff]
      %v514 = vld [vmem:[#allocation2 + $0xb2] sm:$0xff]
      %v515 = vpack.c.bf16 %v500, %v499
      %v516 = vpack.c.bf16 %v502, %v501
      %v517 = vpack.c.bf16 %v504, %v503
      %v518 = vpack.c.bf16 %v506, %v505
      %v519 = vpack.c.bf16 %v508, %v507
      %v520 = vpack.c.bf16 %v510, %v509
      %v521 = vpack.c.bf16 %v512, %v511
      %v522 = vpack.c.bf16 %v514, %v513
      %523 = vst [vmem:[#allocation3 + $0x10] sm:$0xff] %v515
      %524 = vst [vmem:[#allocation3 + $0x58] sm:$0xff] %v516
      %525 = vst [vmem:[#allocation3 + $0xa0] sm:$0xff] %v517
      %526 = vst [vmem:[#allocation3 + $0xe8] sm:$0xff] %v518
      %527 = vst [vmem:[#allocation3 + $0x130] sm:$0xff] %v519
      %528 = vst [vmem:[#allocation3 + $0x178] sm:$0xff] %v520
      %529 = vst [vmem:[#allocation3 + $0x1c0] sm:$0xff] %v521
      %530 = vst [vmem:[#allocation3 + $0x208] sm:$0xff] %v522
      %v531 = vld [vmem:[%s383] sm:$0xff]
      %v532 = vld [vmem:[%s383 + $0x8] sm:$0xff]
      %v533 = vld [vmem:[%s383 + $0x18] sm:$0xff]
      %v534 = vld [vmem:[%s383 + $0x20] sm:$0xff]
      %v535 = vld [vmem:[%s383 + $0x30] sm:$0xff]
      %v536 = vld [vmem:[%s383 + $0x38] sm:$0xff]
      %v537 = vld [vmem:[%s383 + $0x48] sm:$0xff]
      %v538 = vld [vmem:[%s383 + $0x50] sm:$0xff]
      %v539 = vld [vmem:[%s383 + $0x60] sm:$0xff]
      %v540 = vld [vmem:[%s383 + $0x68] sm:$0xff]
      %v541 = vld [vmem:[%s383 + $0x78] sm:$0xff]
      %v542 = vld [vmem:[%s383 + $0x80] sm:$0xff]
      %v543 = vld [vmem:[%s383 + $0x90] sm:$0xff]
      %v544 = vld [vmem:[%s383 + $0x98] sm:$0xff]
      %v545 = vld [vmem:[%s383 + $0xa8] sm:$0xff]
      %v546 = vld [vmem:[%s383 + $0xb0] sm:$0xff]
      %v547 = vpack.c.bf16 %v532, %v531
      %v548 = vpack.c.bf16 %v534, %v533
      %v549 = vpack.c.bf16 %v536, %v535
      %v550 = vpack.c.bf16 %v538, %v537
      %v551 = vpack.c.bf16 %v540, %v539
      %v552 = vpack.c.bf16 %v542, %v541
      %v553 = vpack.c.bf16 %v544, %v543
      %v554 = vpack.c.bf16 %v546, %v545
      %555 = vst [vmem:[#allocation3 + $0x18] sm:$0xff] %v547
      %556 = vst [vmem:[#allocation3 + $0x60] sm:$0xff] %v548
      %557 = vst [vmem:[#allocation3 + $0xa8] sm:$0xff] %v549
      %558 = vst [vmem:[#allocation3 + $0xf0] sm:$0xff] %v550
      %559 = vst [vmem:[#allocation3 + $0x138] sm:$0xff] %v551
      %560 = vst [vmem:[#allocation3 + $0x180] sm:$0xff] %v552
      %561 = vst [vmem:[#allocation3 + $0x1c8] sm:$0xff] %v553
      %562 = vst [vmem:[#allocation3 + $0x210] sm:$0xff] %v554
      %v563 = vld [vmem:[%s383 + $0x1] sm:$0xff]
      %v564 = vld [vmem:[%s383 + $0x9] sm:$0xff]
      %v565 = vld [vmem:[%s383 + $0x19] sm:$0xff]
      %v566 = vld [vmem:[%s383 + $0x21] sm:$0xff]
      %v567 = vld [vmem:[%s383 + $0x31] sm:$0xff]
      %v568 = vld [vmem:[%s383 + $0x39] sm:$0xff]
      %v569 = vld [vmem:[%s383 + $0x49] sm:$0xff]
      %v570 = vld [vmem:[%s383 + $0x51] sm:$0xff]
      %v571 = vld [vmem:[%s383 + $0x61] sm:$0xff]
      %v572 = vld [vmem:[%s383 + $0x69] sm:$0xff]
      %v573 = vld [vmem:[%s383 + $0x79] sm:$0xff]
      %v574 = vld [vmem:[%s383 + $0x81] sm:$0xff]
      %v575 = vld [vmem:[%s383 + $0x91] sm:$0xff]
      %v576 = vld [vmem:[%s383 + $0x99] sm:$0xff]
      %v577 = vld [vmem:[%s383 + $0xa9] sm:$0xff]
      %v578 = vld [vmem:[%s383 + $0xb1] sm:$0xff]
      %v579 = vpack.c.bf16 %v564, %v563
      %v580 = vpack.c.bf16 %v566, %v565
      %v581 = vpack.c.bf16 %v568, %v567
      %v582 = vpack.c.bf16 %v570, %v569
      %v583 = vpack.c.bf16 %v572, %v571
      %v584 = vpack.c.bf16 %v574, %v573
      %v585 = vpack.c.bf16 %v576, %v575
      %v586 = vpack.c.bf16 %v578, %v577
      %587 = vst [vmem:[#allocation3 + $0x20] sm:$0xff] %v579
      %588 = vst [vmem:[#allocation3 + $0x68] sm:$0xff] %v580
      %589 = vst [vmem:[#allocation3 + $0xb0] sm:$0xff] %v581
      %590 = vst [vmem:[#allocation3 + $0xf8] sm:$0xff] %v582
      %591 = vst [vmem:[#allocation3 + $0x140] sm:$0xff] %v583
      %592 = vst [vmem:[#allocation3 + $0x188] sm:$0xff] %v584
      %593 = vst [vmem:[#allocation3 + $0x1d0] sm:$0xff] %v585
      %594 = vst [vmem:[#allocation3 + $0x218] sm:$0xff] %v586
      %v595 = vld [vmem:[%s383 + $0x2] sm:$0xff]
      %v596 = vld [vmem:[%s383 + $0xa] sm:$0xff]
      %v597 = vld [vmem:[%s383 + $0x1a] sm:$0xff]
      %v598 = vld [vmem:[%s383 + $0x22] sm:$0xff]
      %v599 = vld [vmem:[%s383 + $0x32] sm:$0xff]
      %v600 = vld [vmem:[%s383 + $0x3a] sm:$0xff]
      %v601 = vld [vmem:[%s383 + $0x4a] sm:$0xff]
      %v602 = vld [vmem:[%s383 + $0x52] sm:$0xff]
      %v603 = vld [vmem:[%s383 + $0x62] sm:$0xff]
      %v604 = vld [vmem:[%s383 + $0x6a] sm:$0xff]
      %v605 = vld [vmem:[%s383 + $0x7a] sm:$0xff]
      %v606 = vld [vmem:[%s383 + $0x82] sm:$0xff]
      %v607 = vld [vmem:[%s383 + $0x92] sm:$0xff]
      %v608 = vld [vmem:[%s383 + $0x9a] sm:$0xff]
      %v609 = vld [vmem:[%s383 + $0xaa] sm:$0xff]
      %v610 = vld [vmem:[%s383 + $0xb2] sm:$0xff]
      %v611 = vpack.c.bf16 %v596, %v595
      %v612 = vpack.c.bf16 %v598, %v597
      %v613 = vpack.c.bf16 %v600, %v599
      %v614 = vpack.c.bf16 %v602, %v601
      %v615 = vpack.c.bf16 %v604, %v603
      %v616 = vpack.c.bf16 %v606, %v605
      %v617 = vpack.c.bf16 %v608, %v607
      %v618 = vpack.c.bf16 %v610, %v609
      %619 = vst [vmem:[#allocation3 + $0x28] sm:$0xff] %v611
      %620 = vst [vmem:[#allocation3 + $0x70] sm:$0xff] %v612
      %621 = vst [vmem:[#allocation3 + $0xb8] sm:$0xff] %v613
      %622 = vst [vmem:[#allocation3 + $0x100] sm:$0xff] %v614
      %623 = vst [vmem:[#allocation3 + $0x148] sm:$0xff] %v615
      %624 = vst [vmem:[#allocation3 + $0x190] sm:$0xff] %v616
      %625 = vst [vmem:[#allocation3 + $0x1d8] sm:$0xff] %v617
      %626 = vst [vmem:[#allocation3 + $0x220] sm:$0xff] %v618
      %s627 = scalar_lea.vmem [#allocation2], 48
      %v628 = vld [vmem:[%s627] sm:$0xff]
      %v629 = vld [vmem:[%s627 + $0x8] sm:$0xff]
      %v630 = vld [vmem:[%s627 + $0x18] sm:$0xff]
      %v631 = vld [vmem:[%s627 + $0x20] sm:$0xff]
      %v632 = vld [vmem:[%s627 + $0x30] sm:$0xff]
      %v633 = vld [vmem:[%s627 + $0x38] sm:$0xff]
      %v634 = vld [vmem:[%s627 + $0x48] sm:$0xff]
      %v635 = vld [vmem:[%s627 + $0x50] sm:$0xff]
      %v636 = vld [vmem:[%s627 + $0x60] sm:$0xff]
      %v637 = vld [vmem:[%s627 + $0x68] sm:$0xff]
      %v638 = vld [vmem:[%s627 + $0x78] sm:$0xff]
      %v639 = vld [vmem:[%s627 + $0x80] sm:$0xff]
      %v640 = vld [vmem:[%s627 + $0x90] sm:$0xff]
      %v641 = vld [vmem:[%s627 + $0x98] sm:$0xff]
      %v642 = vld [vmem:[%s627 + $0xa8] sm:$0xff]
      %v643 = vld [vmem:[%s627 + $0xb0] sm:$0xff]
      %v644 = vpack.c.bf16 %v629, %v628
      %v645 = vpack.c.bf16 %v631, %v630
      %v646 = vpack.c.bf16 %v633, %v632
      %v647 = vpack.c.bf16 %v635, %v634
      %v648 = vpack.c.bf16 %v637, %v636
      %v649 = vpack.c.bf16 %v639, %v638
      %v650 = vpack.c.bf16 %v641, %v640
      %v651 = vpack.c.bf16 %v643, %v642
      %652 = vst [vmem:[#allocation3 + $0x30] sm:$0xff] %v644
      %653 = vst [vmem:[#allocation3 + $0x78] sm:$0xff] %v645
      %654 = vst [vmem:[#allocation3 + $0xc0] sm:$0xff] %v646
      %655 = vst [vmem:[#allocation3 + $0x108] sm:$0xff] %v647
      %656 = vst [vmem:[#allocation3 + $0x150] sm:$0xff] %v648
      %657 = vst [vmem:[#allocation3 + $0x198] sm:$0xff] %v649
      %658 = vst [vmem:[#allocation3 + $0x1e0] sm:$0xff] %v650
      %659 = vst [vmem:[#allocation3 + $0x228] sm:$0xff] %v651
      %v660 = vld [vmem:[%s627 + $0x1] sm:$0xff]
      %v661 = vld [vmem:[%s627 + $0x9] sm:$0xff]
      %v662 = vld [vmem:[%s627 + $0x19] sm:$0xff]
      %v663 = vld [vmem:[%s627 + $0x21] sm:$0xff]
      %v664 = vld [vmem:[%s627 + $0x31] sm:$0xff]
      %v665 = vld [vmem:[%s627 + $0x39] sm:$0xff]
      %v666 = vld [vmem:[%s627 + $0x49] sm:$0xff]
      %v667 = vld [vmem:[%s627 + $0x51] sm:$0xff]
      %v668 = vld [vmem:[%s627 + $0x61] sm:$0xff]
      %v669 = vld [vmem:[%s627 + $0x69] sm:$0xff]
      %v670 = vld [vmem:[%s627 + $0x79] sm:$0xff]
      %v671 = vld [vmem:[%s627 + $0x81] sm:$0xff]
      %v672 = vld [vmem:[%s627 + $0x91] sm:$0xff]
      %v673 = vld [vmem:[%s627 + $0x99] sm:$0xff]
      %v674 = vld [vmem:[%s627 + $0xa9] sm:$0xff]
      %v675 = vld [vmem:[%s627 + $0xb1] sm:$0xff]
      %v676 = vpack.c.bf16 %v661, %v660
      %v677 = vpack.c.bf16 %v663, %v662
      %v678 = vpack.c.bf16 %v665, %v664
      %v679 = vpack.c.bf16 %v667, %v666
      %v680 = vpack.c.bf16 %v669, %v668
      %v681 = vpack.c.bf16 %v671, %v670
      %v682 = vpack.c.bf16 %v673, %v672
      %v683 = vpack.c.bf16 %v675, %v674
      %684 = vst [vmem:[#allocation3 + $0x38] sm:$0xff] %v676
      %685 = vst [vmem:[#allocation3 + $0x80] sm:$0xff] %v677
      %686 = vst [vmem:[#allocation3 + $0xc8] sm:$0xff] %v678
      %687 = vst [vmem:[#allocation3 + $0x110] sm:$0xff] %v679
      %688 = vst [vmem:[#allocation3 + $0x158] sm:$0xff] %v680
      %689 = vst [vmem:[#allocation3 + $0x1a0] sm:$0xff] %v681
      %690 = vst [vmem:[#allocation3 + $0x1e8] sm:$0xff] %v682
      %691 = vst [vmem:[#allocation3 + $0x230] sm:$0xff] %v683
      %v692 = vld [vmem:[%s627 + $0x2] sm:$0xff]
      %v693 = vld [vmem:[%s627 + $0xa] sm:$0xff]
      %v694 = vld [vmem:[%s627 + $0x1a] sm:$0xff]
      %v695 = vld [vmem:[%s627 + $0x22] sm:$0xff]
      %v696 = vld [vmem:[%s627 + $0x32] sm:$0xff]
      %v697 = vld [vmem:[%s627 + $0x3a] sm:$0xff]
      %v698 = vld [vmem:[%s627 + $0x4a] sm:$0xff]
      %v699 = vld [vmem:[%s627 + $0x52] sm:$0xff]
      %v700 = vld [vmem:[%s627 + $0x62] sm:$0xff]
      %v701 = vld [vmem:[%s627 + $0x6a] sm:$0xff]
      %v702 = vld [vmem:[%s627 + $0x7a] sm:$0xff]
      %v703 = vld [vmem:[%s627 + $0x82] sm:$0xff]
      %v704 = vld [vmem:[%s627 + $0x92] sm:$0xff]
      %v705 = vld [vmem:[%s627 + $0x9a] sm:$0xff]
      %v706 = vld [vmem:[%s627 + $0xaa] sm:$0xff]
      %v707 = vld [vmem:[%s627 + $0xb2] sm:$0xff]
      %v708 = vpack.c.bf16 %v693, %v692
      %v709 = vpack.c.bf16 %v695, %v694
      %v710 = vpack.c.bf16 %v697, %v696
      %v711 = vpack.c.bf16 %v699, %v698
      %v712 = vpack.c.bf16 %v701, %v700
      %v713 = vpack.c.bf16 %v703, %v702
      %v714 = vpack.c.bf16 %v705, %v704
      %v715 = vpack.c.bf16 %v707, %v706
      %716 = vst [vmem:[#allocation3 + $0x40] sm:$0xff] %v708
      %717 = vst [vmem:[#allocation3 + $0x88] sm:$0xff] %v709
      %718 = vst [vmem:[#allocation3 + $0xd0] sm:$0xff] %v710
      %719 = vst [vmem:[#allocation3 + $0x118] sm:$0xff] %v711
      %720 = vst [vmem:[#allocation3 + $0x160] sm:$0xff] %v712
      %721 = vst [vmem:[#allocation3 + $0x1a8] sm:$0xff] %v713
      %722 = vst [vmem:[#allocation3 + $0x1f0] sm:$0xff] %v714
      %723 = vst [vmem:[#allocation3 + $0x238] sm:$0xff] %v715
      %v724 = vld [vmem:[#allocation3] sm:$0xff]
      %v725 = vld [vmem:[#allocation3 + $0x8] sm:$0xff]
      %v726 = vld [vmem:[#allocation3 + $0x10] sm:$0xff]
      %v727 = vld [vmem:[#allocation3 + $0x18] sm:$0xff]
      %v728 = vld [vmem:[#allocation3 + $0x20] sm:$0xff]
      %v729 = vld [vmem:[#allocation3 + $0x28] sm:$0xff]
      %v730 = vld [vmem:[#allocation3 + $0x30] sm:$0xff]
      %v731 = vld [vmem:[#allocation3 + $0x38] sm:$0xff]
      %v732 = vld [vmem:[#allocation3 + $0x40] sm:$0xff]
      %v733 = vld [vmem:[#allocation3 + $0x48] sm:$0xff]
      %v734 = vld [vmem:[#allocation3 + $0x50] sm:$0xff]
      %v735 = vld [vmem:[#allocation3 + $0x58] sm:$0xff]
      %v736 = vld [vmem:[#allocation3 + $0x60] sm:$0xff]
      %v737 = vld [vmem:[#allocation3 + $0x68] sm:$0xff]
      %v738 = vld [vmem:[#allocation3 + $0x70] sm:$0xff]
      %v739 = vld [vmem:[#allocation3 + $0x78] sm:$0xff]
      %v740 = vld [vmem:[#allocation3 + $0x80] sm:$0xff]
      %v741 = vld [vmem:[#allocation3 + $0x88] sm:$0xff]
      %v742 = vld [vmem:[#allocation3 + $0x90] sm:$0xff]
      %v743 = vld [vmem:[#allocation3 + $0x98] sm:$0xff]
      %v744 = vld [vmem:[#allocation3 + $0xa0] sm:$0xff]
      %v745 = vld [vmem:[#allocation3 + $0xa8] sm:$0xff]
      %v746 = vld [vmem:[#allocation3 + $0xb0] sm:$0xff]
      %v747 = vld [vmem:[#allocation3 + $0xb8] sm:$0xff]
      %v748 = vld [vmem:[#allocation3 + $0xc0] sm:$0xff]
      %v749 = vld [vmem:[#allocation3 + $0xc8] sm:$0xff]
      %v750 = vld [vmem:[#allocation3 + $0xd0] sm:$0xff]
      %v751 = vld [vmem:[#allocation3 + $0xd8] sm:$0xff]
      %v752 = vld [vmem:[#allocation3 + $0xe0] sm:$0xff]
      %v753 = vld [vmem:[#allocation3 + $0xe8] sm:$0xff]
      %v754 = vld [vmem:[#allocation3 + $0xf0] sm:$0xff]
      %v755 = vld [vmem:[#allocation3 + $0xf8] sm:$0xff]
      %v756 = vld [vmem:[#allocation3 + $0x100] sm:$0xff]
      %v757 = vld [vmem:[#allocation3 + $0x108] sm:$0xff]
      %v758 = vld [vmem:[#allocation3 + $0x110] sm:$0xff]
      %v759 = vld [vmem:[#allocation3 + $0x118] sm:$0xff]
      %v760 = vld [vmem:[#allocation3 + $0x120] sm:$0xff]
      %v761 = vld [vmem:[#allocation3 + $0x128] sm:$0xff]
      %v762 = vld [vmem:[#allocation3 + $0x130] sm:$0xff]
      %v763 = vld [vmem:[#allocation3 + $0x138] sm:$0xff]
      %v764 = vld [vmem:[#allocation3 + $0x140] sm:$0xff]
      %v765 = vld [vmem:[#allocation3 + $0x148] sm:$0xff]
      %v766 = vld [vmem:[#allocation3 + $0x150] sm:$0xff]
      %v767 = vld [vmem:[#allocation3 + $0x158] sm:$0xff]
      %v768 = vld [vmem:[#allocation3 + $0x160] sm:$0xff]
      %v769 = vld [vmem:[#allocation3 + $0x168] sm:$0xff]
      %v770 = vld [vmem:[#allocation3 + $0x170] sm:$0xff]
      %v771 = vld [vmem:[#allocation3 + $0x178] sm:$0xff]
      %v772 = vld [vmem:[#allocation3 + $0x180] sm:$0xff]
      %v773 = vld [vmem:[#allocation3 + $0x188] sm:$0xff]
      %v774 = vld [vmem:[#allocation3 + $0x190] sm:$0xff]
      %v775 = vld [vmem:[#allocation3 + $0x198] sm:$0xff]
      %v776 = vld [vmem:[#allocation3 + $0x1a0] sm:$0xff]
      %v777 = vld [vmem:[#allocation3 + $0x1a8] sm:$0xff]
      %v778 = vld [vmem:[#allocation3 + $0x1b0] sm:$0xff]
      %v779 = vld [vmem:[#allocation3 + $0x1b8] sm:$0xff]
      %v780 = vld [vmem:[#allocation3 + $0x1c0] sm:$0xff]
      %v781 = vld [vmem:[#allocation3 + $0x1c8] sm:$0xff]
      %v782 = vld [vmem:[#allocation3 + $0x1d0] sm:$0xff]
      %v783 = vld [vmem:[#allocation3 + $0x1d8] sm:$0xff]
      %v784 = vld [vmem:[#allocation3 + $0x1e0] sm:$0xff]
      %v785 = vld [vmem:[#allocation3 + $0x1e8] sm:$0xff]
      %v786 = vld [vmem:[#allocation3 + $0x1f0] sm:$0xff]
      %v787 = vld [vmem:[#allocation3 + $0x1f8] sm:$0xff]
      %v788 = vld [vmem:[#allocation3 + $0x200] sm:$0xff]
      %v789 = vld [vmem:[#allocation3 + $0x208] sm:$0xff]
      %v790 = vld [vmem:[#allocation3 + $0x210] sm:$0xff]
      %v791 = vld [vmem:[#allocation3 + $0x218] sm:$0xff]
      %v792 = vld [vmem:[#allocation3 + $0x220] sm:$0xff]
      %v793 = vld [vmem:[#allocation3 + $0x228] sm:$0xff]
      %v794 = vld [vmem:[#allocation3 + $0x230] sm:$0xff]
      %v795 = vld [vmem:[#allocation3 + $0x238] sm:$0xff]
      %v796 = vld [vmem:[%s1] sm:$0xf]
      %v797 = vld [vmem:[%s1 + $0x4] sm:$0xf]
      %v798 = vld [vmem:[%s1 + $0x8] sm:$0xf]
      %v799 = vld [vmem:[%s1 + $0xc] sm:$0xf]
      %v800 = vld [vmem:[%s1 + $0x10] sm:$0xf]
      %v801 = vld [vmem:[%s1 + $0x14] sm:$0xf]
      %v802 = vld [vmem:[%s1 + $0x18] sm:$0xf]
      %v803 = vld [vmem:[%s1 + $0x1c] sm:$0xf]
      %v804 = vld [vmem:[%s1 + $0x20] sm:$0xf]
      %v805 = vld [vmem:[%s1 + $0x24] sm:$0xf]
      %v806 = vld [vmem:[%s1 + $0x28] sm:$0xf]
      %v807 = vld [vmem:[%s1 + $0x2c] sm:$0xf]
      %v808 = vld [vmem:[%s1 + $0x30] sm:$0xf]
      %v809 = vld [vmem:[%s1 + $0x34] sm:$0xf]
      %v810 = vld [vmem:[%s1 + $0x38] sm:$0xf]
      %v811 = vld [vmem:[%s1 + $0x3c] sm:$0xf]
      %v812 = vld [vmem:[%s1 + $0x40] sm:$0xf]
      %v813 = vld [vmem:[%s1 + $0x44] sm:$0xf]
      %v814 = vld [vmem:[%s1 + $0x48] sm:$0xf]
      %v815 = vld [vmem:[%s1 + $0x4c] sm:$0xf]
      %v816 = vld [vmem:[%s1 + $0x50] sm:$0xf]
      %v817 = vld [vmem:[%s1 + $0x54] sm:$0xf]
      %v818 = vld [vmem:[%s1 + $0x58] sm:$0xf]
      %v819 = vld [vmem:[%s1 + $0x5c] sm:$0xf]
      %v820 = vld [vmem:[%s1 + $0x60] sm:$0xf]
      %v821 = vld [vmem:[%s1 + $0x64] sm:$0xf]
      %v822 = vld [vmem:[%s1 + $0x68] sm:$0xf]
      %v823 = vld [vmem:[%s1 + $0x6c] sm:$0xf]
      %v824 = vld [vmem:[%s1 + $0x70] sm:$0xf]
      %v825 = vld [vmem:[%s1 + $0x74] sm:$0xf]
      %v826 = vld [vmem:[%s1 + $0x78] sm:$0xf]
      %v827 = vld [vmem:[%s1 + $0x7c] sm:$0xf]
      %v828 = vld [vmem:[%s1 + $0x80] sm:$0xf]
      %v829 = vld [vmem:[%s1 + $0x84] sm:$0xf]
      %v830 = vld [vmem:[%s1 + $0x88] sm:$0xf]
      %v831 = vld [vmem:[%s1 + $0x8c] sm:$0xf]
      %v832 = vld [vmem:[%s1 + $0x90] sm:$0xf]
      %v833 = vld [vmem:[%s1 + $0x94] sm:$0xf]
      %v834 = vld [vmem:[%s1 + $0x98] sm:$0xf]
      %v835 = vld [vmem:[%s1 + $0x9c] sm:$0xf]
      %v836 = vld [vmem:[%s1 + $0xa0] sm:$0xf]
      %v837 = vld [vmem:[%s1 + $0xa4] sm:$0xf]
      %v838 = vld [vmem:[%s1 + $0xa8] sm:$0xf]
      %v839 = vld [vmem:[%s1 + $0xac] sm:$0xf]
      %v840 = vld [vmem:[%s1 + $0xb0] sm:$0xf]
      %v841 = vld [vmem:[%s1 + $0xb4] sm:$0xf]
      %v842 = vld [vmem:[%s1 + $0xb8] sm:$0xf]
      %v843 = vld [vmem:[%s1 + $0xbc] sm:$0xf]
      %v844 = vld [vmem:[%s1 + $0xc0] sm:$0xf]
      %v845 = vld [vmem:[%s1 + $0xc4] sm:$0xf]
      %v846 = vld [vmem:[%s1 + $0xc8] sm:$0xf]
      %v847 = vld [vmem:[%s1 + $0xcc] sm:$0xf]
      %v848 = vld [vmem:[%s1 + $0xd0] sm:$0xf]
      %v849 = vld [vmem:[%s1 + $0xd4] sm:$0xf]
      %v850 = vld [vmem:[%s1 + $0xd8] sm:$0xf]
      %v851 = vld [vmem:[%s1 + $0xdc] sm:$0xf]
      %v852 = vld [vmem:[%s1 + $0xe0] sm:$0xf]
      %v853 = vld [vmem:[%s1 + $0xe4] sm:$0xf]
      %v854 = vld [vmem:[%s1 + $0xe8] sm:$0xf]
      %v855 = vld [vmem:[%s1 + $0xec] sm:$0xf]
      %v856 = vld [vmem:[%s1 + $0xf0] sm:$0xf]
      %v857 = vld [vmem:[%s1 + $0xf4] sm:$0xf]
      %v858 = vld [vmem:[%s1 + $0xf8] sm:$0xf]
      %v859 = vld [vmem:[%s1 + $0xfc] sm:$0xf]
      %v860 = vld [vmem:[%s1 + $0x100] sm:$0xf]
      %v861 = vld [vmem:[%s1 + $0x104] sm:$0xf]
      %v862 = vld [vmem:[%s1 + $0x108] sm:$0xf]
      %v863 = vld [vmem:[%s1 + $0x10c] sm:$0xf]
      %v864 = vld [vmem:[%s1 + $0x110] sm:$0xf]
      %v865 = vld [vmem:[%s1 + $0x114] sm:$0xf]
      %v866 = vld [vmem:[%s1 + $0x118] sm:$0xf]
      %v867 = vld [vmem:[%s1 + $0x11c] sm:$0xf]
      %v868 = vld [vmem:[%s1 + $0x120] sm:$0xf]
      %v869 = vld [vmem:[%s1 + $0x124] sm:$0xf]
      %v870 = vld [vmem:[%s1 + $0x128] sm:$0xf]
      %v871 = vld [vmem:[%s1 + $0x12c] sm:$0xf]
      %v872 = vld [vmem:[%s1 + $0x130] sm:$0xf]
      %v873 = vld [vmem:[%s1 + $0x134] sm:$0xf]
      %v874 = vld [vmem:[%s1 + $0x138] sm:$0xf]
      %v875 = vld [vmem:[%s1 + $0x13c] sm:$0xf]
      %v876 = vld [vmem:[%s1 + $0x140] sm:$0xf]
      %v877 = vld [vmem:[%s1 + $0x144] sm:$0xf]
      %v878 = vld [vmem:[%s1 + $0x148] sm:$0xf]
      %v879 = vld [vmem:[%s1 + $0x14c] sm:$0xf]
      %v880 = vld [vmem:[%s1 + $0x150] sm:$0xf]
      %v881 = vld [vmem:[%s1 + $0x154] sm:$0xf]
      %v882 = vld [vmem:[%s1 + $0x158] sm:$0xf]
      %v883 = vld [vmem:[%s1 + $0x15c] sm:$0xf]
      %v884 = vld [vmem:[%s1 + $0x160] sm:$0xf]
      %v885 = vld [vmem:[%s1 + $0x164] sm:$0xf]
      %v886 = vld [vmem:[%s1 + $0x168] sm:$0xf]
      %v887 = vld [vmem:[%s1 + $0x16c] sm:$0xf]
      %v888 = vld [vmem:[%s1 + $0x170] sm:$0xf]
      %v889 = vld [vmem:[%s1 + $0x174] sm:$0xf]
      %v890 = vld [vmem:[%s1 + $0x178] sm:$0xf]
      %v891 = vld [vmem:[%s1 + $0x17c] sm:$0xf]
      %v892 = vld [vmem:[%s1 + $0x180] sm:$0xf]
      %v893 = vld [vmem:[%s1 + $0x184] sm:$0xf]
      %v894 = vld [vmem:[%s1 + $0x188] sm:$0xf]
      %v895 = vld [vmem:[%s1 + $0x18c] sm:$0xf]
      %v896 = vld [vmem:[%s1 + $0x190] sm:$0xf]
      %v897 = vld [vmem:[%s1 + $0x194] sm:$0xf]
      %v898 = vld [vmem:[%s1 + $0x198] sm:$0xf]
      %v899 = vld [vmem:[%s1 + $0x19c] sm:$0xf]
      %v900 = vld [vmem:[%s1 + $0x1a0] sm:$0xf]
      %v901 = vld [vmem:[%s1 + $0x1a4] sm:$0xf]
      %v902 = vld [vmem:[%s1 + $0x1a8] sm:$0xf]
      %v903 = vld [vmem:[%s1 + $0x1ac] sm:$0xf]
      %v904 = vld [vmem:[%s1 + $0x1b0] sm:$0xf]
      %v905 = vld [vmem:[%s1 + $0x1b4] sm:$0xf]
      %v906 = vld [vmem:[%s1 + $0x1b8] sm:$0xf]
      %v907 = vld [vmem:[%s1 + $0x1bc] sm:$0xf]
      %v908 = vld [vmem:[%s1 + $0x1c0] sm:$0xf]
      %v909 = vld [vmem:[%s1 + $0x1c4] sm:$0xf]
      %v910 = vld [vmem:[%s1 + $0x1c8] sm:$0xf]
      %v911 = vld [vmem:[%s1 + $0x1cc] sm:$0xf]
      %v912 = vld [vmem:[%s1 + $0x1d0] sm:$0xf]
      %v913 = vld [vmem:[%s1 + $0x1d4] sm:$0xf]
      %v914 = vld [vmem:[%s1 + $0x1d8] sm:$0xf]
      %v915 = vld [vmem:[%s1 + $0x1dc] sm:$0xf]
      %v916 = vld [vmem:[%s1 + $0x1e0] sm:$0xf]
      %v917 = vld [vmem:[%s1 + $0x1e4] sm:$0xf]
      %v918 = vld [vmem:[%s1 + $0x1e8] sm:$0xf]
      %v919 = vld [vmem:[%s1 + $0x1ec] sm:$0xf]
      %v920 = vld [vmem:[%s1 + $0x1f0] sm:$0xf]
      %v921 = vld [vmem:[%s1 + $0x1f4] sm:$0xf]
      %v922 = vld [vmem:[%s1 + $0x1f8] sm:$0xf]
      %v923 = vld [vmem:[%s1 + $0x1fc] sm:$0xf]
      %v924 = vld [vmem:[%s1 + $0x200] sm:$0xf]
      %v925 = vld [vmem:[%s1 + $0x204] sm:$0xf]
      %v926 = vld [vmem:[%s1 + $0x208] sm:$0xf]
      %v927 = vld [vmem:[%s1 + $0x20c] sm:$0xf]
      %v928 = vld [vmem:[%s1 + $0x210] sm:$0xf]
      %v929 = vld [vmem:[%s1 + $0x214] sm:$0xf]
      %v930 = vld [vmem:[%s1 + $0x218] sm:$0xf]
      %v931 = vld [vmem:[%s1 + $0x21c] sm:$0xf]
      %v932 = vld [vmem:[%s1 + $0x220] sm:$0xf]
      %v933 = vld [vmem:[%s1 + $0x224] sm:$0xf]
      %v934 = vld [vmem:[%s1 + $0x228] sm:$0xf]
      %v935 = vld [vmem:[%s1 + $0x22c] sm:$0xf]
      %v936 = vld [vmem:[%s1 + $0x230] sm:$0xf]
      %v937 = vld [vmem:[%s1 + $0x234] sm:$0xf]
      %v938 = vld [vmem:[%s1 + $0x238] sm:$0xf]
      %v939 = vld [vmem:[%s1 + $0x23c] sm:$0xf]
      %v1084 = vunpack.c.l.b16 %v796
      %v1085 = vunpack.c.l.b16 %v797
      %v1086 = vunpack.c.l.b16 %v798
      %v1087 = vunpack.c.l.b16 %v799
      %v1088 = vunpack.c.l.b16 %v800
      %v1089 = vunpack.c.l.b16 %v801
      %v1090 = vunpack.c.l.b16 %v802
      %v1091 = vunpack.c.l.b16 %v803
      %v1092 = vunpack.c.l.b16 %v804
      %v1093 = vunpack.c.l.b16 %v805
      %v1094 = vunpack.c.l.b16 %v806
      %v1095 = vunpack.c.l.b16 %v807
      %v1096 = vunpack.c.l.b16 %v808
      %v1097 = vunpack.c.l.b16 %v809
      %v1098 = vunpack.c.l.b16 %v810
      %v1099 = vunpack.c.l.b16 %v811
      %v1100 = vunpack.c.l.b16 %v812
      %v1101 = vunpack.c.l.b16 %v813
      %v1102 = vunpack.c.l.b16 %v814
      %v1103 = vunpack.c.l.b16 %v815
      %v1104 = vunpack.c.l.b16 %v816
      %v1105 = vunpack.c.l.b16 %v817
      %v1106 = vunpack.c.l.b16 %v818
      %v1107 = vunpack.c.l.b16 %v819
      %v1108 = vunpack.c.l.b16 %v820
      %v1109 = vunpack.c.l.b16 %v821
      %v1110 = vunpack.c.l.b16 %v822
      %v1111 = vunpack.c.l.b16 %v823
      %v1112 = vunpack.c.l.b16 %v824
      %v1113 = vunpack.c.l.b16 %v825
      %v1114 = vunpack.c.l.b16 %v826
      %v1115 = vunpack.c.l.b16 %v827
      %v1116 = vunpack.c.l.b16 %v828
      %v1117 = vunpack.c.l.b16 %v829
      %v1118 = vunpack.c.l.b16 %v830
      %v1119 = vunpack.c.l.b16 %v831
      %v1120 = vunpack.c.l.b16 %v832
      %v1121 = vunpack.c.l.b16 %v833
      %v1122 = vunpack.c.l.b16 %v834
      %v1123 = vunpack.c.l.b16 %v835
      %v1124 = vunpack.c.l.b16 %v836
      %v1125 = vunpack.c.l.b16 %v837
      %v1126 = vunpack.c.l.b16 %v838
      %v1127 = vunpack.c.l.b16 %v839
      %v1128 = vunpack.c.l.b16 %v840
      %v1129 = vunpack.c.l.b16 %v841
      %v1130 = vunpack.c.l.b16 %v842
      %v1131 = vunpack.c.l.b16 %v843
      %v1132 = vunpack.c.l.b16 %v844
      %v1133 = vunpack.c.l.b16 %v845
      %v1134 = vunpack.c.l.b16 %v846
      %v1135 = vunpack.c.l.b16 %v847
      %v1136 = vunpack.c.l.b16 %v848
      %v1137 = vunpack.c.l.b16 %v849
      %v1138 = vunpack.c.l.b16 %v850
      %v1139 = vunpack.c.l.b16 %v851
      %v1140 = vunpack.c.l.b16 %v852
      %v1141 = vunpack.c.l.b16 %v853
      %v1142 = vunpack.c.l.b16 %v854
      %v1143 = vunpack.c.l.b16 %v855
      %v1144 = vunpack.c.l.b16 %v856
      %v1145 = vunpack.c.l.b16 %v857
      %v1146 = vunpack.c.l.b16 %v858
      %v1147 = vunpack.c.l.b16 %v859
      %v1148 = vunpack.c.l.b16 %v860
      %v1149 = vunpack.c.l.b16 %v861
      %v1150 = vunpack.c.l.b16 %v862
      %v1151 = vunpack.c.l.b16 %v863
      %v1152 = vunpack.c.l.b16 %v864
      %v1153 = vunpack.c.l.b16 %v865
      %v1154 = vunpack.c.l.b16 %v866
      %v1155 = vunpack.c.l.b16 %v867
      %v1156 = vunpack.c.l.b16 %v868
      %v1157 = vunpack.c.l.b16 %v869
      %v1158 = vunpack.c.l.b16 %v870
      %v1159 = vunpack.c.l.b16 %v871
      %v1160 = vunpack.c.l.b16 %v872
      %v1161 = vunpack.c.l.b16 %v873
      %v1162 = vunpack.c.l.b16 %v874
      %v1163 = vunpack.c.l.b16 %v875
      %v1164 = vunpack.c.l.b16 %v876
      %v1165 = vunpack.c.l.b16 %v877
      %v1166 = vunpack.c.l.b16 %v878
      %v1167 = vunpack.c.l.b16 %v879
      %v1168 = vunpack.c.l.b16 %v880
      %v1169 = vunpack.c.l.b16 %v881
      %v1170 = vunpack.c.l.b16 %v882
      %v1171 = vunpack.c.l.b16 %v883
      %v1172 = vunpack.c.l.b16 %v884
      %v1173 = vunpack.c.l.b16 %v885
      %v1174 = vunpack.c.l.b16 %v886
      %v1175 = vunpack.c.l.b16 %v887
      %v1176 = vunpack.c.l.b16 %v888
      %v1177 = vunpack.c.l.b16 %v889
      %v1178 = vunpack.c.l.b16 %v890
      %v1179 = vunpack.c.l.b16 %v891
      %v1180 = vunpack.c.l.b16 %v892
      %v1181 = vunpack.c.l.b16 %v893
      %v1182 = vunpack.c.l.b16 %v894
      %v1183 = vunpack.c.l.b16 %v895
      %v1184 = vunpack.c.l.b16 %v896
      %v1185 = vunpack.c.l.b16 %v897
      %v1186 = vunpack.c.l.b16 %v898
      %v1187 = vunpack.c.l.b16 %v899
      %v1188 = vunpack.c.l.b16 %v900
      %v1189 = vunpack.c.l.b16 %v901
      %v1190 = vunpack.c.l.b16 %v902
      %v1191 = vunpack.c.l.b16 %v903
      %v1192 = vunpack.c.l.b16 %v904
      %v1193 = vunpack.c.l.b16 %v905
      %v1194 = vunpack.c.l.b16 %v906
      %v1195 = vunpack.c.l.b16 %v907
      %v1196 = vunpack.c.l.b16 %v908
      %v1197 = vunpack.c.l.b16 %v909
      %v1198 = vunpack.c.l.b16 %v910
      %v1199 = vunpack.c.l.b16 %v911
      %v1200 = vunpack.c.l.b16 %v912
      %v1201 = vunpack.c.l.b16 %v913
      %v1202 = vunpack.c.l.b16 %v914
      %v1203 = vunpack.c.l.b16 %v915
      %v1204 = vunpack.c.l.b16 %v916
      %v1205 = vunpack.c.l.b16 %v917
      %v1206 = vunpack.c.l.b16 %v918
      %v1207 = vunpack.c.l.b16 %v919
      %v1208 = vunpack.c.l.b16 %v920
      %v1209 = vunpack.c.l.b16 %v921
      %v1210 = vunpack.c.l.b16 %v922
      %v1211 = vunpack.c.l.b16 %v923
      %v1212 = vunpack.c.l.b16 %v924
      %v1213 = vunpack.c.l.b16 %v925
      %v1214 = vunpack.c.l.b16 %v926
      %v1215 = vunpack.c.l.b16 %v927
      %v1216 = vunpack.c.l.b16 %v928
      %v1217 = vunpack.c.l.b16 %v929
      %v1218 = vunpack.c.l.b16 %v930
      %v1219 = vunpack.c.l.b16 %v931
      %v1220 = vunpack.c.l.b16 %v932
      %v1221 = vunpack.c.l.b16 %v933
      %v1222 = vunpack.c.l.b16 %v934
      %v1223 = vunpack.c.l.b16 %v935
      %v1224 = vunpack.c.l.b16 %v936
      %v1225 = vunpack.c.l.b16 %v937
      %v1226 = vunpack.c.l.b16 %v938
      %v1227 = vunpack.c.l.b16 %v939
      %v1228 = vpack.c.b16 %v1085, %v1084
      %v1229 = vpack.c.b16 %v1087, %v1086
      %v1230 = vpack.c.b16 %v1089, %v1088
      %v1231 = vpack.c.b16 %v1091, %v1090
      %v1232 = vpack.c.b16 %v1093, %v1092
      %v1233 = vpack.c.b16 %v1095, %v1094
      %v1234 = vpack.c.b16 %v1097, %v1096
      %v1235 = vpack.c.b16 %v1099, %v1098
      %v1236 = vpack.c.b16 %v1101, %v1100
      %v1237 = vpack.c.b16 %v1103, %v1102
      %v1238 = vpack.c.b16 %v1105, %v1104
      %v1239 = vpack.c.b16 %v1107, %v1106
      %v1240 = vpack.c.b16 %v1109, %v1108
      %v1241 = vpack.c.b16 %v1111, %v1110
      %v1242 = vpack.c.b16 %v1113, %v1112
      %v1243 = vpack.c.b16 %v1115, %v1114
      %v1244 = vpack.c.b16 %v1117, %v1116
      %v1245 = vpack.c.b16 %v1119, %v1118
      %v1246 = vpack.c.b16 %v1121, %v1120
      %v1247 = vpack.c.b16 %v1123, %v1122
      %v1248 = vpack.c.b16 %v1125, %v1124
      %v1249 = vpack.c.b16 %v1127, %v1126
      %v1250 = vpack.c.b16 %v1129, %v1128
      %v1251 = vpack.c.b16 %v1131, %v1130
      %v1252 = vpack.c.b16 %v1133, %v1132
      %v1253 = vpack.c.b16 %v1135, %v1134
      %v1254 = vpack.c.b16 %v1137, %v1136
      %v1255 = vpack.c.b16 %v1139, %v1138
      %v1256 = vpack.c.b16 %v1141, %v1140
      %v1257 = vpack.c.b16 %v1143, %v1142
      %v1258 = vpack.c.b16 %v1145, %v1144
      %v1259 = vpack.c.b16 %v1147, %v1146
      %v1260 = vpack.c.b16 %v1149, %v1148
      %v1261 = vpack.c.b16 %v1151, %v1150
      %v1262 = vpack.c.b16 %v1153, %v1152
      %v1263 = vpack.c.b16 %v1155, %v1154
      %v1264 = vpack.c.b16 %v1157, %v1156
      %v1265 = vpack.c.b16 %v1159, %v1158
      %v1266 = vpack.c.b16 %v1161, %v1160
      %v1267 = vpack.c.b16 %v1163, %v1162
      %v1268 = vpack.c.b16 %v1165, %v1164
      %v1269 = vpack.c.b16 %v1167, %v1166
      %v1270 = vpack.c.b16 %v1169, %v1168
      %v1271 = vpack.c.b16 %v1171, %v1170
      %v1272 = vpack.c.b16 %v1173, %v1172
      %v1273 = vpack.c.b16 %v1175, %v1174
      %v1274 = vpack.c.b16 %v1177, %v1176
      %v1275 = vpack.c.b16 %v1179, %v1178
      %v1276 = vpack.c.b16 %v1181, %v1180
      %v1277 = vpack.c.b16 %v1183, %v1182
      %v1278 = vpack.c.b16 %v1185, %v1184
      %v1279 = vpack.c.b16 %v1187, %v1186
      %v1280 = vpack.c.b16 %v1189, %v1188
      %v1281 = vpack.c.b16 %v1191, %v1190
      %v1282 = vpack.c.b16 %v1193, %v1192
      %v1283 = vpack.c.b16 %v1195, %v1194
      %v1284 = vpack.c.b16 %v1197, %v1196
      %v1285 = vpack.c.b16 %v1199, %v1198
      %v1286 = vpack.c.b16 %v1201, %v1200
      %v1287 = vpack.c.b16 %v1203, %v1202
      %v1288 = vpack.c.b16 %v1205, %v1204
      %v1289 = vpack.c.b16 %v1207, %v1206
      %v1290 = vpack.c.b16 %v1209, %v1208
      %v1291 = vpack.c.b16 %v1211, %v1210
      %v1292 = vpack.c.b16 %v1213, %v1212
      %v1293 = vpack.c.b16 %v1215, %v1214
      %v1294 = vpack.c.b16 %v1217, %v1216
      %v1295 = vpack.c.b16 %v1219, %v1218
      %v1296 = vpack.c.b16 %v1221, %v1220
      %v1297 = vpack.c.b16 %v1223, %v1222
      %v1298 = vpack.c.b16 %v1225, %v1224
      %v1299 = vpack.c.b16 %v1227, %v1226
      %1372 = vmatprep.subr.bf16.mxu0 0
      %1373 = vmatpush1.bf16.msra.mxu0 %v1228
      %1374 = vmatprep.subr.bf16.mxu0 0
      %1375 = vmatpush1.bf16.msra.mxu0 %v1229
      %1376 = vmatprep.subr.bf16.mxu0 0
      %1377 = vmatpush1.bf16.msra.mxu0 %v1230
      %1378 = vmatprep.subr.bf16.mxu0 0
      %1379 = vmatpush1.bf16.msra.mxu0 %v1231
      %1380 = vmatprep.subr.bf16.mxu0 0
      %1381 = vmatpush1.bf16.msra.mxu0 %v1232
      %1382 = vmatprep.subr.bf16.mxu0 0
      %1383 = vmatpush1.bf16.msra.mxu0 %v1233
      %1384 = vmatprep.subr.bf16.mxu0 0
      %1385 = vmatpush1.bf16.msra.mxu0 %v1234
      %1386 = vmatprep.subr.bf16.mxu0 0
      %1387 = vmatpush1.bf16.msra.mxu0 %v1235
      %1388 = vmatprep.subr.bf16.mxu0 0
      %1389 = vmatpush1.bf16.msra.mxu0 %v1236
      %1390 = vmatprep.subr.bf16.mxu0 0
      %1391 = vmatpush1.bf16.msra.mxu0 %v1237
      %1392 = vmatprep.subr.bf16.mxu0 0
      %1393 = vmatpush1.bf16.msra.mxu0 %v1238
      %1394 = vmatprep.subr.bf16.mxu0 0
      %1395 = vmatpush1.bf16.msra.mxu0 %v1239
      %1396 = vmatprep.subr.bf16.mxu0 0
      %1397 = vmatpush1.bf16.msra.mxu0 %v1240
      %1398 = vmatprep.subr.bf16.mxu0 0
      %1399 = vmatpush1.bf16.msra.mxu0 %v1241
      %1400 = vmatprep.subr.bf16.mxu0 0
      %1401 = vmatpush1.bf16.msra.mxu0 %v1242
      %1402 = vmatprep.subr.bf16.mxu0 0
      %1403 = vmatpush1.bf16.msra.mxu0 %v1243
      %1404 = vmatprep.mubr.bf16.mxu0 %v725
      %1405 = vmatmul.mubr.bf16.gmra.mrb[0].mxu0 %v724
      %v1406 = vpop.f32.mrb[0].mxu0
      %v1407 = vadd.f32 0.0, %v1406
      %v1408 = vpop.f32.mrb[0].mxu0
      %v1409 = vpop.f32.mrb[0].mxu0
      %v1410 = vadd.f32 0.0, %v1409
      %v1411 = vpop.f32.mrb[0].mxu0
      %1412 = vmatprep.mubr.bf16.mxu0 %v734
      %1413 = vmatmul.mubr.bf16.gmra.mrb[0].mxu0 %v733
      %v1414 = vpop.f32.mrb[0].mxu0
      %v1415 = vadd.f32 0.0, %v1414
      %v1416 = vpop.f32.mrb[0].mxu0
      %v1417 = vpop.f32.mrb[0].mxu0
      %v1418 = vadd.f32 0.0, %v1417
      %v1419 = vpop.f32.mrb[0].mxu0
      %1420 = vmatprep.mubr.bf16.mxu0 %v743
      %1421 = vmatmul.mubr.bf16.gmra.mrb[0].mxu0 %v742
      %v1422 = vpop.f32.mrb[0].mxu0
      %v1423 = vadd.f32 0.0, %v1422
      %v1424 = vpop.f32.mrb[0].mxu0
      %v1425 = vpop.f32.mrb[0].mxu0
      %v1426 = vadd.f32 0.0, %v1425
      %v1427 = vpop.f32.mrb[0].mxu0
      %1428 = vmatprep.mubr.bf16.mxu0 %v752
      %1429 = vmatmul.mubr.bf16.gmra.mrb[0].mxu0 %v751
      %v1430 = vpop.f32.mrb[0].mxu0
      %v1431 = vadd.f32 0.0, %v1430
      %v1432 = vpop.f32.mrb[0].mxu0
      %v1433 = vpop.f32.mrb[0].mxu0
      %v1434 = vadd.f32 0.0, %v1433
      %v1435 = vpop.f32.mrb[0].mxu0
      %1436 = vmatprep.mubr.bf16.mxu0 %v761
      %1437 = vmatmul.mubr.bf16.gmra.mrb[0].mxu0 %v760
      %v1438 = vpop.f32.mrb[0].mxu0
      %v1439 = vadd.f32 0.0, %v1438
      %v1440 = vpop.f32.mrb[0].mxu0
      %v1441 = vpop.f32.mrb[0].mxu0
      %v1442 = vadd.f32 0.0, %v1441
      %v1443 = vpop.f32.mrb[0].mxu0
      %1444 = vmatprep.mubr.bf16.mxu0 %v770
      %1445 = vmatmul.mubr.bf16.gmra.mrb[0].mxu0 %v769
      %v1446 = vpop.f32.mrb[0].mxu0
      %v1447 = vadd.f32 0.0, %v1446
      %v1448 = vpop.f32.mrb[0].mxu0
      %v1449 = vpop.f32.mrb[0].mxu0
      %v1450 = vadd.f32 0.0, %v1449
      %v1451 = vpop.f32.mrb[0].mxu0
      %1452 = vmatprep.mubr.bf16.mxu0 %v779
      %1453 = vmatmul.mubr.bf16.gmra.mrb[0].mxu0 %v778
      %v1454 = vpop.f32.mrb[0].mxu0
      %v1455 = vadd.f32 0.0, %v1454
      %v1456 = vpop.f32.mrb[0].mxu0
      %v1457 = vpop.f32.mrb[0].mxu0
      %v1458 = vadd.f32 0.0, %v1457
      %v1459 = vpop.f32.mrb[0].mxu0
      %1460 = vmatprep.mubr.bf16.mxu0 %v788
      %1461 = vmatmul.mubr.bf16.gmra.mrb[0].mxu0 %v787
      %v1462 = vpop.f32.mrb[0].mxu0
      %v1463 = vadd.f32 0.0, %v1462
      %v1464 = vpop.f32.mrb[0].mxu0
      %v1465 = vpop.f32.mrb[0].mxu0
      %v1466 = vadd.f32 0.0, %v1465
      %v1467 = vpop.f32.mrb[0].mxu0
      %1468 = vdwg.mxu0
      %1469 = vmatprep.subr.bf16.mxu0 0
      %1470 = vmatpush1.bf16.msra.mxu0 %v1244
      %1471 = vmatprep.subr.bf16.mxu0 0
      %1472 = vmatpush1.bf16.msra.mxu0 %v1245
      %1473 = vmatprep.subr.bf16.mxu0 0
      %1474 = vmatpush1.bf16.msra.mxu0 %v1246
      %1475 = vmatprep.subr.bf16.mxu0 0
      %1476 = vmatpush1.bf16.msra.mxu0 %v1247
      %1477 = vmatprep.subr.bf16.mxu0 0
      %1478 = vmatpush1.bf16.msra.mxu0 %v1248
      %1479 = vmatprep.subr.bf16.mxu0 0
      %1480 = vmatpush1.bf16.msra.mxu0 %v1249
      %1481 = vmatprep.subr.bf16.mxu0 0
      %1482 = vmatpush1.bf16.msra.mxu0 %v1250
      %1483 = vmatprep.subr.bf16.mxu0 0
      %1484 = vmatpush1.bf16.msra.mxu0 %v1251
      %1485 = vmatprep.subr.bf16.mxu0 0
      %1486 = vmatpush1.bf16.msra.mxu0 %v1252
      %1487 = vmatprep.subr.bf16.mxu0 0
      %1488 = vmatpush1.bf16.msra.mxu0 %v1253
      %1489 = vmatprep.subr.bf16.mxu0 0
      %1490 = vmatpush1.bf16.msra.mxu0 %v1254
      %1491 = vmatprep.subr.bf16.mxu0 0
      %1492 = vmatpush1.bf16.msra.mxu0 %v1255
      %1493 = vmatprep.subr.bf16.mxu0 0
      %1494 = vmatpush1.bf16.msra.mxu0 %v1256
      %1495 = vmatprep.subr.bf16.mxu0 0
      %1496 = vmatpush1.bf16.msra.mxu0 %v1257
      %1497 = vmatprep.subr.bf16.mxu0 0
      %1498 = vmatpush1.bf16.msra.mxu0 %v1258
      %1499 = vmatprep.subr.bf16.mxu0 0
      %1500 = vmatpush1.bf16.msra.mxu0 %v1259
      %1501 = vmatprep.mubr.bf16.mxu0 %v727
      %1502 = vmatmul.mubr.bf16.gmra.mrb[0].mxu0 %v726
      %v1503 = vpop.f32.mrb[0].mxu0
      %v1504 = vadd.f32 %v1407, %v1503
      %v1505 = vpop.f32.mrb[0].mxu0
      %v1506 = vpop.f32.mrb[0].mxu0
      %v1507 = vadd.f32 %v1410, %v1506
      %v1508 = vpop.f32.mrb[0].mxu0
      %1509 = vmatprep.mubr.bf16.mxu0 %v736
      %1510 = vmatmul.mubr.bf16.gmra.mrb[0].mxu0 %v735
      %v1511 = vpop.f32.mrb[0].mxu0
      %v1512 = vadd.f32 %v1415, %v1511
      %v1513 = vpop.f32.mrb[0].mxu0
      %v1514 = vpop.f32.mrb[0].mxu0
      %v1515 = vadd.f32 %v1418, %v1514
      %v1516 = vpop.f32.mrb[0].mxu0
      %1517 = vmatprep.mubr.bf16.mxu0 %v745
      %1518 = vmatmul.mubr.bf16.gmra.mrb[0].mxu0 %v744
      %v1519 = vpop.f32.mrb[0].mxu0
      %v1520 = vadd.f32 %v1423, %v1519
      %v1521 = vpop.f32.mrb[0].mxu0
      %v1522 = vpop.f32.mrb[0].mxu0
      %v1523 = vadd.f32 %v1426, %v1522
      %v1524 = vpop.f32.mrb[0].mxu0
      %1525 = vmatprep.mubr.bf16.mxu0 %v754
      %1526 = vmatmul.mubr.bf16.gmra.mrb[0].mxu0 %v753
      %v1527 = vpop.f32.mrb[0].mxu0
      %v1528 = vadd.f32 %v1431, %v1527
      %v1529 = vpop.f32.mrb[0].mxu0
      %v1530 = vpop.f32.mrb[0].mxu0
      %v1531 = vadd.f32 %v1434, %v1530
      %v1532 = vpop.f32.mrb[0].mxu0
      %1533 = vmatprep.mubr.bf16.mxu0 %v763
      %1534 = vmatmul.mubr.bf16.gmra.mrb[0].mxu0 %v762
      %v1535 = vpop.f32.mrb[0].mxu0
      %v1536 = vadd.f32 %v1439, %v1535
      %v1537 = vpop.f32.mrb[0].mxu0
      %v1538 = vpop.f32.mrb[0].mxu0
      %v1539 = vadd.f32 %v1442, %v1538
      %v1540 = vpop.f32.mrb[0].mxu0
      %1541 = vmatprep.mubr.bf16.mxu0 %v772
      %1542 = vmatmul.mubr.bf16.gmra.mrb[0].mxu0 %v771
      %v1543 = vpop.f32.mrb[0].mxu0
      %v1544 = vadd.f32 %v1447, %v1543
      %v1545 = vpop.f32.mrb[0].mxu0
      %v1546 = vpop.f32.mrb[0].mxu0
      %v1547 = vadd.f32 %v1450, %v1546
      %v1548 = vpop.f32.mrb[0].mxu0
      %1549 = vmatprep.mubr.bf16.mxu0 %v781
      %1550 = vmatmul.mubr.bf16.gmra.mrb[0].mxu0 %v780
      %v1551 = vpop.f32.mrb[0].mxu0
      %v1552 = vadd.f32 %v1455, %v1551
      %v1553 = vpop.f32.mrb[0].mxu0
      %v1554 = vpop.f32.mrb[0].mxu0
      %v1555 = vadd.f32 %v1458, %v1554
      %v1556 = vpop.f32.mrb[0].mxu0
      %1557 = vmatprep.mubr.bf16.mxu0 %v790
      %1558 = vmatmul.mubr.bf16.gmra.mrb[0].mxu0 %v789
      %v1559 = vpop.f32.mrb[0].mxu0
      %v1560 = vadd.f32 %v1463, %v1559
      %v1561 = vpop.f32.mrb[0].mxu0
      %v1562 = vpop.f32.mrb[0].mxu0
      %v1563 = vadd.f32 %v1466, %v1562
      %v1564 = vpop.f32.mrb[0].mxu0
      %1565 = vdwg.mxu0
      %1566 = vmatprep.subr.bf16.mxu0 0
      %1567 = vmatpush1.bf16.msra.mxu0 %v1260
      %1568 = vmatprep.subr.bf16.mxu0 0
      %1569 = vmatpush1.bf16.msra.mxu0 %v1261
      %1570 = vmatprep.subr.bf16.mxu0 0
      %1571 = vmatpush1.bf16.msra.mxu0 %v1262
      %1572 = vmatprep.subr.bf16.mxu0 0
      %1573 = vmatpush1.bf16.msra.mxu0 %v1263
      %1574 = vmatprep.subr.bf16.mxu0 0
      %1575 = vmatpush1.bf16.msra.mxu0 %v1264
      %1576 = vmatprep.subr.bf16.mxu0 0
      %1577 = vmatpush1.bf16.msra.mxu0 %v1265
      %1578 = vmatprep.subr.bf16.mxu0 0
      %1579 = vmatpush1.bf16.msra.mxu0 %v1266
      %1580 = vmatprep.subr.bf16.mxu0 0
      %1581 = vmatpush1.bf16.msra.mxu0 %v1267
      %1582 = vmatprep.subr.bf16.mxu0 0
      %1583 = vmatpush1.bf16.msra.mxu0 %v1268
      %1584 = vmatprep.subr.bf16.mxu0 0
      %1585 = vmatpush1.bf16.msra.mxu0 %v1269
      %1586 = vmatprep.subr.bf16.mxu0 0
      %1587 = vmatpush1.bf16.msra.mxu0 %v1270
      %1588 = vmatprep.subr.bf16.mxu0 0
      %1589 = vmatpush1.bf16.msra.mxu0 %v1271
      %1590 = vmatprep.subr.bf16.mxu0 0
      %1591 = vmatpush1.bf16.msra.mxu0 %v1272
      %1592 = vmatprep.subr.bf16.mxu0 0
      %1593 = vmatpush1.bf16.msra.mxu0 %v1273
      %1594 = vmatprep.subr.bf16.mxu0 0
      %1595 = vmatpush1.bf16.msra.mxu0 %v1274
      %1596 = vmatprep.subr.bf16.mxu0 0
      %1597 = vmatpush1.bf16.msra.mxu0 %v1275
      %1598 = vmatprep.mubr.bf16.mxu0 %v729
      %1599 = vmatmul.mubr.bf16.gmra.mrb[0].mxu0 %v728
      %v1600 = vpop.f32.mrb[0].mxu0
      %v1601 = vadd.f32 %v1504, %v1600
      %v1602 = vpop.f32.mrb[0].mxu0
      %v1603 = vpop.f32.mrb[0].mxu0
      %v1604 = vadd.f32 %v1507, %v1603
      %v1605 = vpop.f32.mrb[0].mxu0
      %1606 = vmatprep.mubr.bf16.mxu0 %v738
      %1607 = vmatmul.mubr.bf16.gmra.mrb[0].mxu0 %v737
      %v1608 = vpop.f32.mrb[0].mxu0
      %v1609 = vadd.f32 %v1512, %v1608
      %v1610 = vpop.f32.mrb[0].mxu0
      %v1611 = vpop.f32.mrb[0].mxu0
      %v1612 = vadd.f32 %v1515, %v1611
      %v1613 = vpop.f32.mrb[0].mxu0
      %1614 = vmatprep.mubr.bf16.mxu0 %v747
      %1615 = vmatmul.mubr.bf16.gmra.mrb[0].mxu0 %v746
      %v1616 = vpop.f32.mrb[0].mxu0
      %v1617 = vadd.f32 %v1520, %v1616
      %v1618 = vpop.f32.mrb[0].mxu0
      %v1619 = vpop.f32.mrb[0].mxu0
      %v1620 = vadd.f32 %v1523, %v1619
      %v1621 = vpop.f32.mrb[0].mxu0
      %1622 = vmatprep.mubr.bf16.mxu0 %v756
      %1623 = vmatmul.mubr.bf16.gmra.mrb[0].mxu0 %v755
      %v1624 = vpop.f32.mrb[0].mxu0
      %v1625 = vadd.f32 %v1528, %v1624
      %v1626 = vpop.f32.mrb[0].mxu0
      %v1627 = vpop.f32.mrb[0].mxu0
      %v1628 = vadd.f32 %v1531, %v1627
      %v1629 = vpop.f32.mrb[0].mxu0
      %1630 = vmatprep.mubr.bf16.mxu0 %v765
      %1631 = vmatmul.mubr.bf16.gmra.mrb[0].mxu0 %v764
      %v1632 = vpop.f32.mrb[0].mxu0
      %v1633 = vadd.f32 %v1536, %v1632
      %v1634 = vpop.f32.mrb[0].mxu0
      %v1635 = vpop.f32.mrb[0].mxu0
      %v1636 = vadd.f32 %v1539, %v1635
      %v1637 = vpop.f32.mrb[0].mxu0
      %1638 = vmatprep.mubr.bf16.mxu0 %v774
      %1639 = vmatmul.mubr.bf16.gmra.mrb[0].mxu0 %v773
      %v1640 = vpop.f32.mrb[0].mxu0
      %v1641 = vadd.f32 %v1544, %v1640
      %v1642 = vpop.f32.mrb[0].mxu0
      %v1643 = vpop.f32.mrb[0].mxu0
      %v1644 = vadd.f32 %v1547, %v1643
      %v1645 = vpop.f32.mrb[0].mxu0
      %1646 = vmatprep.mubr.bf16.mxu0 %v783
      %1647 = vmatmul.mubr.bf16.gmra.mrb[0].mxu0 %v782
      %v1648 = vpop.f32.mrb[0].mxu0
      %v1649 = vadd.f32 %v1552, %v1648
      %v1650 = vpop.f32.mrb[0].mxu0
      %v1651 = vpop.f32.mrb[0].mxu0
      %v1652 = vadd.f32 %v1555, %v1651
      %v1653 = vpop.f32.mrb[0].mxu0
      %1654 = vmatprep.mubr.bf16.mxu0 %v792
      %1655 = vmatmul.mubr.bf16.gmra.mrb[0].mxu0 %v791
      %v1656 = vpop.f32.mrb[0].mxu0
      %v1657 = vadd.f32 %v1560, %v1656
      %v1658 = vpop.f32.mrb[0].mxu0
      %v1659 = vpop.f32.mrb[0].mxu0
      %v1660 = vadd.f32 %v1563, %v1659
      %v1661 = vpop.f32.mrb[0].mxu0
      %1662 = vdwg.mxu0
      %1663 = vmatprep.subr.bf16.mxu0 0
      %1664 = vmatpush1.bf16.msra.mxu0 %v1276
      %1665 = vmatprep.subr.bf16.mxu0 0
      %1666 = vmatpush1.bf16.msra.mxu0 %v1277
      %1667 = vmatprep.subr.bf16.mxu0 0
      %1668 = vmatpush1.bf16.msra.mxu0 %v1278
      %1669 = vmatprep.subr.bf16.mxu0 0
      %1670 = vmatpush1.bf16.msra.mxu0 %v1279
      %1671 = vmatprep.subr.bf16.mxu0 0
      %1672 = vmatpush1.bf16.msra.mxu0 %v1280
      %1673 = vmatprep.subr.bf16.mxu0 0
      %1674 = vmatpush1.bf16.msra.mxu0 %v1281
      %1675 = vmatprep.subr.bf16.mxu0 0
      %1676 = vmatpush1.bf16.msra.mxu0 %v1282
      %1677 = vmatprep.subr.bf16.mxu0 0
      %1678 = vmatpush1.bf16.msra.mxu0 %v1283
      %1679 = vmatprep.subr.bf16.mxu0 0
      %1680 = vmatpush1.bf16.msra.mxu0 %v1284
      %1681 = vmatprep.subr.bf16.mxu0 0
      %1682 = vmatpush1.bf16.msra.mxu0 %v1285
      %1683 = vmatprep.subr.bf16.mxu0 0
      %1684 = vmatpush1.bf16.msra.mxu0 %v1286
      %1685 = vmatprep.subr.bf16.mxu0 0
      %1686 = vmatpush1.bf16.msra.mxu0 %v1287
      %1687 = vmatprep.subr.bf16.mxu0 0
      %1688 = vmatpush1.bf16.msra.mxu0 %v1288
      %1689 = vmatprep.subr.bf16.mxu0 0
      %1690 = vmatpush1.bf16.msra.mxu0 %v1289
      %1691 = vmatprep.subr.bf16.mxu0 0
      %1692 = vmatpush1.bf16.msra.mxu0 %v1290
      %1693 = vmatprep.subr.bf16.mxu0 0
      %1694 = vmatpush1.bf16.msra.mxu0 %v1291
      %1695 = vmatprep.mubr.bf16.mxu0 %v731
      %1696 = vmatmul.mubr.bf16.gmra.mrb[0].mxu0 %v730
      %v1697 = vpop.f32.mrb[0].mxu0
      %v1698 = vadd.f32 %v1601, %v1697
      %v1699 = vpop.f32.mrb[0].mxu0
      %v1700 = vpop.f32.mrb[0].mxu0
      %v1701 = vadd.f32 %v1604, %v1700
      %v1702 = vpop.f32.mrb[0].mxu0
      %1703 = vmatprep.mubr.bf16.mxu0 %v740
      %1704 = vmatmul.mubr.bf16.gmra.mrb[0].mxu0 %v739
      %v1705 = vpop.f32.mrb[0].mxu0
      %v1706 = vadd.f32 %v1609, %v1705
      %v1707 = vpop.f32.mrb[0].mxu0
      %v1708 = vpop.f32.mrb[0].mxu0
      %v1709 = vadd.f32 %v1612, %v1708
      %v1710 = vpop.f32.mrb[0].mxu0
      %1711 = vmatprep.mubr.bf16.mxu0 %v749
      %1712 = vmatmul.mubr.bf16.gmra.mrb[0].mxu0 %v748
      %v1713 = vpop.f32.mrb[0].mxu0
      %v1714 = vadd.f32 %v1617, %v1713
      %v1715 = vpop.f32.mrb[0].mxu0
      %v1716 = vpop.f32.mrb[0].mxu0
      %v1717 = vadd.f32 %v1620, %v1716
      %v1718 = vpop.f32.mrb[0].mxu0
      %1719 = vmatprep.mubr.bf16.mxu0 %v758
      %1720 = vmatmul.mubr.bf16.gmra.mrb[0].mxu0 %v757
      %v1721 = vpop.f32.mrb[0].mxu0
      %v1722 = vadd.f32 %v1625, %v1721
      %v1723 = vpop.f32.mrb[0].mxu0
      %v1724 = vpop.f32.mrb[0].mxu0
      %v1725 = vadd.f32 %v1628, %v1724
      %v1726 = vpop.f32.mrb[0].mxu0
      %1727 = vmatprep.mubr.bf16.mxu0 %v767
      %1728 = vmatmul.mubr.bf16.gmra.mrb[0].mxu0 %v766
      %v1729 = vpop.f32.mrb[0].mxu0
      %v1730 = vadd.f32 %v1633, %v1729
      %v1731 = vpop.f32.mrb[0].mxu0
      %v1732 = vpop.f32.mrb[0].mxu0
      %v1733 = vadd.f32 %v1636, %v1732
      %v1734 = vpop.f32.mrb[0].mxu0
      %1735 = vmatprep.mubr.bf16.mxu0 %v776
      %1736 = vmatmul.mubr.bf16.gmra.mrb[0].mxu0 %v775
      %v1737 = vpop.f32.mrb[0].mxu0
      %v1738 = vadd.f32 %v1641, %v1737
      %v1739 = vpop.f32.mrb[0].mxu0
      %v1740 = vpop.f32.mrb[0].mxu0
      %v1741 = vadd.f32 %v1644, %v1740
      %v1742 = vpop.f32.mrb[0].mxu0
      %1743 = vmatprep.mubr.bf16.mxu0 %v785
      %1744 = vmatmul.mubr.bf16.gmra.mrb[0].mxu0 %v784
      %v1745 = vpop.f32.mrb[0].mxu0
      %v1746 = vadd.f32 %v1649, %v1745
      %v1747 = vpop.f32.mrb[0].mxu0
      %v1748 = vpop.f32.mrb[0].mxu0
      %v1749 = vadd.f32 %v1652, %v1748
      %v1750 = vpop.f32.mrb[0].mxu0
      %1751 = vmatprep.mubr.bf16.mxu0 %v794
      %1752 = vmatmul.mubr.bf16.gmra.mrb[0].mxu0 %v793
      %v1753 = vpop.f32.mrb[0].mxu0
      %v1754 = vadd.f32 %v1657, %v1753
      %v1755 = vpop.f32.mrb[0].mxu0
      %v1756 = vpop.f32.mrb[0].mxu0
      %v1757 = vadd.f32 %v1660, %v1756
      %v1758 = vpop.f32.mrb[0].mxu0
      %1759 = vdwg.mxu0
      %1760 = vmatprep.subr.bf16.mxu0 0
      %1761 = vmatpush1.bf16.msra.mxu0 %v1292
      %1762 = vmatprep.subr.bf16.mxu0 0
      %1763 = vmatpush1.bf16.msra.mxu0 %v1293
      %1764 = vmatprep.subr.bf16.mxu0 0
      %1765 = vmatpush1.bf16.msra.mxu0 %v1294
      %1766 = vmatprep.subr.bf16.mxu0 0
      %1767 = vmatpush1.bf16.msra.mxu0 %v1295
      %1768 = vmatprep.subr.bf16.mxu0 0
      %1769 = vmatpush1.bf16.msra.mxu0 %v1296
      %1770 = vmatprep.subr.bf16.mxu0 0
      %1771 = vmatpush1.bf16.msra.mxu0 %v1297
      %1772 = vmatprep.subr.bf16.mxu0 0
      %1773 = vmatpush1.bf16.msra.mxu0 %v1298
      %1774 = vmatprep.subr.bf16.mxu0 0
      %1775 = vmatpush1.bf16.msra.mxu0 %v1299
      %1776 = vmatprep.subr.bf16.mxu0 0
      %1777 = vmatpush1.bf16.msra.mxu0 0
      %1778 = vmatprep.subr.bf16.mxu0 0
      %1779 = vmatpush1.bf16.msra.mxu0 0
      %1780 = vmatprep.subr.bf16.mxu0 0
      %1781 = vmatpush1.bf16.msra.mxu0 0
      %1782 = vmatprep.subr.bf16.mxu0 0
      %1783 = vmatpush1.bf16.msra.mxu0 0
      %1784 = vmatprep.subr.bf16.mxu0 0
      %1785 = vmatpush1.bf16.msra.mxu0 0
      %1786 = vmatprep.subr.bf16.mxu0 0
      %1787 = vmatpush1.bf16.msra.mxu0 0
      %1788 = vmatprep.subr.bf16.mxu0 0
      %1789 = vmatpush1.bf16.msra.mxu0 0
      %1790 = vmatprep.subr.bf16.mxu0 0
      %1791 = vmatpush1.bf16.msra.mxu0 0
      %1792 = vmatprep.mubr.bf16.mxu0 0
      %1793 = vmatmul.mubr.bf16.gmra.mrb[0].mxu0 %v732
      %v1794 = vpop.f32.mrb[0].mxu0
      %v1795 = vadd.f32 %v1698, %v1794
      %v1796 = vpop.f32.mrb[0].mxu0
      %v1797 = vpop.f32.mrb[0].mxu0
      %v1798 = vadd.f32 %v1701, %v1797
      %v1799 = vpop.f32.mrb[0].mxu0
      %1800 = vmatprep.mubr.bf16.mxu0 0
      %1801 = vmatmul.mubr.bf16.gmra.mrb[0].mxu0 %v741
      %v1802 = vpop.f32.mrb[0].mxu0
      %v1803 = vadd.f32 %v1706, %v1802
      %v1804 = vpop.f32.mrb[0].mxu0
      %v1805 = vpop.f32.mrb[0].mxu0
      %v1806 = vadd.f32 %v1709, %v1805
      %v1807 = vpop.f32.mrb[0].mxu0
      %1808 = vmatprep.mubr.bf16.mxu0 0
      %1809 = vmatmul.mubr.bf16.gmra.mrb[0].mxu0 %v750
      %v1810 = vpop.f32.mrb[0].mxu0
      %v1811 = vadd.f32 %v1714, %v1810
      %v1812 = vpop.f32.mrb[0].mxu0
      %v1813 = vpop.f32.mrb[0].mxu0
      %v1814 = vadd.f32 %v1717, %v1813
      %v1815 = vpop.f32.mrb[0].mxu0
      %1816 = vmatprep.mubr.bf16.mxu0 0
      %1817 = vmatmul.mubr.bf16.gmra.mrb[0].mxu0 %v759
      %v1818 = vpop.f32.mrb[0].mxu0
      %v1819 = vadd.f32 %v1722, %v1818
      %v1820 = vpop.f32.mrb[0].mxu0
      %v1821 = vpop.f32.mrb[0].mxu0
      %v1822 = vadd.f32 %v1725, %v1821
      %v1823 = vpop.f32.mrb[0].mxu0
      %1824 = vmatprep.mubr.bf16.mxu0 0
      %1825 = vmatmul.mubr.bf16.gmra.mrb[0].mxu0 %v768
      %v1826 = vpop.f32.mrb[0].mxu0
      %v1827 = vadd.f32 %v1730, %v1826
      %v1828 = vpop.f32.mrb[0].mxu0
      %v1829 = vpop.f32.mrb[0].mxu0
      %v1830 = vadd.f32 %v1733, %v1829
      %v1831 = vpop.f32.mrb[0].mxu0
      %1832 = vmatprep.mubr.bf16.mxu0 0
      %1833 = vmatmul.mubr.bf16.gmra.mrb[0].mxu0 %v777
      %v1834 = vpop.f32.mrb[0].mxu0
      %v1835 = vadd.f32 %v1738, %v1834
      %v1836 = vpop.f32.mrb[0].mxu0
      %v1837 = vpop.f32.mrb[0].mxu0
      %v1838 = vadd.f32 %v1741, %v1837
      %v1839 = vpop.f32.mrb[0].mxu0
      %1840 = vmatprep.mubr.bf16.mxu0 0
      %1841 = vmatmul.mubr.bf16.gmra.mrb[0].mxu0 %v786
      %v1842 = vpop.f32.mrb[0].mxu0
      %v1843 = vadd.f32 %v1746, %v1842
      %v1844 = vpop.f32.mrb[0].mxu0
      %v1845 = vpop.f32.mrb[0].mxu0
      %v1846 = vadd.f32 %v1749, %v1845
      %v1847 = vpop.f32.mrb[0].mxu0
      %1848 = vmatprep.mubr.bf16.mxu0 0
      %1849 = vmatmul.mubr.bf16.gmra.mrb[0].mxu0 %v795
      %v1850 = vpop.f32.mrb[0].mxu0
      %v1851 = vadd.f32 %v1754, %v1850
      %v1852 = vpop.f32.mrb[0].mxu0
      %v1853 = vpop.f32.mrb[0].mxu0
      %v1854 = vadd.f32 %v1757, %v1853
      %v1855 = vpop.f32.mrb[0].mxu0
      %1856 = vdwg.mxu0
      %v1857 = vadd.f32 %v1795, %v1798
      %v1858 = vadd.f32 %v1857, %v1803
      %v1859 = vadd.f32 %v1858, %v1806
      %v1860 = vadd.f32 %v1859, %v1811
      %v1861 = vadd.f32 %v1860, %v1814
      %v1862 = vadd.f32 %v1861, %v1819
      %v1863 = vadd.f32 %v1862, %v1822
      %v1864 = vadd.f32 %v1863, %v1827
      %v1865 = vadd.f32 %v1864, %v1830
      %v1866 = vadd.f32 %v1865, %v1835
      %v1867 = vadd.f32 %v1866, %v1838
      %v1868 = vadd.f32 %v1867, %v1843
      %v1869 = vadd.f32 %v1868, %v1846
      %v1870 = vadd.f32 %v1869, %v1851
      %v1871 = vadd.f32 %v1870, %v1854
      %v1872 = vrot.slane %v1871, 4
      %v1873 = vadd.f32 %v1871, %v1872
      %v1874 = vrot.slane %v1873, 2
      %v1875 = vadd.f32 %v1873, %v1874
      %v1876 = vrot.slane %v1875, 1
      %v1877 = vadd.f32 %v1875, %v1876
      %v1878 = vmul.f32 %v1795, %v1795
      %v1879 = vmul.f32 %v1798, %v1798
      %v1880 = vmul.f32 %v1803, %v1803
      %v1881 = vmul.f32 %v1806, %v1806
      %v1882 = vmul.f32 %v1811, %v1811
      %v1883 = vmul.f32 %v1814, %v1814
      %v1884 = vmul.f32 %v1819, %v1819
      %v1885 = vmul.f32 %v1822, %v1822
      %v1886 = vmul.f32 %v1827, %v1827
      %v1887 = vmul.f32 %v1830, %v1830
      %v1888 = vmul.f32 %v1835, %v1835
      %v1889 = vmul.f32 %v1838, %v1838
      %v1890 = vmul.f32 %v1843, %v1843
      %v1891 = vmul.f32 %v1846, %v1846
      %v1892 = vmul.f32 %v1851, %v1851
      %v1893 = vmul.f32 %v1854, %v1854
      %v1894 = vadd.f32 %v1878, %v1879
      %v1895 = vadd.f32 %v1894, %v1880
      %v1896 = vadd.f32 %v1895, %v1881
      %v1897 = vadd.f32 %v1896, %v1882
      %v1898 = vadd.f32 %v1897, %v1883
      %v1899 = vadd.f32 %v1898, %v1884
      %v1900 = vadd.f32 %v1899, %v1885
      %v1901 = vadd.f32 %v1900, %v1886
      %v1902 = vadd.f32 %v1901, %v1887
      %v1903 = vadd.f32 %v1902, %v1888
      %v1904 = vadd.f32 %v1903, %v1889
      %v1905 = vadd.f32 %v1904, %v1890
      %v1906 = vadd.f32 %v1905, %v1891
      %v1907 = vadd.f32 %v1906, %v1892
      %v1908 = vadd.f32 %v1907, %v1893
      %v1909 = vrot.slane %v1908, 4
      %v1910 = vadd.f32 %v1908, %v1909
      %v1911 = vrot.slane %v1910, 2
      %v1912 = vadd.f32 %v1910, %v1911
      %v1913 = vrot.slane %v1912, 1
      %v1914 = vadd.f32 %v1912, %v1913
      %vm1915 = vcmask 1040384
      %v1916 = vsel %vm1915, %v1877, %v1914
      %vm1917 = vcmask 1041408
      %v1918 = vsel %vm1917, %v1916, 0.0
      %1919 = vst [vmem:[%s268] sm:$0xff] %v1918
      %1920 = vst [vmem:[%s261] sm:$0xff] %v1795
      %1921 = vst [vmem:[%s261 + $0x8] sm:$0xff] %v1798
      %1922 = vst [vmem:[%s261 + $0x10] sm:$0xff] %v1803
      %1923 = vst [vmem:[%s261 + $0x18] sm:$0xff] %v1806
      %1924 = vst [vmem:[%s261 + $0x20] sm:$0xff] %v1811
      %1925 = vst [vmem:[%s261 + $0x28] sm:$0xff] %v1814
      %1926 = vst [vmem:[%s261 + $0x30] sm:$0xff] %v1819
      %1927 = vst [vmem:[%s261 + $0x38] sm:$0xff] %v1822
      %1928 = vst [vmem:[%s261 + $0x40] sm:$0xff] %v1827
      %1929 = vst [vmem:[%s261 + $0x48] sm:$0xff] %v1830
      %1930 = vst [vmem:[%s261 + $0x50] sm:$0xff] %v1835
      %1931 = vst [vmem:[%s261 + $0x58] sm:$0xff] %v1838
      %1932 = vst [vmem:[%s261 + $0x60] sm:$0xff] %v1843
      %1933 = vst [vmem:[%s261 + $0x68] sm:$0xff] %v1846
      %1934 = vst [vmem:[%s261 + $0x70] sm:$0xff] %v1851
      %1935 = vst [vmem:[%s261 + $0x78] sm:$0xff] %v1854
      %s1936 = smul.u32 8, %s22
      %p1937 = scmp.lt.s32.totalorder %s21, 1
      %s1938 = scalar_select %p1937, %s21, 1
      %p1939 = scmp.lt.s32.totalorder %s1936, 15
      %s1940 = scalar_select %p1939, %s1936, 15
      %s1941 = smul.addr %s1940, 2
      %s1942 = smul.addr %s1938, 32
      %s1943 = sadd.s32 %s1941, %s1942
      %s1944 = smul.addr %s1943, 8
      %s1945 = scalar_lea.vmem %s4, %s1944
      %s1946 = smul.u32 %s21, 2
      %s1947 = sadd.s32 %s1946, %s22
      %p1948 = scmp.lt.s32.totalorder %s1947, 3
      %s1949 = scalar_select %p1948, %s1947, 3
      %s1950 = smul.addr %s1949, 8
      %s1951 = scalar_lea.vmem %s5, %s1950
      // Predicated region
      $region45: #{double_conv_forward.4} parent=35 // pred_check
        %p1952 = pneg %p138
      $region46: #{double_conv_forward.4} parent=35 // pred_check_branch
        %1954 = sbr.rel (%p1952) target = $region48
      $region47: #{double_conv_forward.4} parent=35 // pred_region
        %s1955 = smul.u32 8, %s22
      $region48: #{double_conv_forward.4} parent=35 // pred_fallthru
        _
      // Predicated region
      $region49: #{double_conv_forward.4} parent=35 // pred_check
        %p1956 = pneg %p168
      $region50: #{double_conv_forward.4} parent=35 // pred_check_branch
        %1958 = sbr.rel (%p1956) target = $region52
      $region51: #{double_conv_forward.4} parent=35 // pred_region
        %s1959 = smul.u32 %s21, 2
        %s1960 = sadd.s32 %s1959, %s22
      $region52: #{double_conv_forward.4} parent=35 // pred_fallthru
        _
    $region36: #{double_conv_forward.4} parent=5 // pred_fallthru
      _
    %p1961 = scmp.le.s32.totalorder 2, %s12
    // Predicated region
    $region53: #{double_conv_forward.4} parent=5 // pred_check
      %p1962 = pneg %p1961
    $region54: #{double_conv_forward.4} parent=5 // pred_check_branch
      %1964 = sbr.rel (%p1962) target = $region56
    $region55: #{double_conv_forward.4} parent=5 // pred_region
      %s1965 = ssub.s32 %s12, 2
      // Predicated region
      $region57: #{double_conv_forward.4} parent=55 // pred_check
        %p1966 = pneg %p144
      $region58: #{double_conv_forward.4} parent=55 // pred_check_branch
        %1968 = sbr.rel (%p1966) target = $region60
      $region59: #{double_conv_forward.4} parent=55 // pred_region
        %s1969 = smul.u32 8, %s24
        %p1970 = scmp.lt.s32.totalorder %s23, 1
        %s1971 = scalar_select %p1970, %s23, 1
        %p1972 = scmp.lt.s32.totalorder %s1969, 15
        %s1973 = scalar_select %p1972, %s1969, 15
        %s1974 = smul.addr %s1973, 2
        %s1975 = smul.addr %s1971, 32
        %s1976 = sadd.s32 %s1974, %s1975
        %s1977 = smul.addr %s1976, 8
        %s1978 = scalar_lea.vmem %s4, %s1977
      $region60: #{double_conv_forward.4} parent=55 // pred_fallthru
        _
      // Predicated region
      $region61: #{double_conv_forward.4} parent=55 // pred_check
        %p1979 = pneg %p174
      $region62: #{double_conv_forward.4} parent=55 // pred_check_branch
        %1981 = sbr.rel (%p1979) target = $region64
      $region63: #{double_conv_forward.4} parent=55 // pred_region
        %s1982 = smul.u32 %s23, 2
        %s1983 = sadd.s32 %s1982, %s24
        %p1984 = scmp.lt.s32.totalorder %s1983, 3
        %s1985 = scalar_select %p1984, %s1983, 3
        %s1986 = smul.addr %s1985, 8
        %s1987 = scalar_lea.vmem %s5, %s1986
      $region64: #{double_conv_forward.4} parent=55 // pred_fallthru
        _
    $region56: #{double_conv_forward.4} parent=5 // pred_fallthru
      _
  $region6: #{double_conv_forward.4} parent=0 // loop_footer
    %s16 = sadd.s32 1, %s12
  $region7: #{double_conv_forward.4} parent=0 // loop_footer_branch
    %11 = sbr.rel target = $region3
  $region8: #{double_conv_forward.4} parent=0 // loop_exit
    _

</llo_original>
